<compile_context>
chip_gen: v6e
topology: v6e:2x2x1
jax: 0.10.0
libtpu: 0.0.40
codegen_flags: <defaults>
</compile_context>

<pallas_src>
import functools
import math

import jax
import jax.numpy as jnp
from jax.experimental import pallas as pl
from jax.experimental.pallas import tpu as pltpu

# ----------------------------- small synthetic config -----------------------------
N_IMG = 1                 # the module assumes a single image (ROI batch index is 0)
C_IN = 4
IMG_H = 64
IMG_W = 64
C_FEAT = 32               # stands in for the 1024-channel feature map of the original
C_PAD = 128               # lane-dense padded channel count for the backbone output
STRIDE = 16               # spatial_scale = 1/16 = 0.0625, as in the module
FEAT_H = IMG_H // STRIDE  # 4
FEAT_W = IMG_W // STRIDE  # 4
NUM_ANCHORS = 4
ANCHOR_SIZES = (16.0, 32.0, 48.0, 64.0)
NUM_PROPOSALS = 16        # multiple of 8 (sublane constraint)
POOL = 4                  # stands in for RoIAlign output_size=(14, 14)
HIDDEN = 128              # stands in for the 1024-wide fastrcnn fc layer
NUM_CLASS = 4

BB_K = 48                                                   # 9*C_IN=36 padded to 16-multiple (bf16)
BB_GRID = 2                                                  # 2 parallel tiles -> both TCs on v7x
BB_TM = N_IMG * IMG_H * IMG_W // BB_GRID                     # 2048 pixel rows per tile
BB_TILE_IMG_ROWS = IMG_H // BB_GRID                          # 32 image rows per tile
BB_POOL_ROWS = (BB_TILE_IMG_ROWS // STRIDE) * (IMG_W // STRIDE)  # 8 pooled rows per tile

DELTA_CLAMP = math.log(1000.0 / 16.0)                        # torchvision bbox-delta clamp


# ----------------------------- Pallas kernels -----------------------------
def _backbone_kernel(cols_ref, w_ref, b_ref, pool_ref, o_ref):
    # 3x3 conv as im2col matmul (bf16 x bf16 -> f32 accumulate) + bias + ReLU
    acc = jnp.dot(cols_ref[...], w_ref[...], preferred_element_type=jnp.float32)
    acc = jnp.maximum(acc + b_ref[...], 0.0)
    # fused 16x16 average pool: constant pooling matrix @ activations (stays on the MXU)
    o_ref[...] = jnp.dot(pool_ref[...], acc, preferred_element_type=jnp.float32)


def pallas_backbone(cols, w, b, pool_mat):
    """cols: [M, BB_K] bf16, w: [BB_K, C_PAD] bf16, b: [1, C_PAD] f32,
    pool_mat: [BB_POOL_ROWS, BB_TM] f32 -> pooled features [FEAT_H*FEAT_W, C_PAD] f32."""
    M, K = cols.shape
    return pl.pallas_call(
        _backbone_kernel,
        out_shape=jax.ShapeDtypeStruct((FEAT_H * FEAT_W, C_PAD), jnp.float32),
        grid_spec=pltpu.PrefetchScalarGridSpec(
            num_scalar_prefetch=0,
            grid=(BB_GRID,),
            in_specs=[
                pl.BlockSpec((BB_TM, K), lambda i: (i, 0)),
                pl.BlockSpec((K, C_PAD), lambda i: (0, 0)),
                pl.BlockSpec((1, C_PAD), lambda i: (0, 0)),
                pl.BlockSpec((BB_POOL_ROWS, BB_TM), lambda i: (0, 0)),
            ],
            out_specs=pl.BlockSpec((BB_POOL_ROWS, C_PAD), lambda i: (i, 0)),
        ),
        compiler_params=pltpu.CompilerParams(
            dimension_semantics=("parallel",)),
    )(cols, w, b, pool_mat)


def _rpn_kernel(x_ref, w_ref, b_ref, wo_ref, bo_ref, wd_ref, bd_ref,
                obj_ref, dlt_ref):
    # 3x3 conv (im2col matmul) + ReLU
    h = jnp.dot(x_ref[...], w_ref[...], preferred_element_type=jnp.float32) + b_ref[...]
    h = jnp.maximum(h, 0.0)
    # 1x1 objectness head (+ sigmoid) and 1x1 delta head, fused
    obj = jnp.dot(h, wo_ref[...], preferred_element_type=jnp.float32) + bo_ref[...]
    dlt = jnp.dot(h, wd_ref[...], preferred_element_type=jnp.float32) + bd_ref[...]
    obj_ref[...] = jax.nn.sigmoid(obj)
    dlt_ref[...] = dlt


def pallas_rpn(x, w, b, wo, bo, wd, bd):
    R, K = x.shape
    H = w.shape[1]
    NO = wo.shape[1]
    ND = wd.shape[1]
    full = lambda i: (0, 0)
    return pl.pallas_call(
        _rpn_kernel,
        out_shape=(jax.ShapeDtypeStruct((R, NO), jnp.float32),
                   jax.ShapeDtypeStruct((R, ND), jnp.float32)),
        grid_spec=pltpu.PrefetchScalarGridSpec(
            num_scalar_prefetch=0,
            grid=(1,),
            in_specs=[
                pl.BlockSpec((R, K), full),
                pl.BlockSpec((K, H), full),
                pl.BlockSpec((1, H), full),
                pl.BlockSpec((H, NO), full),
                pl.BlockSpec((1, NO), full),
                pl.BlockSpec((H, ND), full),
                pl.BlockSpec((1, ND), full),
            ],
            out_specs=(pl.BlockSpec((R, NO), full),
                       pl.BlockSpec((R, ND), full)),
        ),
    )(x, w, b, wo, bo, wd, bd)


def _roi_head_kernel(x_ref, w1_ref, b1_ref, wc_ref, bc_ref, wb_ref, bb_ref,
                     cls_ref, prob_ref, box_ref):
    # fastrcnn_fc_layer
    h = jnp.dot(x_ref[...], w1_ref[...], preferred_element_type=jnp.float32) + b1_ref[...]
    # class_head / box_head
    cls = jnp.dot(h, wc_ref[...], preferred_element_type=jnp.float32) + bc_ref[...]
    box = jnp.dot(h, wb_ref[...], preferred_element_type=jnp.float32) + bb_ref[...]
    # fused softmax over classes (F.softmax(pred_class_scores, 1))
    m = jnp.max(cls, axis=-1, keepdims=True)
    e = jnp.exp(cls - m)
    prob = e * pl.reciprocal(jnp.sum(e, axis=-1, keepdims=True), approx=True)
    cls_ref[...] = cls
    prob_ref[...] = prob
    box_ref[...] = box


def pallas_roi_head(feat, w1, b1, wc, bc, wb, bb):
    R, K = feat.shape
    H = w1.shape[1]
    NC1 = wc.shape[1]
    NB = wb.shape[1]
    full = lambda i: (0, 0)
    return pl.pallas_call(
        _roi_head_kernel,
        out_shape=(
            jax.ShapeDtypeStruct((R, NC1), jnp.float32),
            jax.ShapeDtypeStruct((R, NC1), jnp.float32),
            jax.ShapeDtypeStruct((R, NB), jnp.float32),
        ),
        grid_spec=pltpu.PrefetchScalarGridSpec(
            num_scalar_prefetch=0,
            grid=(1,),
            in_specs=[
                pl.BlockSpec((R, K), full),
                pl.BlockSpec((K, H), full),
                pl.BlockSpec((1, H), full),
                pl.BlockSpec((H, NC1), full),
                pl.BlockSpec((1, NC1), full),
                pl.BlockSpec((H, NB), full),
                pl.BlockSpec((1, NB), full),
            ],
            out_specs=(
                pl.BlockSpec((R, NC1), full),
                pl.BlockSpec((R, NC1), full),
                pl.BlockSpec((R, NB), full),
            ),
        ),
    )(feat, w1, b1, wc, bc, wb, bb)


# ----------------------------- JAX glue -----------------------------
def im2col_3x3(x_nhwc, pad_to=None):
    n, h, w, c = x_nhwc.shape
    xp = jnp.pad(x_nhwc, ((0, 0), (1, 1), (1, 1), (0, 0)))
    cols = [xp[:, dy:dy + h, dx:dx + w, :] for dy in range(3) for dx in range(3)]
    k = 9 * c
    if pad_to is not None and pad_to > k:
        cols.append(jnp.zeros((n, h, w, pad_to - k), x_nhwc.dtype))
        k = pad_to
    cols = jnp.concatenate(cols, axis=-1)
    return cols.reshape(n * h * w, k)


def make_pool_matrix():
    """Pooling matrix for one backbone tile (BB_TILE_IMG_ROWS x IMG_W pixels ->
    BB_POOL_ROWS pooled cells).  Applied in-kernel as a matmul (MXU)."""
    rows = BB_TM
    h = jnp.arange(rows, dtype=jnp.int32) // IMG_W
    w = jnp.arange(rows, dtype=jnp.int32) % IMG_W
    p = (h // STRIDE) * (IMG_W // STRIDE) + (w // STRIDE)
    onehot = (p[None, :] == jnp.arange(BB_POOL_ROWS, dtype=jnp.int32)[:, None])
    return onehot.astype(jnp.float32) / float(STRIDE * STRIDE)


def make_anchors():
    ys = (jnp.arange(FEAT_H, dtype=jnp.float32) + 0.5) * STRIDE
    xs = (jnp.arange(FEAT_W, dtype=jnp.float32) + 0.5) * STRIDE
    cy, cx = jnp.meshgrid(ys, xs, indexing="ij")
    per_size = []
    for s in ANCHOR_SIZES:
        half = s / 2.0
        per_size.append(jnp.stack([cx - half, cy - half, cx + half, cy + half], axis=-1))
    a = jnp.stack(per_size, axis=2)          # [FH, FW, A, 4]
    return a.reshape(-1, 4)


def apply_deltas(proposals, deltas, weights):
    wx, wy, ww, wh = weights
    widths = proposals[:, 2] - proposals[:, 0]
    heights = proposals[:, 3] - proposals[:, 1]
    ctr_x = proposals[:, 0] + 0.5 * widths
    ctr_y = proposals[:, 1] + 0.5 * heights
    dx = deltas[:, 0] / wx
    dy = deltas[:, 1] / wy
    dw = jnp.minimum(deltas[:, 2] / ww, DELTA_CLAMP)
    dh = jnp.minimum(deltas[:, 3] / wh, DELTA_CLAMP)
    px = dx * widths + ctr_x
    py = dy * heights + ctr_y
    pw = jnp.exp(dw) * widths
    ph = jnp.exp(dh) * heights
    return jnp.stack([px - 0.5 * pw, py - 0.5 * ph, px + 0.5 * pw, py + 0.5 * ph], axis=1)


def clip_boxes(boxes, h, w):
    x1 = jnp.clip(boxes[:, 0], 0.0, float(w))
    y1 = jnp.clip(boxes[:, 1], 0.0, float(h))
    x2 = jnp.clip(boxes[:, 2], 0.0, float(w))
    y2 = jnp.clip(boxes[:, 3], 0.0, float(h))
    return jnp.stack([x1, y1, x2, y2], axis=1)


def roi_align(feat_nhwc, rois, pooled, spatial_scale):
    """Bilinear RoIAlign on a single image.  rois: [R, 5] = (batch_idx, x1, y1, x2, y2).
    TODO(synk): sampling_ratio=0 adaptive per-ROI bin sampling is data-dependent; we use
    one bilinear sample at each bin center instead."""
    _, H, W, C = feat_nhwc.shape
    feat = feat_nhwc[0]
    x1 = rois[:, 1] * spatial_scale
    y1 = rois[:, 2] * spatial_scale
    x2 = rois[:, 3] * spatial_scale
    y2 = rois[:, 4] * spatial_scale
    roi_w = jnp.maximum(x2 - x1, 1.0)
    roi_h = jnp.maximum(y2 - y1, 1.0)
    bin_w = roi_w / pooled
    bin_h = roi_h / pooled
    centers = jnp.arange(pooled, dtype=jnp.float32) + 0.5
    sy = jnp.clip(y1[:, None] + centers[None, :] * bin_h[:, None], 0.0, H - 1.0)  # [R, P]
    sx = jnp.clip(x1[:, None] + centers[None, :] * bin_w[:, None], 0.0, W - 1.0)  # [R, P]
    y0 = jnp.floor(sy)
    x0 = jnp.floor(sx)
    ly = sy - y0
    lx = sx - x0
    y0i = y0.astype(jnp.int32)
    x0i = x0.astype(jnp.int32)
    y1i = jnp.minimum(y0i + 1, H - 1)
    x1i = jnp.minimum(x0i + 1, W - 1)

    def gather(yi, xi):  # [R,P],[R,P] -> [R,P,P,C]
        return feat[yi[:, :, None], xi[:, None, :], :]

    v00 = gather(y0i, x0i)
    v01 = gather(y0i, x1i)
    v10 = gather(y1i, x0i)
    v11 = gather(y1i, x1i)
    wy = ly[:, :, None, None]
    wx = lx[:, None, :, None]
    return (v00 * (1 - wy) * (1 - wx) + v01 * (1 - wy) * wx
            + v10 * wy * (1 - wx) + v11 * wy * wx)          # [R, P, P, C]


# ----------------------------- parameters -----------------------------
def init_params(key):
    ks = jax.random.split(key, 14)
    nrm = lambda k, shape, s: (s * jax.random.normal(k, shape, jnp.float32))
    bb_w = nrm(ks[0], (9 * C_IN, C_FEAT), 0.10)
    bb_b = nrm(ks[1], (C_FEAT,), 0.01)
    # Backbone: pad K 36->48 (bf16 sublane packing) and N 32->128 (unmasked lane-dense
    # stores); padded columns are zero weight/bias and sliced off after the kernel.
    bb_w_pad = jnp.pad(bb_w, ((0, BB_K - 9 * C_IN), (0, C_PAD - C_FEAT))).astype(jnp.bfloat16)
    bb_b_pad = jnp.pad(bb_b, (0, C_PAD - C_FEAT)).reshape(1, C_PAD)
    return {
        "bb_w":  bb_w_pad,                                              # [48, 128] bf16
        "bb_b":  bb_b_pad,                                              # [1, 128]  f32
        "rpn_w": nrm(ks[2], (9 * C_FEAT, C_FEAT), 0.05),
        "rpn_b": nrm(ks[3], (C_FEAT,), 0.01).reshape(1, C_FEAT),
        "obj_w": nrm(ks[4], (C_FEAT, NUM_ANCHORS), 0.05),
        "obj_b": nrm(ks[5], (NUM_ANCHORS,), 0.01).reshape(1, NUM_ANCHORS),
        "del_w": nrm(ks[6], (C_FEAT, 4 * NUM_ANCHORS), 0.01),
        "del_b": jnp.zeros((1, 4 * NUM_ANCHORS), jnp.float32),
        # fc_w rows are in NHWC flatten order (P, P, C): equivalent to the torch NCHW layout
        # with the rows permuted once at init, so no transpose of ROI features is needed.
        "fc_w":  nrm(ks[8], (POOL * POOL * C_FEAT, HIDDEN), 0.02),
        "fc_b":  nrm(ks[9], (HIDDEN,), 0.01).reshape(1, HIDDEN),
        "cls_w": nrm(ks[10], (HIDDEN, NUM_CLASS + 1), 0.05),
        "cls_b": nrm(ks[11], (NUM_CLASS + 1,), 0.01).reshape(1, NUM_CLASS + 1),
        "box_w": nrm(ks[12], (HIDDEN, NUM_CLASS * 4), 0.01),
        "box_b": jnp.zeros((1, NUM_CLASS * 4), jnp.float32),
    }


# ----------------------------- forward (inference) -----------------------------
def tiny_faster_rcnn_forward(x_nchw, params, anchors, pool_mat):
    n, c, h, w = x_nchw.shape
    x = jnp.transpose(x_nchw, (0, 2, 3, 1))                      # NCHW -> NHWC

    # ---- TinyBackbone: 3x3 conv (bf16 im2col matmul) + ReLU + 16x16 avg-pool, one kernel
    cols = im2col_3x3(x.astype(jnp.bfloat16), pad_to=BB_K)       # [N*H*W, 48] bf16
    pooled = pallas_backbone(cols, params["bb_w"], params["bb_b"], pool_mat)  # [16, 128]
    feat = pooled[:, :C_FEAT].reshape(n, FEAT_H, FEAT_W, C_FEAT)

    # ---- TinyRPN fused: 3x3 conv + ReLU + objectness 1x1 + sigmoid + delta 1x1, one kernel
    rcols = im2col_3x3(feat)                                     # [FH*FW, 9*C_FEAT]
    obj, dlt = pallas_rpn(rcols, params["rpn_w"], params["rpn_b"],
                          params["obj_w"], params["obj_b"],
                          params["del_w"], params["del_b"])
    rpn_scores = obj.reshape(-1)                                 # sigmoid already applied
    dlt = dlt.reshape(-1, 4)

    rpn_boxes = clip_boxes(apply_deltas(anchors, dlt, (1.0, 1.0, 1.0, 1.0)), IMG_H, IMG_W)
    top_scores, top_idx = jax.lax.top_k(rpn_scores, NUM_PROPOSALS)
    proposals = rpn_boxes[top_idx]                               # [R, 4]

    # ---- RoIAlign (JAX glue)
    _proposals = jnp.concatenate(
        [jnp.zeros((proposals.shape[0], 1), jnp.float32), proposals], axis=1)
    roi_feat = roi_align(feat, _proposals, POOL, 1.0 / STRIDE)   # [R, P, P, C] (NHWC)
    box_feature = roi_feat.reshape(roi_feat.shape[0], -1)        # fc_w rows match NHWC order

    # ---- fused second-stage head (Pallas): fc + class_head + box_head + softmax
    cls_logits, cls_probs, box_deltas = pallas_roi_head(
        box_feature, params["fc_w"], params["fc_b"],
        params["cls_w"], params["cls_b"], params["box_w"], params["box_b"])

    # ---- inference post-processing
    scores2 = cls_probs[:, 1:]                                   # drop background column
    fmask = scores2 > 0.5
    R, B = proposals.shape
    props_exp = jnp.broadcast_to(proposals[:, None, :], (R, NUM_CLASS, B)).reshape(-1, B)
    boxes2 = apply_deltas(props_exp, box_deltas.reshape(R * NUM_CLASS, B),
                          (10.0, 10.0, 5.0, 5.0))
    # original clamps to hard-coded (800, 1280); we clamp to our synthetic image size
    boxes2 = clip_boxes(boxes2, IMG_H, IMG_W).reshape(R, NUM_CLASS, 4)

    # TODO(synk): batched_nms + boolean-mask indexing need data-dependent shapes; we use
    # fixed-size top-k over threshold-masked scores (validity mask returned separately).
    flat_scores = jnp.where(fmask.reshape(-1), scores2.reshape(-1), -1.0)
    k = min(200, R * NUM_CLASS)
    keep_scores, keep_idx = jax.lax.top_k(flat_scores, k)
    keep_boxes = boxes2.reshape(-1, 4)[keep_idx]
    keep_classes = keep_idx % NUM_CLASS   # 0-based fg column, same as torch.where(_filter)[1]
    valid = keep_scores > 0.5
    return keep_boxes, keep_scores, keep_classes, valid


# ----------------------------- main -----------------------------
if __name__ == "__main__":
    key = jax.random.PRNGKey(0)
    k_x, k_p = jax.random.split(key)
    x = jax.random.normal(k_x, (N_IMG, C_IN, IMG_H, IMG_W), jnp.float32)
    params = init_params(k_p)
    anchors = make_anchors()
    pool_mat = make_pool_matrix()

    fwd = jax.jit(tiny_faster_rcnn_forward)
    boxes, scores, classes, valid = fwd(x, params, anchors, pool_mat)
    jax.block_until_ready((boxes, scores, classes, valid))

    assert boxes.shape == (min(200, NUM_PROPOSALS * NUM_CLASS), 4)
    assert scores.shape[0] == boxes.shape[0] and classes.shape[0] == boxes.shape[0]
    assert bool(jnp.all(jnp.isfinite(boxes))) and bool(jnp.all(jnp.isfinite(scores)))
    print("KERNEL_OK")
</pallas_src>

<mosaic_0001>
module attributes {stable_mosaic.version = 11 : i64} {
  func.func @_backbone_kernel(%arg0: i32, %arg1: memref<2048x48xbf16, #tpu.memory_space<vmem>>, %arg2: memref<48x128xbf16, #tpu.memory_space<vmem>>, %arg3: memref<1x128xf32, #tpu.memory_space<vmem>>, %arg4: memref<8x2048xf32, #tpu.memory_space<vmem>>, %arg5: memref<8x128xf32, #tpu.memory_space<vmem>>) attributes {dimension_semantics = [#tpu.dimension_semantics<parallel>], iteration_bounds = array<i64: 2>, scalar_prefetch = 0 : i64, scratch_operands = 0 : i64, tpu.core_type = #tpu.core_type<tc>, window_params = [{transform_indices = @transform_0, window_bounds = array<i64: 2048, 48>}, {pipeline_mode = #tpu.pipeline_mode<synchronous>, transform_indices = @transform_1, window_bounds = array<i64: 48, 128>}, {pipeline_mode = #tpu.pipeline_mode<synchronous>, transform_indices = @transform_2, window_bounds = array<i64: 1, 128>}, {pipeline_mode = #tpu.pipeline_mode<synchronous>, transform_indices = @transform_3, window_bounds = array<i64: 8, 2048>}, {transform_indices = @transform_4, window_bounds = array<i64: 8, 128>}]} {
    %c0 = arith.constant 0 : index
    %c0_0 = arith.constant 0 : index
    %0 = vector.load %arg1[%c0, %c0_0] : memref<2048x48xbf16, #tpu.memory_space<vmem>>, vector<2048x48xbf16>
    %c0_1 = arith.constant 0 : index
    %c0_2 = arith.constant 0 : index
    %1 = vector.load %arg2[%c0_1, %c0_2] : memref<48x128xbf16, #tpu.memory_space<vmem>>, vector<48x128xbf16>
    %cst = arith.constant dense<0.000000e+00> : vector<2048x128xf32>
    %2 = tpu.matmul %0, %1, %cst {dimension_numbers = #tpu.dot_dimension_numbers<[1], [0], [0], [1], [0, 0, 1, 1], [], []>} : vector<2048x48xbf16>, vector<48x128xbf16>, vector<2048x128xf32> -> vector<2048x128xf32>
    %c0_3 = arith.constant 0 : index
    %c0_4 = arith.constant 0 : index
    %3 = vector.load %arg3[%c0_3, %c0_4] : memref<1x128xf32, #tpu.memory_space<vmem>>, vector<1x128xf32>
    %4 = vector.broadcast %3 : vector<1x128xf32> to vector<2048x128xf32>
    %5 = arith.addf %2, %4 : vector<2048x128xf32>
    %cst_5 = arith.constant 0.000000e+00 : f32
    %6 = vector.broadcast %cst_5 : f32 to vector<2048x128xf32>
    %7 = arith.maximumf %5, %6 : vector<2048x128xf32>
    %c0_6 = arith.constant 0 : index
    %c0_7 = arith.constant 0 : index
    %8 = vector.load %arg4[%c0_6, %c0_7] : memref<8x2048xf32, #tpu.memory_space<vmem>>, vector<8x2048xf32>
    %cst_8 = arith.constant dense<0.000000e+00> : vector<8x128xf32>
    %9 = tpu.matmul %8, %7, %cst_8 {dimension_numbers = #tpu.dot_dimension_numbers<[1], [0], [0], [1], [0, 0, 1, 1], [], []>} : vector<8x2048xf32>, vector<2048x128xf32>, vector<8x128xf32> -> vector<8x128xf32>
    %c0_9 = arith.constant 0 : index
    %c0_10 = arith.constant 0 : index
    %10 = vector.load %arg5[%c0_9, %c0_10] : memref<8x128xf32, #tpu.memory_space<vmem>>, vector<8x128xf32>
    tpu.vector_store %arg5[%c0_9, %c0_10], %9 {strides = array<i32>} : memref<8x128xf32, #tpu.memory_space<vmem>>, vector<8x128xf32>,
    return
  }
  func.func @transform_0(%arg0: i32) -> (i32, i32) {
    %c0_i32 = arith.constant 0 : i32
    %c0_i32_0 = arith.constant 0 : i32
    return %arg0, %c0_i32 : i32, i32
  }
  func.func @transform_1(%arg0: i32) -> (i32, i32) {
    %c0_i32 = arith.constant 0 : i32
    %c0_i32_0 = arith.constant 0 : i32
    %c0_i32_1 = arith.constant 0 : i32
    return %c0_i32, %c0_i32_0 : i32, i32
  }
  func.func @transform_2(%arg0: i32) -> (i32, i32) {
    %c0_i32 = arith.constant 0 : i32
    %c0_i32_0 = arith.constant 0 : i32
    %c0_i32_1 = arith.constant 0 : i32
    return %c0_i32, %c0_i32_0 : i32, i32
  }
  func.func @transform_3(%arg0: i32) -> (i32, i32) {
    %c0_i32 = arith.constant 0 : i32
    %c0_i32_0 = arith.constant 0 : i32
    %c0_i32_1 = arith.constant 0 : i32
    return %c0_i32, %c0_i32_0 : i32, i32
  }
  func.func @transform_4(%arg0: i32) -> (i32, i32) {
    %c0_i32 = arith.constant 0 : i32
    %c0_i32_0 = arith.constant 0 : i32
    return %arg0, %c0_i32 : i32, i32
  }
}

module attributes {stable_mosaic.version = 11 : i64} {
  func.func @_rpn_kernel(%arg0: i32, %arg1: memref<16x288xf32, #tpu.memory_space<vmem>>, %arg2: memref<288x32xf32, #tpu.memory_space<vmem>>, %arg3: memref<1x32xf32, #tpu.memory_space<vmem>>, %arg4: memref<32x4xf32, #tpu.memory_space<vmem>>, %arg5: memref<1x4xf32, #tpu.memory_space<vmem>>, %arg6: memref<32x16xf32, #tpu.memory_space<vmem>>, %arg7: memref<1x16xf32, #tpu.memory_space<vmem>>, %arg8: memref<16x4xf32, #tpu.memory_space<vmem>>, %arg9: memref<16x16xf32, #tpu.memory_space<vmem>>) attributes {dimension_semantics = [#tpu.dimension_semantics<arbitrary>], iteration_bounds = array<i64: 1>, scalar_prefetch = 0 : i64, scratch_operands = 0 : i64, tpu.core_type = #tpu.core_type<tc>, window_params = [{pipeline_mode = #tpu.pipeline_mode<synchronous>, transform_indices = @transform_0, window_bounds = array<i64: 16, 288>}, {pipeline_mode = #tpu.pipeline_mode<synchronous>, transform_indices = @transform_1, window_bounds = array<i64: 288, 32>}, {pipeline_mode = #tpu.pipeline_mode<synchronous>, transform_indices = @transform_2, window_bounds = array<i64: 1, 32>}, {pipeline_mode = #tpu.pipeline_mode<synchronous>, transform_indices = @transform_3, window_bounds = array<i64: 32, 4>}, {pipeline_mode = #tpu.pipeline_mode<synchronous>, transform_indices = @transform_4, window_bounds = array<i64: 1, 4>}, {pipeline_mode = #tpu.pipeline_mode<synchronous>, transform_indices = @transform_5, window_bounds = array<i64: 32, 16>}, {pipeline_mode = #tpu.pipeline_mode<synchronous>, transform_indices = @transform_6, window_bounds = array<i64: 1, 16>}, {pipeline_mode = #tpu.pipeline_mode<synchronous>, transform_indices = @transform_7, window_bounds = array<i64: 16, 4>}, {pipeline_mode = #tpu.pipeline_mode<synchronous>, transform_indices = @transform_8, window_bounds = array<i64: 16, 16>}]} {
    %c0 = arith.constant 0 : index
    %c0_0 = arith.constant 0 : index
    %0 = vector.load %arg1[%c0, %c0_0] : memref<16x288xf32, #tpu.memory_space<vmem>>, vector<16x288xf32>
    %c0_1 = arith.constant 0 : index
    %c0_2 = arith.constant 0 : index
    %1 = vector.load %arg2[%c0_1, %c0_2] : memref<288x32xf32, #tpu.memory_space<vmem>>, vector<288x32xf32>
    %cst = arith.constant dense<0.000000e+00> : vector<16x32xf32>
    %2 = tpu.matmul %0, %1, %cst {dimension_numbers = #tpu.dot_dimension_numbers<[1], [0], [0], [1], [0, 0, 1, 1], [], []>} : vector<16x288xf32>, vector<288x32xf32>, vector<16x32xf32> -> vector<16x32xf32>
    %c0_3 = arith.constant 0 : index
    %c0_4 = arith.constant 0 : index
    %3 = vector.load %arg3[%c0_3, %c0_4] : memref<1x32xf32, #tpu.memory_space<vmem>>, vector<1x32xf32>
    %4 = vector.broadcast %3 : vector<1x32xf32> to vector<16x32xf32>
    %5 = arith.addf %2, %4 : vector<16x32xf32>
    %cst_5 = arith.constant 0.000000e+00 : f32
    %6 = vector.broadcast %cst_5 : f32 to vector<16x32xf32>
    %7 = arith.maximumf %5, %6 : vector<16x32xf32>
    %c0_6 = arith.constant 0 : index
    %c0_7 = arith.constant 0 : index
    %8 = vector.load %arg4[%c0_6, %c0_7] : memref<32x4xf32, #tpu.memory_space<vmem>>, vector<32x4xf32>
    %cst_8 = arith.constant dense<0.000000e+00> : vector<16x4xf32>
    %9 = tpu.matmul %7, %8, %cst_8 {dimension_numbers = #tpu.dot_dimension_numbers<[1], [0], [0], [1], [0, 0, 1, 1], [], []>} : vector<16x32xf32>, vector<32x4xf32>, vector<16x4xf32> -> vector<16x4xf32>
    %c0_9 = arith.constant 0 : index
    %c0_10 = arith.constant 0 : index
    %10 = vector.load %arg5[%c0_9, %c0_10] : memref<1x4xf32, #tpu.memory_space<vmem>>, vector<1x4xf32>
    %11 = vector.broadcast %10 : vector<1x4xf32> to vector<16x4xf32>
    %12 = arith.addf %9, %11 : vector<16x4xf32>
    %c0_11 = arith.constant 0 : index
    %c0_12 = arith.constant 0 : index
    %13 = vector.load %arg6[%c0_11, %c0_12] : memref<32x16xf32, #tpu.memory_space<vmem>>, vector<32x16xf32>
    %cst_13 = arith.constant dense<0.000000e+00> : vector<16x16xf32>
    %14 = tpu.matmul %7, %13, %cst_13 {dimension_numbers = #tpu.dot_dimension_numbers<[1], [0], [0], [1], [0, 0, 1, 1], [], []>} : vector<16x32xf32>, vector<32x16xf32>, vector<16x16xf32> -> vector<16x16xf32>
    %c0_14 = arith.constant 0 : index
    %c0_15 = arith.constant 0 : index
    %15 = vector.load %arg7[%c0_14, %c0_15] : memref<1x16xf32, #tpu.memory_space<vmem>>, vector<1x16xf32>
    %16 = vector.broadcast %15 : vector<1x16xf32> to vector<16x16xf32>
    %17 = arith.addf %14, %16 : vector<16x16xf32>
    %18 = arith.negf %12 : vector<16x4xf32>
    %19 = math.exp %18 : vector<16x4xf32>
    %cst_16 = arith.constant 1.000000e+00 : f32
    %20 = vector.broadcast %cst_16 : f32 to vector<16x4xf32>
    %21 = arith.addf %20, %19 : vector<16x4xf32>
    %22 = arith.divf %20, %21 : vector<16x4xf32>
    %c0_17 = arith.constant 0 : index
    %c0_18 = arith.constant 0 : index
    %23 = vector.load %arg8[%c0_17, %c0_18] : memref<16x4xf32, #tpu.memory_space<vmem>>, vector<16x4xf32>
    tpu.vector_store %arg8[%c0_17, %c0_18], %22 {strides = array<i32>} : memref<16x4xf32, #tpu.memory_space<vmem>>, vector<16x4xf32>,
    %c0_19 = arith.constant 0 : index
    %c0_20 = arith.constant 0 : index
    %24 = vector.load %arg9[%c0_19, %c0_20] : memref<16x16xf32, #tpu.memory_space<vmem>>, vector<16x16xf32>
    tpu.vector_store %arg9[%c0_19, %c0_20], %17 {strides = array<i32>} : memref<16x16xf32, #tpu.memory_space<vmem>>, vector<16x16xf32>,
    return
  }
  func.func @transform_0(%arg0: i32) -> (i32, i32) {
    %c0_i32 = arith.constant 0 : i32
    %c0_i32_0 = arith.constant 0 : i32
    %c0_i32_1 = arith.constant 0 : i32
    return %c0_i32, %c0_i32_0 : i32, i32
  }
  func.func @transform_1(%arg0: i32) -> (i32, i32) {
    %c0_i32 = arith.constant 0 : i32
    %c0_i32_0 = arith.constant 0 : i32
    %c0_i32_1 = arith.constant 0 : i32
    return %c0_i32, %c0_i32_0 : i32, i32
  }
  func.func @transform_2(%arg0: i32) -> (i32, i32) {
    %c0_i32 = arith.constant 0 : i32
    %c0_i32_0 = arith.constant 0 : i32
    %c0_i32_1 = arith.constant 0 : i32
    return %c0_i32, %c0_i32_0 : i32, i32
  }
  func.func @transform_3(%arg0: i32) -> (i32, i32) {
    %c0_i32 = arith.constant 0 : i32
    %c0_i32_0 = arith.constant 0 : i32
    %c0_i32_1 = arith.constant 0 : i32
    return %c0_i32, %c0_i32_0 : i32, i32
  }
  func.func @transform_4(%arg0: i32) -> (i32, i32) {
    %c0_i32 = arith.constant 0 : i32
    %c0_i32_0 = arith.constant 0 : i32
    %c0_i32_1 = arith.constant 0 : i32
    return %c0_i32, %c0_i32_0 : i32, i32
  }
  func.func @transform_5(%arg0: i32) -> (i32, i32) {
    %c0_i32 = arith.constant 0 : i32
    %c0_i32_0 = arith.constant 0 : i32
    %c0_i32_1 = arith.constant 0 : i32
    return %c0_i32, %c0_i32_0 : i32, i32
  }
  func.func @transform_6(%arg0: i32) -> (i32, i32) {
    %c0_i32 = arith.constant 0 : i32
    %c0_i32_0 = arith.constant 0 : i32
    %c0_i32_1 = arith.constant 0 : i32
    return %c0_i32, %c0_i32_0 : i32, i32
  }
  func.func @transform_7(%arg0: i32) -> (i32, i32) {
    %c0_i32 = arith.constant 0 : i32
    %c0_i32_0 = arith.constant 0 : i32
    %c0_i32_1 = arith.constant 0 : i32
    return %c0_i32, %c0_i32_0 : i32, i32
  }
  func.func @transform_8(%arg0: i32) -> (i32, i32) {
    %c0_i32 = arith.constant 0 : i32
    %c0_i32_0 = arith.constant 0 : i32
    %c0_i32_1 = arith.constant 0 : i32
    return %c0_i32, %c0_i32_0 : i32, i32
  }
}

module attributes {stable_mosaic.version = 11 : i64} {
  func.func @_roi_head_kernel(%arg0: i32, %arg1: memref<16x512xf32, #tpu.memory_space<vmem>>, %arg2: memref<512x128xf32, #tpu.memory_space<vmem>>, %arg3: memref<1x128xf32, #tpu.memory_space<vmem>>, %arg4: memref<128x5xf32, #tpu.memory_space<vmem>>, %arg5: memref<1x5xf32, #tpu.memory_space<vmem>>, %arg6: memref<128x16xf32, #tpu.memory_space<vmem>>, %arg7: memref<1x16xf32, #tpu.memory_space<vmem>>, %arg8: memref<16x5xf32, #tpu.memory_space<vmem>>, %arg9: memref<16x5xf32, #tpu.memory_space<vmem>>, %arg10: memref<16x16xf32, #tpu.memory_space<vmem>>) attributes {dimension_semantics = [#tpu.dimension_semantics<arbitrary>], iteration_bounds = array<i64: 1>, scalar_prefetch = 0 : i64, scratch_operands = 0 : i64, tpu.core_type = #tpu.core_type<tc>, window_params = [{pipeline_mode = #tpu.pipeline_mode<synchronous>, transform_indices = @transform_0, window_bounds = array<i64: 16, 512>}, {pipeline_mode = #tpu.pipeline_mode<synchronous>, transform_indices = @transform_1, window_bounds = array<i64: 512, 128>}, {pipeline_mode = #tpu.pipeline_mode<synchronous>, transform_indices = @transform_2, window_bounds = array<i64: 1, 128>}, {pipeline_mode = #tpu.pipeline_mode<synchronous>, transform_indices = @transform_3, window_bounds = array<i64: 128, 5>}, {pipeline_mode = #tpu.pipeline_mode<synchronous>, transform_indices = @transform_4, window_bounds = array<i64: 1, 5>}, {pipeline_mode = #tpu.pipeline_mode<synchronous>, transform_indices = @transform_5, window_bounds = array<i64: 128, 16>}, {pipeline_mode = #tpu.pipeline_mode<synchronous>, transform_indices = @transform_6, window_bounds = array<i64: 1, 16>}, {pipeline_mode = #tpu.pipeline_mode<synchronous>, transform_indices = @transform_7, window_bounds = array<i64: 16, 5>}, {pipeline_mode = #tpu.pipeline_mode<synchronous>, transform_indices = @transform_8, window_bounds = array<i64: 16, 5>}, {pipeline_mode = #tpu.pipeline_mode<synchronous>, transform_indices = @transform_9, window_bounds = array<i64: 16, 16>}]} {
    %c0 = arith.constant 0 : index
    %c0_0 = arith.constant 0 : index
    %0 = vector.load %arg1[%c0, %c0_0] : memref<16x512xf32, #tpu.memory_space<vmem>>, vector<16x512xf32>
    %c0_1 = arith.constant 0 : index
    %c0_2 = arith.constant 0 : index
    %1 = vector.load %arg2[%c0_1, %c0_2] : memref<512x128xf32, #tpu.memory_space<vmem>>, vector<512x128xf32>
    %cst = arith.constant dense<0.000000e+00> : vector<16x128xf32>
    %2 = tpu.matmul %0, %1, %cst {dimension_numbers = #tpu.dot_dimension_numbers<[1], [0], [0], [1], [0, 0, 1, 1], [], []>} : vector<16x512xf32>, vector<512x128xf32>, vector<16x128xf32> -> vector<16x128xf32>
    %c0_3 = arith.constant 0 : index
    %c0_4 = arith.constant 0 : index
    %3 = vector.load %arg3[%c0_3, %c0_4] : memref<1x128xf32, #tpu.memory_space<vmem>>, vector<1x128xf32>
    %4 = vector.broadcast %3 : vector<1x128xf32> to vector<16x128xf32>
    %5 = arith.addf %2, %4 : vector<16x128xf32>
    %c0_5 = arith.constant 0 : index
    %c0_6 = arith.constant 0 : index
    %6 = vector.load %arg4[%c0_5, %c0_6] : memref<128x5xf32, #tpu.memory_space<vmem>>, vector<128x5xf32>
    %cst_7 = arith.constant dense<0.000000e+00> : vector<16x5xf32>
    %7 = tpu.matmul %5, %6, %cst_7 {dimension_numbers = #tpu.dot_dimension_numbers<[1], [0], [0], [1], [0, 0, 1, 1], [], []>} : vector<16x128xf32>, vector<128x5xf32>, vector<16x5xf32> -> vector<16x5xf32>
    %c0_8 = arith.constant 0 : index
    %c0_9 = arith.constant 0 : index
    %8 = vector.load %arg5[%c0_8, %c0_9] : memref<1x5xf32, #tpu.memory_space<vmem>>, vector<1x5xf32>
    %9 = vector.broadcast %8 : vector<1x5xf32> to vector<16x5xf32>
    %10 = arith.addf %7, %9 : vector<16x5xf32>
    %c0_10 = arith.constant 0 : index
    %c0_11 = arith.constant 0 : index
    %11 = vector.load %arg6[%c0_10, %c0_11] : memref<128x16xf32, #tpu.memory_space<vmem>>, vector<128x16xf32>
    %cst_12 = arith.constant dense<0.000000e+00> : vector<16x16xf32>
    %12 = tpu.matmul %5, %11, %cst_12 {dimension_numbers = #tpu.dot_dimension_numbers<[1], [0], [0], [1], [0, 0, 1, 1], [], []>} : vector<16x128xf32>, vector<128x16xf32>, vector<16x16xf32> -> vector<16x16xf32>
    %c0_13 = arith.constant 0 : index
    %c0_14 = arith.constant 0 : index
    %13 = vector.load %arg7[%c0_13, %c0_14] : memref<1x16xf32, #tpu.memory_space<vmem>>, vector<1x16xf32>
    %14 = vector.broadcast %13 : vector<1x16xf32> to vector<16x16xf32>
    %15 = arith.addf %12, %14 : vector<16x16xf32>
    %cst_15 = arith.constant dense<0xFF800000> : vector<16xf32>
    %16 = vector.multi_reduction <maximumf>, %10, %cst_15 [1] : vector<16x5xf32> to vector<16xf32>
    %17 = vector.shape_cast %16 : vector<16xf32> to vector<16x1xf32>
    %18 = vector.broadcast %17 : vector<16x1xf32> to vector<16x5xf32>
    %19 = arith.subf %10, %18 : vector<16x5xf32>
    %20 = math.exp %19 : vector<16x5xf32>
    %cst_16 = arith.constant dense<0.000000e+00> : vector<16xf32>
    %21 = vector.multi_reduction <add>, %20, %cst_16 [1] : vector<16x5xf32> to vector<16xf32>
    %22 = vector.shape_cast %21 : vector<16xf32> to vector<16x1xf32>
    %23 = tpu.reciprocal %22 {approx = true} : vector<16x1xf32> -> vector<16x1xf32>
    %24 = vector.broadcast %23 : vector<16x1xf32> to vector<16x5xf32>
    %25 = arith.mulf %20, %24 : vector<16x5xf32>
    %c0_17 = arith.constant 0 : index
    %c0_18 = arith.constant 0 : index
    %26 = vector.load %arg8[%c0_17, %c0_18] : memref<16x5xf32, #tpu.memory_space<vmem>>, vector<16x5xf32>
    tpu.vector_store %arg8[%c0_17, %c0_18], %10 {strides = array<i32>} : memref<16x5xf32, #tpu.memory_space<vmem>>, vector<16x5xf32>,
    %c0_19 = arith.constant 0 : index
    %c0_20 = arith.constant 0 : index
    %27 = vector.load %arg9[%c0_19, %c0_20] : memref<16x5xf32, #tpu.memory_space<vmem>>, vector<16x5xf32>
    tpu.vector_store %arg9[%c0_19, %c0_20], %25 {strides = array<i32>} : memref<16x5xf32, #tpu.memory_space<vmem>>, vector<16x5xf32>,
    %c0_21 = arith.constant 0 : index
    %c0_22 = arith.constant 0 : index
    %28 = vector.load %arg10[%c0_21, %c0_22] : memref<16x16xf32, #tpu.memory_space<vmem>>, vector<16x16xf32>
    tpu.vector_store %arg10[%c0_21, %c0_22], %15 {strides = array<i32>} : memref<16x16xf32, #tpu.memory_space<vmem>>, vector<16x16xf32>,
    return
  }
  func.func @transform_0(%arg0: i32) -> (i32, i32) {
    %c0_i32 = arith.constant 0 : i32
    %c0_i32_0 = arith.constant 0 : i32
    %c0_i32_1 = arith.constant 0 : i32
    return %c0_i32, %c0_i32_0 : i32, i32
  }
  func.func @transform_1(%arg0: i32) -> (i32, i32) {
    %c0_i32 = arith.constant 0 : i32
    %c0_i32_0 = arith.constant 0 : i32
    %c0_i32_1 = arith.constant 0 : i32
    return %c0_i32, %c0_i32_0 : i32, i32
  }
  func.func @transform_2(%arg0: i32) -> (i32, i32) {
    %c0_i32 = arith.constant 0 : i32
    %c0_i32_0 = arith.constant 0 : i32
    %c0_i32_1 = arith.constant 0 : i32
    return %c0_i32, %c0_i32_0 : i32, i32
  }
  func.func @transform_3(%arg0: i32) -> (i32, i32) {
    %c0_i32 = arith.constant 0 : i32
    %c0_i32_0 = arith.constant 0 : i32
    %c0_i32_1 = arith.constant 0 : i32
    return %c0_i32, %c0_i32_0 : i32, i32
  }
  func.func @transform_4(%arg0: i32) -> (i32, i32) {
    %c0_i32 = arith.constant 0 : i32
    %c0_i32_0 = arith.constant 0 : i32
    %c0_i32_1 = arith.constant 0 : i32
    return %c0_i32, %c0_i32_0 : i32, i32
  }
  func.func @transform_5(%arg0: i32) -> (i32, i32) {
    %c0_i32 = arith.constant 0 : i32
    %c0_i32_0 = arith.constant 0 : i32
    %c0_i32_1 = arith.constant 0 : i32
    return %c0_i32, %c0_i32_0 : i32, i32
  }
  func.func @transform_6(%arg0: i32) -> (i32, i32) {
    %c0_i32 = arith.constant 0 : i32
    %c0_i32_0 = arith.constant 0 : i32
    %c0_i32_1 = arith.constant 0 : i32
    return %c0_i32, %c0_i32_0 : i32, i32
  }
  func.func @transform_7(%arg0: i32) -> (i32, i32) {
    %c0_i32 = arith.constant 0 : i32
    %c0_i32_0 = arith.constant 0 : i32
    %c0_i32_1 = arith.constant 0 : i32
    return %c0_i32, %c0_i32_0 : i32, i32
  }
  func.func @transform_8(%arg0: i32) -> (i32, i32) {
    %c0_i32 = arith.constant 0 : i32
    %c0_i32_0 = arith.constant 0 : i32
    %c0_i32_1 = arith.constant 0 : i32
    return %c0_i32, %c0_i32_0 : i32, i32
  }
  func.func @transform_9(%arg0: i32) -> (i32, i32) {
    %c0_i32 = arith.constant 0 : i32
    %c0_i32_0 = arith.constant 0 : i32
    %c0_i32_1 = arith.constant 0 : i32
    return %c0_i32, %c0_i32_0 : i32, i32
  }
}

</mosaic_0001>

<llo_original>
// kernel: tiny_faster_rcnn_forward.3
$region0: #{tiny_faster_rcnn_forward.3}
  #allocation0 [shape = 'u32[]', space=smem, size = 0x4, offset = 0x4, fixed_abs, tag = 'smem constant byte address 0x4 - core index']
  #allocation1 [shape = 'u32[144,128]{1,0:T(1,128)}', space=vmem, size = 0x12000, scoped, tag = 'internal scratch']
  %s0 = inlined_call_operand.vmem [shape: bf16[4096,48], index: 0, kind: input, shape index: {}]
  %s1 = inlined_call_operand.vmem [shape: bf16[48,128], index: 1, kind: input, shape index: {}]
  %s2 = inlined_call_operand.vmem [shape: f32[1,128], index: 2, kind: input, shape index: {}]
  %s3 = inlined_call_operand.vmem [shape: f32[8,2048], index: 3, kind: input, shape index: {}]
  %s4 = inlined_call_operand.vmem [shape: f32[16,128], index: 4, kind: output, shape index: {}]
  %s5 = sld [smem:[#allocation0]]
  $region49: #{tiny_faster_rcnn_forward.3} parent=0
    _
  %s7 = ssub.s32 1, %s5
  %s8 = scalar_select 0, %s7, %s5
  loop: start=0, step=1, limit=4
  $region2: #{tiny_faster_rcnn_forward.3} parent=0 // loop_pre_header
    _
  $region3: #{tiny_faster_rcnn_forward.3} parent=0 // loop_header
    %s10 = sphi 0, %s14
    %p11 = scmp.ge.s32.totalorder %s10, 4
    %s20 = sphi 0, %s22
    %s23 = sphi 0, %s20
    %s24 = sphi 0, %s23
    %s40 = sphi 0, %s24
    %s44 = sphi 0, %s44
    %s46 = sphi 0, %s44
    %s47 = sphi 0, %s46
    %s61 = sphi 0, %s47
    %s65 = sphi 0, %s65
    %s67 = sphi 0, %s65
    %s68 = sphi 0, %s67
    %s82 = sphi 0, %s68
    %s86 = sphi 0, %s86
    %s88 = sphi 0, %s86
    %s89 = sphi 0, %s88
    %s103 = sphi 0, %s89
    %s109 = sphi 0, %s111
    %s112 = sphi 0, %s109
    %s113 = sphi 0, %s112
    %s129 = sphi 0, %s113
  $region4: #{tiny_faster_rcnn_forward.3} parent=0 // loop_header_branch
    %13 = sbr.rel (%p11) target = $region8
  $region5: #{tiny_faster_rcnn_forward.3} parent=0 // loop_body
    %s15 = ssub.s32 %s10, 1
    %s16 = ssub.s32 %s10, 2
    %s17 = sadd.s32 %s10, 1
    %s18 = ssub.s32 %s10, %s17
    %p19 = scmp.eq.s32.totalorder %s18, 0
    %s21 = sadd.s32 %s20, 1
    %s22 = scalar_select %p19, %s20, %s21
    %p25 = pneg %p19
    %p26 = scmp.eq.s32.totalorder %s10, 1
    %p27 = por %p25, %p26
    %p28 = scmp.ne.s32.totalorder %s20, %s23
    %p29 = scmp.eq.s32.totalorder %s10, 0
    %p30 = por %p28, %p29
    %p31 = scmp.ne.s32.totalorder %s20, %s23
    %p32 = scmp.eq.s32.totalorder %s15, 1
    %p33 = por %p31, %p32
    %p34 = scmp.ne.s32.totalorder %s23, %s24
    %p35 = scmp.eq.s32.totalorder %s15, 0
    %p36 = por %p34, %p35
    %p37 = scmp.ne.s32.totalorder %s23, %s24
    %p38 = scmp.eq.s32.totalorder %s16, 1
    %p39 = por %p37, %p38
    %p41 = scmp.ne.s32.totalorder %s24, %s40
    %p42 = scmp.eq.s32.totalorder %s16, 0
    %p43 = por %p41, %p42
    %s45 = sadd.s32 %s44, 1
    %p48 = scmp.eq.s32.totalorder %s10, 1
    %p49 = scmp.ne.s32.totalorder %s44, %s46
    %p50 = scmp.eq.s32.totalorder %s10, 0
    %p51 = por %p49, %p50
    %p52 = scmp.ne.s32.totalorder %s44, %s46
    %p53 = scmp.eq.s32.totalorder %s15, 1
    %p54 = por %p52, %p53
    %p55 = scmp.ne.s32.totalorder %s46, %s47
    %p56 = scmp.eq.s32.totalorder %s15, 0
    %p57 = por %p55, %p56
    %p58 = scmp.ne.s32.totalorder %s46, %s47
    %p59 = scmp.eq.s32.totalorder %s16, 1
    %p60 = por %p58, %p59
    %p62 = scmp.ne.s32.totalorder %s47, %s61
    %p63 = scmp.eq.s32.totalorder %s16, 0
    %p64 = por %p62, %p63
    %s66 = sadd.s32 %s65, 1
    %p69 = scmp.eq.s32.totalorder %s10, 1
    %p70 = scmp.ne.s32.totalorder %s65, %s67
    %p71 = scmp.eq.s32.totalorder %s10, 0
    %p72 = por %p70, %p71
    %p73 = scmp.ne.s32.totalorder %s65, %s67
    %p74 = scmp.eq.s32.totalorder %s15, 1
    %p75 = por %p73, %p74
    %p76 = scmp.ne.s32.totalorder %s67, %s68
    %p77 = scmp.eq.s32.totalorder %s15, 0
    %p78 = por %p76, %p77
    %p79 = scmp.ne.s32.totalorder %s67, %s68
    %p80 = scmp.eq.s32.totalorder %s16, 1
    %p81 = por %p79, %p80
    %p83 = scmp.ne.s32.totalorder %s68, %s82
    %p84 = scmp.eq.s32.totalorder %s16, 0
    %p85 = por %p83, %p84
    %s87 = sadd.s32 %s86, 1
    %p90 = scmp.eq.s32.totalorder %s10, 1
    %p91 = scmp.ne.s32.totalorder %s86, %s88
    %p92 = scmp.eq.s32.totalorder %s10, 0
    %p93 = por %p91, %p92
    %p94 = scmp.ne.s32.totalorder %s86, %s88
    %p95 = scmp.eq.s32.totalorder %s15, 1
    %p96 = por %p94, %p95
    %p97 = scmp.ne.s32.totalorder %s88, %s89
    %p98 = scmp.eq.s32.totalorder %s15, 0
    %p99 = por %p97, %p98
    %p100 = scmp.ne.s32.totalorder %s88, %s89
    %p101 = scmp.eq.s32.totalorder %s16, 1
    %p102 = por %p100, %p101
    %p104 = scmp.ne.s32.totalorder %s89, %s103
    %p105 = scmp.eq.s32.totalorder %s16, 0
    %p106 = por %p104, %p105
    %s107 = ssub.s32 %s10, %s17
    %p108 = scmp.eq.s32.totalorder %s107, 0
    %s110 = sadd.s32 %s109, 1
    %s111 = scalar_select %p108, %s109, %s110
    %p114 = pneg %p108
    %p115 = scmp.eq.s32.totalorder %s10, 1
    %p116 = por %p114, %p115
    %p117 = scmp.ne.s32.totalorder %s109, %s112
    %p118 = scmp.eq.s32.totalorder %s10, 0
    %p119 = por %p117, %p118
    %p120 = scmp.ne.s32.totalorder %s109, %s112
    %p121 = scmp.eq.s32.totalorder %s15, 1
    %p122 = por %p120, %p121
    %p123 = scmp.ne.s32.totalorder %s112, %s113
    %p124 = scmp.eq.s32.totalorder %s15, 0
    %p125 = por %p123, %p124
    %p126 = scmp.ne.s32.totalorder %s112, %s113
    %p127 = scmp.eq.s32.totalorder %s16, 1
    %p128 = por %p126, %p127
    %p130 = scmp.ne.s32.totalorder %s113, %s129
    %p131 = scmp.eq.s32.totalorder %s16, 0
    %p132 = por %p130, %p131
    %p133 = scmp.le.s32.totalorder 1, %s10
    %p134 = scmp.lt.s32.totalorder %s10, 3
    %p135 = pnand %p133, %p134
    %p136 = pneg %p135
    // Predicated region
    $region9: #{tiny_faster_rcnn_forward.3} parent=5 // pred_check
      _
    $region10: #{tiny_faster_rcnn_forward.3} parent=5 // pred_check_branch
      %138 = sbr.rel (%p135) target = $region12
    $region11: #{tiny_faster_rcnn_forward.3} parent=5 // pred_region
      %s139 = ssub.s32 %s10, 1
      // Predicated region
      $region13: #{tiny_faster_rcnn_forward.3} parent=11 // pred_check
        %p140 = pneg %p57
      $region14: #{tiny_faster_rcnn_forward.3} parent=11 // pred_check_branch
        %142 = sbr.rel (%p140) target = $region16
      $region15: #{tiny_faster_rcnn_forward.3} parent=11 // pred_region
        _
      $region16: #{tiny_faster_rcnn_forward.3} parent=11 // pred_fallthru
        _
      // Predicated region
      $region17: #{tiny_faster_rcnn_forward.3} parent=11 // pred_check
        %p143 = pneg %p78
      $region18: #{tiny_faster_rcnn_forward.3} parent=11 // pred_check_branch
        %145 = sbr.rel (%p143) target = $region20
      $region19: #{tiny_faster_rcnn_forward.3} parent=11 // pred_region
        _
      $region20: #{tiny_faster_rcnn_forward.3} parent=11 // pred_fallthru
        _
      // Predicated region
      $region21: #{tiny_faster_rcnn_forward.3} parent=11 // pred_check
        %p146 = pneg %p99
      $region22: #{tiny_faster_rcnn_forward.3} parent=11 // pred_check_branch
        %148 = sbr.rel (%p146) target = $region24
      $region23: #{tiny_faster_rcnn_forward.3} parent=11 // pred_region
        _
      $region24: #{tiny_faster_rcnn_forward.3} parent=11 // pred_fallthru
        _
    $region12: #{tiny_faster_rcnn_forward.3} parent=5 // pred_fallthru
      _
    %p149 = scmp.lt.s32.totalorder %s10, 2
    // Predicated region
    $region25: #{tiny_faster_rcnn_forward.3} parent=5 // pred_check
      %p150 = pneg %p149
    $region26: #{tiny_faster_rcnn_forward.3} parent=5 // pred_check_branch
      %152 = sbr.rel (%p150) target = $region28
    $region27: #{tiny_faster_rcnn_forward.3} parent=5 // pred_region
      // Predicated region
      $region29: #{tiny_faster_rcnn_forward.3} parent=27 // pred_check
        %p153 = pneg %p30
      $region30: #{tiny_faster_rcnn_forward.3} parent=27 // pred_check_branch
        %155 = sbr.rel (%p153) target = $region32
      $region31: #{tiny_faster_rcnn_forward.3} parent=27 // pred_region
        %s156 = smul.u32 256, %s10
        %p157 = scmp.lt.s32.totalorder %s156, 511
        %s158 = scalar_select %p157, %s156, 511
        %s159 = smul.addr %s158, 4
        %s160 = scalar_lea.vmem %s0, %s159
        %s161 = smul.u32 256, %s10
      $region32: #{tiny_faster_rcnn_forward.3} parent=27 // pred_fallthru
        _
    $region28: #{tiny_faster_rcnn_forward.3} parent=5 // pred_fallthru
      _
    %p162 = scmp.le.s32.totalorder 1, %s10
    %p163 = scmp.lt.s32.totalorder %s10, 3
    %p164 = pnand %p162, %p163
    %p165 = pneg %p164
    // Predicated region
    $region33: #{tiny_faster_rcnn_forward.3} parent=5 // pred_check
      _
    $region34: #{tiny_faster_rcnn_forward.3} parent=5 // pred_check_branch
      %167 = sbr.rel (%p164) target = $region36
    $region35: #{tiny_faster_rcnn_forward.3} parent=5 // pred_region
      %s168 = ssub.s32 %s10, 1
      %s169 = smul.u32 256, %s15
      %p170 = scmp.lt.s32.totalorder %s169, 511
      %s171 = scalar_select %p170, %s169, 511
      %s172 = smul.addr %s171, 4
      %s173 = scalar_lea.vmem %s0, %s172
      %p174 = pneg %p36
      %p175 = pneg %p33
      %p176 = pneg %p57
      %p177 = pneg %p54
      %p178 = pneg %p78
      %p179 = pneg %p75
      %p180 = pneg %p99
      %p181 = pneg %p96
      %p182 = pneg %p125
      %p183 = pneg %p122
      %p184 = scmp.lt.s32.totalorder %s15, 1
      %s185 = scalar_select %p184, %s15, 1
      %s186 = smul.addr %s185, 8
      %s187 = scalar_lea.vmem %s4, %s186
      %s188 = smul.u32 256, %s15
      %p189 = scmp.lt.s32.totalorder %s188, 511
      %s190 = scalar_select %p189, %s188, 511
      %s191 = smul.addr %s190, 4
      %s192 = scalar_lea.vmem %s0, %s191
      %s193 = smul.u32 256, %s15
      %p194 = scmp.lt.s32.totalorder %s15, 1
      %s195 = scalar_select %p194, %s15, 1
      %s196 = smul.addr %s195, 8
      %s197 = scalar_lea.vmem %s4, %s196
      %v199 = vld [vmem:[%s192] sm:$0xf]
      %v200 = vld [vmem:[%s192 + $0x4] sm:$0xf]
      %v201 = vld [vmem:[%s192 + $0x8] sm:$0xf]
      %v202 = vld [vmem:[%s192 + $0xc] sm:$0xf]
      %v203 = vld [vmem:[%s192 + $0x10] sm:$0xf]
      %v204 = vld [vmem:[%s192 + $0x14] sm:$0xf]
      %v205 = vld [vmem:[%s192 + $0x18] sm:$0xf]
      %v206 = vld [vmem:[%s192 + $0x1c] sm:$0xf]
      %v207 = vld [vmem:[%s192 + $0x20] sm:$0xf]
      %v208 = vld [vmem:[%s192 + $0x24] sm:$0xf]
      %v209 = vld [vmem:[%s192 + $0x28] sm:$0xf]
      %v210 = vld [vmem:[%s192 + $0x2c] sm:$0xf]
      %v211 = vld [vmem:[%s192 + $0x30] sm:$0xf]
      %v212 = vld [vmem:[%s192 + $0x34] sm:$0xf]
      %v213 = vld [vmem:[%s192 + $0x38] sm:$0xf]
      %v214 = vld [vmem:[%s192 + $0x3c] sm:$0xf]
      %v215 = vld [vmem:[%s192 + $0x40] sm:$0xf]
      %v216 = vld [vmem:[%s192 + $0x44] sm:$0xf]
      %v217 = vld [vmem:[%s192 + $0x48] sm:$0xf]
      %v218 = vld [vmem:[%s192 + $0x4c] sm:$0xf]
      %v219 = vld [vmem:[%s192 + $0x50] sm:$0xf]
      %v220 = vld [vmem:[%s192 + $0x54] sm:$0xf]
      %v221 = vld [vmem:[%s192 + $0x58] sm:$0xf]
      %v222 = vld [vmem:[%s192 + $0x5c] sm:$0xf]
      %v223 = vld [vmem:[%s192 + $0x60] sm:$0xf]
      %v224 = vld [vmem:[%s192 + $0x64] sm:$0xf]
      %v225 = vld [vmem:[%s192 + $0x68] sm:$0xf]
      %v226 = vld [vmem:[%s192 + $0x6c] sm:$0xf]
      %v227 = vld [vmem:[%s192 + $0x70] sm:$0xf]
      %v228 = vld [vmem:[%s192 + $0x74] sm:$0xf]
      %v229 = vld [vmem:[%s192 + $0x78] sm:$0xf]
      %v230 = vld [vmem:[%s192 + $0x7c] sm:$0xf]
      %v231 = vld [vmem:[%s192 + $0x80] sm:$0xf]
      %v232 = vld [vmem:[%s192 + $0x84] sm:$0xf]
      %v233 = vld [vmem:[%s192 + $0x88] sm:$0xf]
      %v234 = vld [vmem:[%s192 + $0x8c] sm:$0xf]
      %v235 = vld [vmem:[%s192 + $0x90] sm:$0xf]
      %v236 = vld [vmem:[%s192 + $0x94] sm:$0xf]
      %v237 = vld [vmem:[%s192 + $0x98] sm:$0xf]
      %v238 = vld [vmem:[%s192 + $0x9c] sm:$0xf]
      %v239 = vld [vmem:[%s192 + $0xa0] sm:$0xf]
      %v240 = vld [vmem:[%s192 + $0xa4] sm:$0xf]
      %v241 = vld [vmem:[%s192 + $0xa8] sm:$0xf]
      %v242 = vld [vmem:[%s192 + $0xac] sm:$0xf]
      %v243 = vld [vmem:[%s192 + $0xb0] sm:$0xf]
      %v244 = vld [vmem:[%s192 + $0xb4] sm:$0xf]
      %v245 = vld [vmem:[%s192 + $0xb8] sm:$0xf]
      %v246 = vld [vmem:[%s192 + $0xbc] sm:$0xf]
      %v247 = vld [vmem:[%s192 + $0xc0] sm:$0xf]
      %v248 = vld [vmem:[%s192 + $0xc4] sm:$0xf]
      %v249 = vld [vmem:[%s192 + $0xc8] sm:$0xf]
      %v250 = vld [vmem:[%s192 + $0xcc] sm:$0xf]
      %v251 = vld [vmem:[%s192 + $0xd0] sm:$0xf]
      %v252 = vld [vmem:[%s192 + $0xd4] sm:$0xf]
      %v253 = vld [vmem:[%s192 + $0xd8] sm:$0xf]
      %v254 = vld [vmem:[%s192 + $0xdc] sm:$0xf]
      %v255 = vld [vmem:[%s192 + $0xe0] sm:$0xf]
      %v256 = vld [vmem:[%s192 + $0xe4] sm:$0xf]
      %v257 = vld [vmem:[%s192 + $0xe8] sm:$0xf]
      %v258 = vld [vmem:[%s192 + $0xec] sm:$0xf]
      %v259 = vld [vmem:[%s192 + $0xf0] sm:$0xf]
      %v260 = vld [vmem:[%s192 + $0xf4] sm:$0xf]
      %v261 = vld [vmem:[%s192 + $0xf8] sm:$0xf]
      %v262 = vld [vmem:[%s192 + $0xfc] sm:$0xf]
      %v263 = vld [vmem:[%s192 + $0x100] sm:$0xf]
      %v264 = vld [vmem:[%s192 + $0x104] sm:$0xf]
      %v265 = vld [vmem:[%s192 + $0x108] sm:$0xf]
      %v266 = vld [vmem:[%s192 + $0x10c] sm:$0xf]
      %v267 = vld [vmem:[%s192 + $0x110] sm:$0xf]
      %v268 = vld [vmem:[%s192 + $0x114] sm:$0xf]
      %v269 = vld [vmem:[%s192 + $0x118] sm:$0xf]
      %v270 = vld [vmem:[%s192 + $0x11c] sm:$0xf]
      %v271 = vld [vmem:[%s192 + $0x120] sm:$0xf]
      %v272 = vld [vmem:[%s192 + $0x124] sm:$0xf]
      %v273 = vld [vmem:[%s192 + $0x128] sm:$0xf]
      %v274 = vld [vmem:[%s192 + $0x12c] sm:$0xf]
      %v275 = vld [vmem:[%s192 + $0x130] sm:$0xf]
      %v276 = vld [vmem:[%s192 + $0x134] sm:$0xf]
      %v277 = vld [vmem:[%s192 + $0x138] sm:$0xf]
      %v278 = vld [vmem:[%s192 + $0x13c] sm:$0xf]
      %v279 = vld [vmem:[%s192 + $0x140] sm:$0xf]
      %v280 = vld [vmem:[%s192 + $0x144] sm:$0xf]
      %v281 = vld [vmem:[%s192 + $0x148] sm:$0xf]
      %v282 = vld [vmem:[%s192 + $0x14c] sm:$0xf]
      %v283 = vld [vmem:[%s192 + $0x150] sm:$0xf]
      %v284 = vld [vmem:[%s192 + $0x154] sm:$0xf]
      %v285 = vld [vmem:[%s192 + $0x158] sm:$0xf]
      %v286 = vld [vmem:[%s192 + $0x15c] sm:$0xf]
      %v287 = vld [vmem:[%s192 + $0x160] sm:$0xf]
      %v288 = vld [vmem:[%s192 + $0x164] sm:$0xf]
      %v289 = vld [vmem:[%s192 + $0x168] sm:$0xf]
      %v290 = vld [vmem:[%s192 + $0x16c] sm:$0xf]
      %v291 = vld [vmem:[%s192 + $0x170] sm:$0xf]
      %v292 = vld [vmem:[%s192 + $0x174] sm:$0xf]
      %v293 = vld [vmem:[%s192 + $0x178] sm:$0xf]
      %v294 = vld [vmem:[%s192 + $0x17c] sm:$0xf]
      %v295 = vld [vmem:[%s192 + $0x180] sm:$0xf]
      %v296 = vld [vmem:[%s192 + $0x184] sm:$0xf]
      %v297 = vld [vmem:[%s192 + $0x188] sm:$0xf]
      %v298 = vld [vmem:[%s192 + $0x18c] sm:$0xf]
      %v299 = vld [vmem:[%s192 + $0x190] sm:$0xf]
      %v300 = vld [vmem:[%s192 + $0x194] sm:$0xf]
      %v301 = vld [vmem:[%s192 + $0x198] sm:$0xf]
      %v302 = vld [vmem:[%s192 + $0x19c] sm:$0xf]
      %v303 = vld [vmem:[%s192 + $0x1a0] sm:$0xf]
      %v304 = vld [vmem:[%s192 + $0x1a4] sm:$0xf]
      %v305 = vld [vmem:[%s192 + $0x1a8] sm:$0xf]
      %v306 = vld [vmem:[%s192 + $0x1ac] sm:$0xf]
      %v307 = vld [vmem:[%s192 + $0x1b0] sm:$0xf]
      %v308 = vld [vmem:[%s192 + $0x1b4] sm:$0xf]
      %v309 = vld [vmem:[%s192 + $0x1b8] sm:$0xf]
      %v310 = vld [vmem:[%s192 + $0x1bc] sm:$0xf]
      %v311 = vld [vmem:[%s192 + $0x1c0] sm:$0xf]
      %v312 = vld [vmem:[%s192 + $0x1c4] sm:$0xf]
      %v313 = vld [vmem:[%s192 + $0x1c8] sm:$0xf]
      %v314 = vld [vmem:[%s192 + $0x1cc] sm:$0xf]
      %v315 = vld [vmem:[%s192 + $0x1d0] sm:$0xf]
      %v316 = vld [vmem:[%s192 + $0x1d4] sm:$0xf]
      %v317 = vld [vmem:[%s192 + $0x1d8] sm:$0xf]
      %v318 = vld [vmem:[%s192 + $0x1dc] sm:$0xf]
      %v319 = vld [vmem:[%s192 + $0x1e0] sm:$0xf]
      %v320 = vld [vmem:[%s192 + $0x1e4] sm:$0xf]
      %v321 = vld [vmem:[%s192 + $0x1e8] sm:$0xf]
      %v322 = vld [vmem:[%s192 + $0x1ec] sm:$0xf]
      %v323 = vld [vmem:[%s192 + $0x1f0] sm:$0xf]
      %v324 = vld [vmem:[%s192 + $0x1f4] sm:$0xf]
      %v325 = vld [vmem:[%s192 + $0x1f8] sm:$0xf]
      %v326 = vld [vmem:[%s192 + $0x1fc] sm:$0xf]
      %v327 = vld [vmem:[%s192 + $0x200] sm:$0xf]
      %v328 = vld [vmem:[%s192 + $0x204] sm:$0xf]
      %v329 = vld [vmem:[%s192 + $0x208] sm:$0xf]
      %v330 = vld [vmem:[%s192 + $0x20c] sm:$0xf]
      %v331 = vld [vmem:[%s192 + $0x210] sm:$0xf]
      %v332 = vld [vmem:[%s192 + $0x214] sm:$0xf]
      %v333 = vld [vmem:[%s192 + $0x218] sm:$0xf]
      %v334 = vld [vmem:[%s192 + $0x21c] sm:$0xf]
      %v335 = vld [vmem:[%s192 + $0x220] sm:$0xf]
      %v336 = vld [vmem:[%s192 + $0x224] sm:$0xf]
      %v337 = vld [vmem:[%s192 + $0x228] sm:$0xf]
      %v338 = vld [vmem:[%s192 + $0x22c] sm:$0xf]
      %v339 = vld [vmem:[%s192 + $0x230] sm:$0xf]
      %v340 = vld [vmem:[%s192 + $0x234] sm:$0xf]
      %v341 = vld [vmem:[%s192 + $0x238] sm:$0xf]
      %v342 = vld [vmem:[%s192 + $0x23c] sm:$0xf]
      %v343 = vld [vmem:[%s192 + $0x240] sm:$0xf]
      %v344 = vld [vmem:[%s192 + $0x244] sm:$0xf]
      %v345 = vld [vmem:[%s192 + $0x248] sm:$0xf]
      %v346 = vld [vmem:[%s192 + $0x24c] sm:$0xf]
      %v347 = vld [vmem:[%s192 + $0x250] sm:$0xf]
      %v348 = vld [vmem:[%s192 + $0x254] sm:$0xf]
      %v349 = vld [vmem:[%s192 + $0x258] sm:$0xf]
      %v350 = vld [vmem:[%s192 + $0x25c] sm:$0xf]
      %v351 = vld [vmem:[%s192 + $0x260] sm:$0xf]
      %v352 = vld [vmem:[%s192 + $0x264] sm:$0xf]
      %v353 = vld [vmem:[%s192 + $0x268] sm:$0xf]
      %v354 = vld [vmem:[%s192 + $0x26c] sm:$0xf]
      %v355 = vld [vmem:[%s192 + $0x270] sm:$0xf]
      %v356 = vld [vmem:[%s192 + $0x274] sm:$0xf]
      %v357 = vld [vmem:[%s192 + $0x278] sm:$0xf]
      %v358 = vld [vmem:[%s192 + $0x27c] sm:$0xf]
      %v359 = vld [vmem:[%s192 + $0x280] sm:$0xf]
      %v360 = vld [vmem:[%s192 + $0x284] sm:$0xf]
      %v361 = vld [vmem:[%s192 + $0x288] sm:$0xf]
      %v362 = vld [vmem:[%s192 + $0x28c] sm:$0xf]
      %v363 = vld [vmem:[%s192 + $0x290] sm:$0xf]
      %v364 = vld [vmem:[%s192 + $0x294] sm:$0xf]
      %v365 = vld [vmem:[%s192 + $0x298] sm:$0xf]
      %v366 = vld [vmem:[%s192 + $0x29c] sm:$0xf]
      %v367 = vld [vmem:[%s192 + $0x2a0] sm:$0xf]
      %v368 = vld [vmem:[%s192 + $0x2a4] sm:$0xf]
      %v369 = vld [vmem:[%s192 + $0x2a8] sm:$0xf]
      %v370 = vld [vmem:[%s192 + $0x2ac] sm:$0xf]
      %v371 = vld [vmem:[%s192 + $0x2b0] sm:$0xf]
      %v372 = vld [vmem:[%s192 + $0x2b4] sm:$0xf]
      %v373 = vld [vmem:[%s192 + $0x2b8] sm:$0xf]
      %v374 = vld [vmem:[%s192 + $0x2bc] sm:$0xf]
      %v375 = vld [vmem:[%s192 + $0x2c0] sm:$0xf]
      %v376 = vld [vmem:[%s192 + $0x2c4] sm:$0xf]
      %v377 = vld [vmem:[%s192 + $0x2c8] sm:$0xf]
      %v378 = vld [vmem:[%s192 + $0x2cc] sm:$0xf]
      %v379 = vld [vmem:[%s192 + $0x2d0] sm:$0xf]
      %v380 = vld [vmem:[%s192 + $0x2d4] sm:$0xf]
      %v381 = vld [vmem:[%s192 + $0x2d8] sm:$0xf]
      %v382 = vld [vmem:[%s192 + $0x2dc] sm:$0xf]
      %v383 = vld [vmem:[%s192 + $0x2e0] sm:$0xf]
      %v384 = vld [vmem:[%s192 + $0x2e4] sm:$0xf]
      %v385 = vld [vmem:[%s192 + $0x2e8] sm:$0xf]
      %v386 = vld [vmem:[%s192 + $0x2ec] sm:$0xf]
      %v387 = vld [vmem:[%s192 + $0x2f0] sm:$0xf]
      %v388 = vld [vmem:[%s192 + $0x2f4] sm:$0xf]
      %v389 = vld [vmem:[%s192 + $0x2f8] sm:$0xf]
      %v390 = vld [vmem:[%s192 + $0x2fc] sm:$0xf]
      %v391 = vld [vmem:[%s192 + $0x300] sm:$0xf]
      %v392 = vld [vmem:[%s192 + $0x304] sm:$0xf]
      %v393 = vld [vmem:[%s192 + $0x308] sm:$0xf]
      %v394 = vld [vmem:[%s192 + $0x30c] sm:$0xf]
      %v395 = vld [vmem:[%s192 + $0x310] sm:$0xf]
      %v396 = vld [vmem:[%s192 + $0x314] sm:$0xf]
      %v397 = vld [vmem:[%s192 + $0x318] sm:$0xf]
      %v398 = vld [vmem:[%s192 + $0x31c] sm:$0xf]
      %v399 = vld [vmem:[%s192 + $0x320] sm:$0xf]
      %v400 = vld [vmem:[%s192 + $0x324] sm:$0xf]
      %v401 = vld [vmem:[%s192 + $0x328] sm:$0xf]
      %v402 = vld [vmem:[%s192 + $0x32c] sm:$0xf]
      %v403 = vld [vmem:[%s192 + $0x330] sm:$0xf]
      %v404 = vld [vmem:[%s192 + $0x334] sm:$0xf]
      %v405 = vld [vmem:[%s192 + $0x338] sm:$0xf]
      %v406 = vld [vmem:[%s192 + $0x33c] sm:$0xf]
      %v407 = vld [vmem:[%s192 + $0x340] sm:$0xf]
      %v408 = vld [vmem:[%s192 + $0x344] sm:$0xf]
      %v409 = vld [vmem:[%s192 + $0x348] sm:$0xf]
      %v410 = vld [vmem:[%s192 + $0x34c] sm:$0xf]
      %v411 = vld [vmem:[%s192 + $0x350] sm:$0xf]
      %v412 = vld [vmem:[%s192 + $0x354] sm:$0xf]
      %v413 = vld [vmem:[%s192 + $0x358] sm:$0xf]
      %v414 = vld [vmem:[%s192 + $0x35c] sm:$0xf]
      %v415 = vld [vmem:[%s192 + $0x360] sm:$0xf]
      %v416 = vld [vmem:[%s192 + $0x364] sm:$0xf]
      %v417 = vld [vmem:[%s192 + $0x368] sm:$0xf]
      %v418 = vld [vmem:[%s192 + $0x36c] sm:$0xf]
      %v419 = vld [vmem:[%s192 + $0x370] sm:$0xf]
      %v420 = vld [vmem:[%s192 + $0x374] sm:$0xf]
      %v421 = vld [vmem:[%s192 + $0x378] sm:$0xf]
      %v422 = vld [vmem:[%s192 + $0x37c] sm:$0xf]
      %v423 = vld [vmem:[%s192 + $0x380] sm:$0xf]
      %v424 = vld [vmem:[%s192 + $0x384] sm:$0xf]
      %v425 = vld [vmem:[%s192 + $0x388] sm:$0xf]
      %v426 = vld [vmem:[%s192 + $0x38c] sm:$0xf]
      %v427 = vld [vmem:[%s192 + $0x390] sm:$0xf]
      %v428 = vld [vmem:[%s192 + $0x394] sm:$0xf]
      %v429 = vld [vmem:[%s192 + $0x398] sm:$0xf]
      %v430 = vld [vmem:[%s192 + $0x39c] sm:$0xf]
      %v431 = vld [vmem:[%s192 + $0x3a0] sm:$0xf]
      %v432 = vld [vmem:[%s192 + $0x3a4] sm:$0xf]
      %v433 = vld [vmem:[%s192 + $0x3a8] sm:$0xf]
      %v434 = vld [vmem:[%s192 + $0x3ac] sm:$0xf]
      %v435 = vld [vmem:[%s192 + $0x3b0] sm:$0xf]
      %v436 = vld [vmem:[%s192 + $0x3b4] sm:$0xf]
      %v437 = vld [vmem:[%s192 + $0x3b8] sm:$0xf]
      %v438 = vld [vmem:[%s192 + $0x3bc] sm:$0xf]
      %v439 = vld [vmem:[%s192 + $0x3c0] sm:$0xf]
      %v440 = vld [vmem:[%s192 + $0x3c4] sm:$0xf]
      %v441 = vld [vmem:[%s192 + $0x3c8] sm:$0xf]
      %v442 = vld [vmem:[%s192 + $0x3cc] sm:$0xf]
      %v443 = vld [vmem:[%s192 + $0x3d0] sm:$0xf]
      %v444 = vld [vmem:[%s192 + $0x3d4] sm:$0xf]
      %v445 = vld [vmem:[%s192 + $0x3d8] sm:$0xf]
      %v446 = vld [vmem:[%s192 + $0x3dc] sm:$0xf]
      %v447 = vld [vmem:[%s192 + $0x3e0] sm:$0xf]
      %v448 = vld [vmem:[%s192 + $0x3e4] sm:$0xf]
      %v449 = vld [vmem:[%s192 + $0x3e8] sm:$0xf]
      %v450 = vld [vmem:[%s192 + $0x3ec] sm:$0xf]
      %v451 = vld [vmem:[%s192 + $0x3f0] sm:$0xf]
      %v452 = vld [vmem:[%s192 + $0x3f4] sm:$0xf]
      %v453 = vld [vmem:[%s192 + $0x3f8] sm:$0xf]
      %v454 = vld [vmem:[%s192 + $0x3fc] sm:$0xf]
      %v455 = vld [vmem:[%s1] sm:$0xf]
      %v456 = vld [vmem:[%s1 + $0x4] sm:$0xf]
      %v457 = vld [vmem:[%s1 + $0x8] sm:$0xf]
      %v458 = vld [vmem:[%s1 + $0xc] sm:$0xf]
      %v459 = vld [vmem:[%s1 + $0x10] sm:$0xf]
      %v460 = vld [vmem:[%s1 + $0x14] sm:$0xf]
      %v461 = vld [vmem:[%s2] sm:$0x1]
      %v463 = vlaneseq
      %v464 = vshrl.u32 %v463, 7
      %v465 = vsub.s32 0, %v464
      %v466 = vrot.slane %v461, %v465
      %v724 = vunpack.c.l.b16 %v199
      %v725 = vunpack.c.l.b16 %v200
      %v726 = vunpack.c.l.b16 %v201
      %v727 = vunpack.c.l.b16 %v202
      %v728 = vunpack.c.l.b16 %v203
      %v729 = vunpack.c.l.b16 %v204
      %v730 = vunpack.c.l.b16 %v205
      %v731 = vunpack.c.l.b16 %v206
      %v732 = vunpack.c.l.b16 %v207
      %v733 = vunpack.c.l.b16 %v208
      %v734 = vunpack.c.l.b16 %v209
      %v735 = vunpack.c.l.b16 %v210
      %v736 = vunpack.c.l.b16 %v211
      %v737 = vunpack.c.l.b16 %v212
      %v738 = vunpack.c.l.b16 %v213
      %v739 = vunpack.c.l.b16 %v214
      %v740 = vunpack.c.l.b16 %v215
      %v741 = vunpack.c.l.b16 %v216
      %v742 = vunpack.c.l.b16 %v217
      %v743 = vunpack.c.l.b16 %v218
      %v744 = vunpack.c.l.b16 %v219
      %v745 = vunpack.c.l.b16 %v220
      %v746 = vunpack.c.l.b16 %v221
      %v747 = vunpack.c.l.b16 %v222
      %v748 = vunpack.c.l.b16 %v223
      %v749 = vunpack.c.l.b16 %v224
      %v750 = vunpack.c.l.b16 %v225
      %v751 = vunpack.c.l.b16 %v226
      %v752 = vunpack.c.l.b16 %v227
      %v753 = vunpack.c.l.b16 %v228
      %v754 = vunpack.c.l.b16 %v229
      %v755 = vunpack.c.l.b16 %v230
      %v756 = vunpack.c.l.b16 %v231
      %v757 = vunpack.c.l.b16 %v232
      %v758 = vunpack.c.l.b16 %v233
      %v759 = vunpack.c.l.b16 %v234
      %v760 = vunpack.c.l.b16 %v235
      %v761 = vunpack.c.l.b16 %v236
      %v762 = vunpack.c.l.b16 %v237
      %v763 = vunpack.c.l.b16 %v238
      %v764 = vunpack.c.l.b16 %v239
      %v765 = vunpack.c.l.b16 %v240
      %v766 = vunpack.c.l.b16 %v241
      %v767 = vunpack.c.l.b16 %v242
      %v768 = vunpack.c.l.b16 %v243
      %v769 = vunpack.c.l.b16 %v244
      %v770 = vunpack.c.l.b16 %v245
      %v771 = vunpack.c.l.b16 %v246
      %v772 = vunpack.c.l.b16 %v247
      %v773 = vunpack.c.l.b16 %v248
      %v774 = vunpack.c.l.b16 %v249
      %v775 = vunpack.c.l.b16 %v250
      %v776 = vunpack.c.l.b16 %v251
      %v777 = vunpack.c.l.b16 %v252
      %v778 = vunpack.c.l.b16 %v253
      %v779 = vunpack.c.l.b16 %v254
      %v780 = vunpack.c.l.b16 %v255
      %v781 = vunpack.c.l.b16 %v256
      %v782 = vunpack.c.l.b16 %v257
      %v783 = vunpack.c.l.b16 %v258
      %v784 = vunpack.c.l.b16 %v259
      %v785 = vunpack.c.l.b16 %v260
      %v786 = vunpack.c.l.b16 %v261
      %v787 = vunpack.c.l.b16 %v262
      %v788 = vunpack.c.l.b16 %v263
      %v789 = vunpack.c.l.b16 %v264
      %v790 = vunpack.c.l.b16 %v265
      %v791 = vunpack.c.l.b16 %v266
      %v792 = vunpack.c.l.b16 %v267
      %v793 = vunpack.c.l.b16 %v268
      %v794 = vunpack.c.l.b16 %v269
      %v795 = vunpack.c.l.b16 %v270
      %v796 = vunpack.c.l.b16 %v271
      %v797 = vunpack.c.l.b16 %v272
      %v798 = vunpack.c.l.b16 %v273
      %v799 = vunpack.c.l.b16 %v274
      %v800 = vunpack.c.l.b16 %v275
      %v801 = vunpack.c.l.b16 %v276
      %v802 = vunpack.c.l.b16 %v277
      %v803 = vunpack.c.l.b16 %v278
      %v804 = vunpack.c.l.b16 %v279
      %v805 = vunpack.c.l.b16 %v280
      %v806 = vunpack.c.l.b16 %v281
      %v807 = vunpack.c.l.b16 %v282
      %v808 = vunpack.c.l.b16 %v283
      %v809 = vunpack.c.l.b16 %v284
      %v810 = vunpack.c.l.b16 %v285
      %v811 = vunpack.c.l.b16 %v286
      %v812 = vunpack.c.l.b16 %v287
      %v813 = vunpack.c.l.b16 %v288
      %v814 = vunpack.c.l.b16 %v289
      %v815 = vunpack.c.l.b16 %v290
      %v816 = vunpack.c.l.b16 %v291
      %v817 = vunpack.c.l.b16 %v292
      %v818 = vunpack.c.l.b16 %v293
      %v819 = vunpack.c.l.b16 %v294
      %v820 = vunpack.c.l.b16 %v295
      %v821 = vunpack.c.l.b16 %v296
      %v822 = vunpack.c.l.b16 %v297
      %v823 = vunpack.c.l.b16 %v298
      %v824 = vunpack.c.l.b16 %v299
      %v825 = vunpack.c.l.b16 %v300
      %v826 = vunpack.c.l.b16 %v301
      %v827 = vunpack.c.l.b16 %v302
      %v828 = vunpack.c.l.b16 %v303
      %v829 = vunpack.c.l.b16 %v304
      %v830 = vunpack.c.l.b16 %v305
      %v831 = vunpack.c.l.b16 %v306
      %v832 = vunpack.c.l.b16 %v307
      %v833 = vunpack.c.l.b16 %v308
      %v834 = vunpack.c.l.b16 %v309
      %v835 = vunpack.c.l.b16 %v310
      %v836 = vunpack.c.l.b16 %v311
      %v837 = vunpack.c.l.b16 %v312
      %v838 = vunpack.c.l.b16 %v313
      %v839 = vunpack.c.l.b16 %v314
      %v840 = vunpack.c.l.b16 %v315
      %v841 = vunpack.c.l.b16 %v316
      %v842 = vunpack.c.l.b16 %v317
      %v843 = vunpack.c.l.b16 %v318
      %v844 = vunpack.c.l.b16 %v319
      %v845 = vunpack.c.l.b16 %v320
      %v846 = vunpack.c.l.b16 %v321
      %v847 = vunpack.c.l.b16 %v322
      %v848 = vunpack.c.l.b16 %v323
      %v849 = vunpack.c.l.b16 %v324
      %v850 = vunpack.c.l.b16 %v325
      %v851 = vunpack.c.l.b16 %v326
      %v852 = vunpack.c.l.b16 %v327
      %v853 = vunpack.c.l.b16 %v328
      %v854 = vunpack.c.l.b16 %v329
      %v855 = vunpack.c.l.b16 %v330
      %v856 = vunpack.c.l.b16 %v331
      %v857 = vunpack.c.l.b16 %v332
      %v858 = vunpack.c.l.b16 %v333
      %v859 = vunpack.c.l.b16 %v334
      %v860 = vunpack.c.l.b16 %v335
      %v861 = vunpack.c.l.b16 %v336
      %v862 = vunpack.c.l.b16 %v337
      %v863 = vunpack.c.l.b16 %v338
      %v864 = vunpack.c.l.b16 %v339
      %v865 = vunpack.c.l.b16 %v340
      %v866 = vunpack.c.l.b16 %v341
      %v867 = vunpack.c.l.b16 %v342
      %v868 = vunpack.c.l.b16 %v343
      %v869 = vunpack.c.l.b16 %v344
      %v870 = vunpack.c.l.b16 %v345
      %v871 = vunpack.c.l.b16 %v346
      %v872 = vunpack.c.l.b16 %v347
      %v873 = vunpack.c.l.b16 %v348
      %v874 = vunpack.c.l.b16 %v349
      %v875 = vunpack.c.l.b16 %v350
      %v876 = vunpack.c.l.b16 %v351
      %v877 = vunpack.c.l.b16 %v352
      %v878 = vunpack.c.l.b16 %v353
      %v879 = vunpack.c.l.b16 %v354
      %v880 = vunpack.c.l.b16 %v355
      %v881 = vunpack.c.l.b16 %v356
      %v882 = vunpack.c.l.b16 %v357
      %v883 = vunpack.c.l.b16 %v358
      %v884 = vunpack.c.l.b16 %v359
      %v885 = vunpack.c.l.b16 %v360
      %v886 = vunpack.c.l.b16 %v361
      %v887 = vunpack.c.l.b16 %v362
      %v888 = vunpack.c.l.b16 %v363
      %v889 = vunpack.c.l.b16 %v364
      %v890 = vunpack.c.l.b16 %v365
      %v891 = vunpack.c.l.b16 %v366
      %v892 = vunpack.c.l.b16 %v367
      %v893 = vunpack.c.l.b16 %v368
      %v894 = vunpack.c.l.b16 %v369
      %v895 = vunpack.c.l.b16 %v370
      %v896 = vunpack.c.l.b16 %v371
      %v897 = vunpack.c.l.b16 %v372
      %v898 = vunpack.c.l.b16 %v373
      %v899 = vunpack.c.l.b16 %v374
      %v900 = vunpack.c.l.b16 %v375
      %v901 = vunpack.c.l.b16 %v376
      %v902 = vunpack.c.l.b16 %v377
      %v903 = vunpack.c.l.b16 %v378
      %v904 = vunpack.c.l.b16 %v379
      %v905 = vunpack.c.l.b16 %v380
      %v906 = vunpack.c.l.b16 %v381
      %v907 = vunpack.c.l.b16 %v382
      %v908 = vunpack.c.l.b16 %v383
      %v909 = vunpack.c.l.b16 %v384
      %v910 = vunpack.c.l.b16 %v385
      %v911 = vunpack.c.l.b16 %v386
      %v912 = vunpack.c.l.b16 %v387
      %v913 = vunpack.c.l.b16 %v388
      %v914 = vunpack.c.l.b16 %v389
      %v915 = vunpack.c.l.b16 %v390
      %v916 = vunpack.c.l.b16 %v391
      %v917 = vunpack.c.l.b16 %v392
      %v918 = vunpack.c.l.b16 %v393
      %v919 = vunpack.c.l.b16 %v394
      %v920 = vunpack.c.l.b16 %v395
      %v921 = vunpack.c.l.b16 %v396
      %v922 = vunpack.c.l.b16 %v397
      %v923 = vunpack.c.l.b16 %v398
      %v924 = vunpack.c.l.b16 %v399
      %v925 = vunpack.c.l.b16 %v400
      %v926 = vunpack.c.l.b16 %v401
      %v927 = vunpack.c.l.b16 %v402
      %v928 = vunpack.c.l.b16 %v403
      %v929 = vunpack.c.l.b16 %v404
      %v930 = vunpack.c.l.b16 %v405
      %v931 = vunpack.c.l.b16 %v406
      %v932 = vunpack.c.l.b16 %v407
      %v933 = vunpack.c.l.b16 %v408
      %v934 = vunpack.c.l.b16 %v409
      %v935 = vunpack.c.l.b16 %v410
      %v936 = vunpack.c.l.b16 %v411
      %v937 = vunpack.c.l.b16 %v412
      %v938 = vunpack.c.l.b16 %v413
      %v939 = vunpack.c.l.b16 %v414
      %v940 = vunpack.c.l.b16 %v415
      %v941 = vunpack.c.l.b16 %v416
      %v942 = vunpack.c.l.b16 %v417
      %v943 = vunpack.c.l.b16 %v418
      %v944 = vunpack.c.l.b16 %v419
      %v945 = vunpack.c.l.b16 %v420
      %v946 = vunpack.c.l.b16 %v421
      %v947 = vunpack.c.l.b16 %v422
      %v948 = vunpack.c.l.b16 %v423
      %v949 = vunpack.c.l.b16 %v424
      %v950 = vunpack.c.l.b16 %v425
      %v951 = vunpack.c.l.b16 %v426
      %v952 = vunpack.c.l.b16 %v427
      %v953 = vunpack.c.l.b16 %v428
      %v954 = vunpack.c.l.b16 %v429
      %v955 = vunpack.c.l.b16 %v430
      %v956 = vunpack.c.l.b16 %v431
      %v957 = vunpack.c.l.b16 %v432
      %v958 = vunpack.c.l.b16 %v433
      %v959 = vunpack.c.l.b16 %v434
      %v960 = vunpack.c.l.b16 %v435
      %v961 = vunpack.c.l.b16 %v436
      %v962 = vunpack.c.l.b16 %v437
      %v963 = vunpack.c.l.b16 %v438
      %v964 = vunpack.c.l.b16 %v439
      %v965 = vunpack.c.l.b16 %v440
      %v966 = vunpack.c.l.b16 %v441
      %v967 = vunpack.c.l.b16 %v442
      %v968 = vunpack.c.l.b16 %v443
      %v969 = vunpack.c.l.b16 %v444
      %v970 = vunpack.c.l.b16 %v445
      %v971 = vunpack.c.l.b16 %v446
      %v972 = vunpack.c.l.b16 %v447
      %v973 = vunpack.c.l.b16 %v448
      %v974 = vunpack.c.l.b16 %v449
      %v975 = vunpack.c.l.b16 %v450
      %v976 = vunpack.c.l.b16 %v451
      %v977 = vunpack.c.l.b16 %v452
      %v978 = vunpack.c.l.b16 %v453
      %v979 = vunpack.c.l.b16 %v454
      %v980 = vpack.c.b16 %v725, %v724
      %v981 = vpack.c.b16 %v727, %v726
      %v982 = vpack.c.b16 %v729, %v728
      %v983 = vpack.c.b16 %v731, %v730
      %v984 = vpack.c.b16 %v733, %v732
      %v985 = vpack.c.b16 %v735, %v734
      %v986 = vpack.c.b16 %v737, %v736
      %v987 = vpack.c.b16 %v739, %v738
      %v988 = vpack.c.b16 %v741, %v740
      %v989 = vpack.c.b16 %v743, %v742
      %v990 = vpack.c.b16 %v745, %v744
      %v991 = vpack.c.b16 %v747, %v746
      %v992 = vpack.c.b16 %v749, %v748
      %v993 = vpack.c.b16 %v751, %v750
      %v994 = vpack.c.b16 %v753, %v752
      %v995 = vpack.c.b16 %v755, %v754
      %v996 = vpack.c.b16 %v757, %v756
      %v997 = vpack.c.b16 %v759, %v758
      %v998 = vpack.c.b16 %v761, %v760
      %v999 = vpack.c.b16 %v763, %v762
      %v1000 = vpack.c.b16 %v765, %v764
      %v1001 = vpack.c.b16 %v767, %v766
      %v1002 = vpack.c.b16 %v769, %v768
      %v1003 = vpack.c.b16 %v771, %v770
      %v1004 = vpack.c.b16 %v773, %v772
      %v1005 = vpack.c.b16 %v775, %v774
      %v1006 = vpack.c.b16 %v777, %v776
      %v1007 = vpack.c.b16 %v779, %v778
      %v1008 = vpack.c.b16 %v781, %v780
      %v1009 = vpack.c.b16 %v783, %v782
      %v1010 = vpack.c.b16 %v785, %v784
      %v1011 = vpack.c.b16 %v787, %v786
      %v1012 = vpack.c.b16 %v789, %v788
      %v1013 = vpack.c.b16 %v791, %v790
      %v1014 = vpack.c.b16 %v793, %v792
      %v1015 = vpack.c.b16 %v795, %v794
      %v1016 = vpack.c.b16 %v797, %v796
      %v1017 = vpack.c.b16 %v799, %v798
      %v1018 = vpack.c.b16 %v801, %v800
      %v1019 = vpack.c.b16 %v803, %v802
      %v1020 = vpack.c.b16 %v805, %v804
      %v1021 = vpack.c.b16 %v807, %v806
      %v1022 = vpack.c.b16 %v809, %v808
      %v1023 = vpack.c.b16 %v811, %v810
      %v1024 = vpack.c.b16 %v813, %v812
      %v1025 = vpack.c.b16 %v815, %v814
      %v1026 = vpack.c.b16 %v817, %v816
      %v1027 = vpack.c.b16 %v819, %v818
      %v1028 = vpack.c.b16 %v821, %v820
      %v1029 = vpack.c.b16 %v823, %v822
      %v1030 = vpack.c.b16 %v825, %v824
      %v1031 = vpack.c.b16 %v827, %v826
      %v1032 = vpack.c.b16 %v829, %v828
      %v1033 = vpack.c.b16 %v831, %v830
      %v1034 = vpack.c.b16 %v833, %v832
      %v1035 = vpack.c.b16 %v835, %v834
      %v1036 = vpack.c.b16 %v837, %v836
      %v1037 = vpack.c.b16 %v839, %v838
      %v1038 = vpack.c.b16 %v841, %v840
      %v1039 = vpack.c.b16 %v843, %v842
      %v1040 = vpack.c.b16 %v845, %v844
      %v1041 = vpack.c.b16 %v847, %v846
      %v1042 = vpack.c.b16 %v849, %v848
      %v1043 = vpack.c.b16 %v851, %v850
      %v1044 = vpack.c.b16 %v853, %v852
      %v1045 = vpack.c.b16 %v855, %v854
      %v1046 = vpack.c.b16 %v857, %v856
      %v1047 = vpack.c.b16 %v859, %v858
      %v1048 = vpack.c.b16 %v861, %v860
      %v1049 = vpack.c.b16 %v863, %v862
      %v1050 = vpack.c.b16 %v865, %v864
      %v1051 = vpack.c.b16 %v867, %v866
      %v1052 = vpack.c.b16 %v869, %v868
      %v1053 = vpack.c.b16 %v871, %v870
      %v1054 = vpack.c.b16 %v873, %v872
      %v1055 = vpack.c.b16 %v875, %v874
      %v1056 = vpack.c.b16 %v877, %v876
      %v1057 = vpack.c.b16 %v879, %v878
      %v1058 = vpack.c.b16 %v881, %v880
      %v1059 = vpack.c.b16 %v883, %v882
      %v1060 = vpack.c.b16 %v885, %v884
      %v1061 = vpack.c.b16 %v887, %v886
      %v1062 = vpack.c.b16 %v889, %v888
      %v1063 = vpack.c.b16 %v891, %v890
      %v1064 = vpack.c.b16 %v893, %v892
      %v1065 = vpack.c.b16 %v895, %v894
      %v1066 = vpack.c.b16 %v897, %v896
      %v1067 = vpack.c.b16 %v899, %v898
      %v1068 = vpack.c.b16 %v901, %v900
      %v1069 = vpack.c.b16 %v903, %v902
      %v1070 = vpack.c.b16 %v905, %v904
      %v1071 = vpack.c.b16 %v907, %v906
      %v1072 = vpack.c.b16 %v909, %v908
      %v1073 = vpack.c.b16 %v911, %v910
      %v1074 = vpack.c.b16 %v913, %v912
      %v1075 = vpack.c.b16 %v915, %v914
      %v1076 = vpack.c.b16 %v917, %v916
      %v1077 = vpack.c.b16 %v919, %v918
      %v1078 = vpack.c.b16 %v921, %v920
      %v1079 = vpack.c.b16 %v923, %v922
      %v1080 = vpack.c.b16 %v925, %v924
      %v1081 = vpack.c.b16 %v927, %v926
      %v1082 = vpack.c.b16 %v929, %v928
      %v1083 = vpack.c.b16 %v931, %v930
      %v1084 = vpack.c.b16 %v933, %v932
      %v1085 = vpack.c.b16 %v935, %v934
      %v1086 = vpack.c.b16 %v937, %v936
      %v1087 = vpack.c.b16 %v939, %v938
      %v1088 = vpack.c.b16 %v941, %v940
      %v1089 = vpack.c.b16 %v943, %v942
      %v1090 = vpack.c.b16 %v945, %v944
      %v1091 = vpack.c.b16 %v947, %v946
      %v1092 = vpack.c.b16 %v949, %v948
      %v1093 = vpack.c.b16 %v951, %v950
      %v1094 = vpack.c.b16 %v953, %v952
      %v1095 = vpack.c.b16 %v955, %v954
      %v1096 = vpack.c.b16 %v957, %v956
      %v1097 = vpack.c.b16 %v959, %v958
      %v1098 = vpack.c.b16 %v961, %v960
      %v1099 = vpack.c.b16 %v963, %v962
      %v1100 = vpack.c.b16 %v965, %v964
      %v1101 = vpack.c.b16 %v967, %v966
      %v1102 = vpack.c.b16 %v969, %v968
      %v1103 = vpack.c.b16 %v971, %v970
      %v1104 = vpack.c.b16 %v973, %v972
      %v1105 = vpack.c.b16 %v975, %v974
      %v1106 = vpack.c.b16 %v977, %v976
      %v1107 = vpack.c.b16 %v979, %v978
      %v1114 = vunpack.c.l.b16 %v455
      %v1115 = vunpack.c.l.b16 %v456
      %v1116 = vunpack.c.l.b16 %v457
      %v1117 = vunpack.c.l.b16 %v458
      %v1118 = vunpack.c.l.b16 %v459
      %v1119 = vunpack.c.l.b16 %v460
      %v1120 = vpack.c.b16 %v1115, %v1114
      %v1121 = vpack.c.b16 %v1117, %v1116
      %v1122 = vpack.c.b16 %v1119, %v1118
      %vm1126 = vcmask 392192
      %v1128 = vsel %vm1126, %v980, 0
      %v1131 = vsel %vm1126, %v981, 0
      %v1134 = vsel %vm1126, %v982, 0
      %v1137 = vsel %vm1126, %v983, 0
      %v1140 = vsel %vm1126, %v984, 0
      %v1143 = vsel %vm1126, %v985, 0
      %v1146 = vsel %vm1126, %v986, 0
      %v1149 = vsel %vm1126, %v987, 0
      %v1152 = vsel %vm1126, %v988, 0
      %v1155 = vsel %vm1126, %v989, 0
      %v1158 = vsel %vm1126, %v990, 0
      %v1161 = vsel %vm1126, %v991, 0
      %v1164 = vsel %vm1126, %v992, 0
      %v1167 = vsel %vm1126, %v993, 0
      %v1170 = vsel %vm1126, %v994, 0
      %v1173 = vsel %vm1126, %v995, 0
      %v1176 = vsel %vm1126, %v996, 0
      %v1179 = vsel %vm1126, %v997, 0
      %v1182 = vsel %vm1126, %v998, 0
      %v1185 = vsel %vm1126, %v999, 0
      %v1188 = vsel %vm1126, %v1000, 0
      %v1191 = vsel %vm1126, %v1001, 0
      %v1194 = vsel %vm1126, %v1002, 0
      %v1197 = vsel %vm1126, %v1003, 0
      %v1200 = vsel %vm1126, %v1004, 0
      %v1203 = vsel %vm1126, %v1005, 0
      %v1206 = vsel %vm1126, %v1006, 0
      %v1209 = vsel %vm1126, %v1007, 0
      %v1212 = vsel %vm1126, %v1008, 0
      %v1215 = vsel %vm1126, %v1009, 0
      %v1218 = vsel %vm1126, %v1010, 0
      %v1221 = vsel %vm1126, %v1011, 0
      %v1224 = vsel %vm1126, %v1012, 0
      %v1227 = vsel %vm1126, %v1013, 0
      %v1230 = vsel %vm1126, %v1014, 0
      %v1233 = vsel %vm1126, %v1015, 0
      %v1236 = vsel %vm1126, %v1016, 0
      %v1239 = vsel %vm1126, %v1017, 0
      %v1242 = vsel %vm1126, %v1018, 0
      %v1245 = vsel %vm1126, %v1019, 0
      %v1248 = vsel %vm1126, %v1020, 0
      %v1251 = vsel %vm1126, %v1021, 0
      %v1254 = vsel %vm1126, %v1022, 0
      %v1257 = vsel %vm1126, %v1023, 0
      %v1260 = vsel %vm1126, %v1024, 0
      %v1263 = vsel %vm1126, %v1025, 0
      %v1266 = vsel %vm1126, %v1026, 0
      %v1269 = vsel %vm1126, %v1027, 0
      %v1272 = vsel %vm1126, %v1028, 0
      %v1275 = vsel %vm1126, %v1029, 0
      %v1278 = vsel %vm1126, %v1030, 0
      %v1281 = vsel %vm1126, %v1031, 0
      %v1284 = vsel %vm1126, %v1032, 0
      %v1287 = vsel %vm1126, %v1033, 0
      %v1290 = vsel %vm1126, %v1034, 0
      %v1293 = vsel %vm1126, %v1035, 0
      %v1296 = vsel %vm1126, %v1036, 0
      %v1299 = vsel %vm1126, %v1037, 0
      %v1302 = vsel %vm1126, %v1038, 0
      %v1305 = vsel %vm1126, %v1039, 0
      %v1308 = vsel %vm1126, %v1040, 0
      %v1311 = vsel %vm1126, %v1041, 0
      %v1314 = vsel %vm1126, %v1042, 0
      %v1317 = vsel %vm1126, %v1043, 0
      %v1320 = vsel %vm1126, %v1044, 0
      %v1323 = vsel %vm1126, %v1045, 0
      %v1326 = vsel %vm1126, %v1046, 0
      %v1329 = vsel %vm1126, %v1047, 0
      %v1332 = vsel %vm1126, %v1048, 0
      %v1335 = vsel %vm1126, %v1049, 0
      %v1338 = vsel %vm1126, %v1050, 0
      %v1341 = vsel %vm1126, %v1051, 0
      %v1344 = vsel %vm1126, %v1052, 0
      %v1347 = vsel %vm1126, %v1053, 0
      %v1350 = vsel %vm1126, %v1054, 0
      %v1353 = vsel %vm1126, %v1055, 0
      %v1356 = vsel %vm1126, %v1056, 0
      %v1359 = vsel %vm1126, %v1057, 0
      %v1362 = vsel %vm1126, %v1058, 0
      %v1365 = vsel %vm1126, %v1059, 0
      %v1368 = vsel %vm1126, %v1060, 0
      %v1371 = vsel %vm1126, %v1061, 0
      %v1374 = vsel %vm1126, %v1062, 0
      %v1377 = vsel %vm1126, %v1063, 0
      %v1380 = vsel %vm1126, %v1064, 0
      %v1383 = vsel %vm1126, %v1065, 0
      %v1386 = vsel %vm1126, %v1066, 0
      %v1389 = vsel %vm1126, %v1067, 0
      %v1392 = vsel %vm1126, %v1068, 0
      %v1395 = vsel %vm1126, %v1069, 0
      %v1398 = vsel %vm1126, %v1070, 0
      %v1401 = vsel %vm1126, %v1071, 0
      %v1404 = vsel %vm1126, %v1072, 0
      %v1407 = vsel %vm1126, %v1073, 0
      %v1410 = vsel %vm1126, %v1074, 0
      %v1413 = vsel %vm1126, %v1075, 0
      %v1416 = vsel %vm1126, %v1076, 0
      %v1419 = vsel %vm1126, %v1077, 0
      %v1422 = vsel %vm1126, %v1078, 0
      %v1425 = vsel %vm1126, %v1079, 0
      %v1428 = vsel %vm1126, %v1080, 0
      %v1431 = vsel %vm1126, %v1081, 0
      %v1434 = vsel %vm1126, %v1082, 0
      %v1437 = vsel %vm1126, %v1083, 0
      %v1440 = vsel %vm1126, %v1084, 0
      %v1443 = vsel %vm1126, %v1085, 0
      %v1446 = vsel %vm1126, %v1086, 0
      %v1449 = vsel %vm1126, %v1087, 0
      %v1452 = vsel %vm1126, %v1088, 0
      %v1455 = vsel %vm1126, %v1089, 0
      %v1458 = vsel %vm1126, %v1090, 0
      %v1461 = vsel %vm1126, %v1091, 0
      %v1464 = vsel %vm1126, %v1092, 0
      %v1467 = vsel %vm1126, %v1093, 0
      %v1470 = vsel %vm1126, %v1094, 0
      %v1473 = vsel %vm1126, %v1095, 0
      %v1476 = vsel %vm1126, %v1096, 0
      %v1479 = vsel %vm1126, %v1097, 0
      %v1482 = vsel %vm1126, %v1098, 0
      %v1485 = vsel %vm1126, %v1099, 0
      %v1488 = vsel %vm1126, %v1100, 0
      %v1491 = vsel %vm1126, %v1101, 0
      %v1494 = vsel %vm1126, %v1102, 0
      %v1497 = vsel %vm1126, %v1103, 0
      %v1500 = vsel %vm1126, %v1104, 0
      %v1503 = vsel %vm1126, %v1105, 0
      %v1506 = vsel %vm1126, %v1106, 0
      %v1509 = vsel %vm1126, %v1107, 0
      %1511 = vmatprep.subr.bf16.mxu0 0
      %1512 = vmatpush1.bf16.msra.mxu0 0
      %1513 = vmatprep.subr.bf16.mxu0 0
      %1514 = vmatpush1.bf16.msra.mxu0 0
      %1515 = vmatprep.subr.bf16.mxu0 0
      %1516 = vmatpush1.bf16.msra.mxu0 0
      %1517 = vmatprep.subr.bf16.mxu0 0
      %1518 = vmatpush1.bf16.msra.mxu0 0
      %1519 = vmatprep.subr.bf16.mxu0 0
      %1520 = vmatpush1.bf16.msra.mxu0 0
      %1521 = vmatprep.subr.bf16.mxu0 0
      %1522 = vmatpush1.bf16.msra.mxu0 %v1122
      %1523 = vmatprep.subr.bf16.mxu0 0
      %1524 = vmatpush1.bf16.msra.mxu0 %v1121
      %1525 = vmatprep.subr.bf16.mxu0 0
      %1526 = vmatpush1.bf16.msra.mxu0 %v1120
      %1527 = vmatprep.subr.bf16.mxu0 0
      %1528 = vmatpush2.bf16.msra.mxu0 0
      %1529 = vmatprep.subr.bf16.mxu0 0
      %1530 = vmatpush2.bf16.msra.mxu0 0
      %1531 = vmatprep.subr.bf16.mxu0 0
      %1532 = vmatpush2.bf16.msra.mxu0 0
      %1533 = vmatprep.subr.bf16.mxu0 0
      %1534 = vmatpush2.bf16.msra.mxu0 0
      %1535 = vmatprep.subr.bf16.mxu0 0
      %1536 = vmatpush2.bf16.msra.mxu0 0
      %1537 = vmatprep.subr.bf16.mxu0 0
      %1538 = vmatpush2.bf16.msra.mxu0 0
      %1539 = vmatprep.subr.bf16.mxu0 0
      %1540 = vmatpush2.bf16.msra.mxu0 0
      %1541 = vmatprep.subr.bf16.mxu0 0
      %1542 = vmatpush2.bf16.msra.mxu0 0
      %1543 = vmatprep.mubr.bf16.mxu0 0
      %1544 = vmatmul.mubr.bf16.gmra.mxu0 %v1128
      %v1545 = vpop.f32.mrf.mxu0
      %v1546 = vadd.f32 %v466, %v1545
      %v1547 = vpop.f32.mrf.mxu0
      %v1548 = vpop.f32.mrf.mxu0
      %v1549 = vadd.f32 %v466, %v1548
      %v1550 = vpop.f32.mrf.mxu0
      %1551 = vmatprep.mubr.bf16.mxu0 0
      %1552 = vmatmul.mubr.bf16.gmra.mxu0 %v1131
      %v1553 = vpop.f32.mrf.mxu0
      %v1554 = vadd.f32 %v466, %v1553
      %v1555 = vpop.f32.mrf.mxu0
      %v1556 = vpop.f32.mrf.mxu0
      %v1557 = vadd.f32 %v466, %v1556
      %v1558 = vpop.f32.mrf.mxu0
      %1559 = vmatprep.mubr.bf16.mxu0 0
      %1560 = vmatmul.mubr.bf16.gmra.mxu0 %v1134
      %v1561 = vpop.f32.mrf.mxu0
      %v1562 = vadd.f32 %v466, %v1561
      %v1563 = vpop.f32.mrf.mxu0
      %v1564 = vpop.f32.mrf.mxu0
      %v1565 = vadd.f32 %v466, %v1564
      %v1566 = vpop.f32.mrf.mxu0
      %1567 = vmatprep.mubr.bf16.mxu0 0
      %1568 = vmatmul.mubr.bf16.gmra.mxu0 %v1137
      %v1569 = vpop.f32.mrf.mxu0
      %v1570 = vadd.f32 %v466, %v1569
      %v1571 = vpop.f32.mrf.mxu0
      %v1572 = vpop.f32.mrf.mxu0
      %v1573 = vadd.f32 %v466, %v1572
      %v1574 = vpop.f32.mrf.mxu0
      %1575 = vmatprep.mubr.bf16.mxu0 0
      %1576 = vmatmul.mubr.bf16.gmra.mxu0 %v1140
      %v1577 = vpop.f32.mrf.mxu0
      %v1578 = vadd.f32 %v466, %v1577
      %v1579 = vpop.f32.mrf.mxu0
      %v1580 = vpop.f32.mrf.mxu0
      %v1581 = vadd.f32 %v466, %v1580
      %v1582 = vpop.f32.mrf.mxu0
      %1583 = vmatprep.mubr.bf16.mxu0 0
      %1584 = vmatmul.mubr.bf16.gmra.mxu0 %v1143
      %v1585 = vpop.f32.mrf.mxu0
      %v1586 = vadd.f32 %v466, %v1585
      %v1587 = vpop.f32.mrf.mxu0
      %v1588 = vpop.f32.mrf.mxu0
      %v1589 = vadd.f32 %v466, %v1588
      %v1590 = vpop.f32.mrf.mxu0
      %1591 = vmatprep.mubr.bf16.mxu0 0
      %1592 = vmatmul.mubr.bf16.gmra.mxu0 %v1146
      %v1593 = vpop.f32.mrf.mxu0
      %v1594 = vadd.f32 %v466, %v1593
      %v1595 = vpop.f32.mrf.mxu0
      %v1596 = vpop.f32.mrf.mxu0
      %v1597 = vadd.f32 %v466, %v1596
      %v1598 = vpop.f32.mrf.mxu0
      %1599 = vmatprep.mubr.bf16.mxu0 0
      %1600 = vmatmul.mubr.bf16.gmra.mxu0 %v1149
      %v1601 = vpop.f32.mrf.mxu0
      %v1602 = vadd.f32 %v466, %v1601
      %v1603 = vpop.f32.mrf.mxu0
      %v1604 = vpop.f32.mrf.mxu0
      %v1605 = vadd.f32 %v466, %v1604
      %v1606 = vpop.f32.mrf.mxu0
      %1607 = vmatprep.mubr.bf16.mxu0 0
      %1608 = vmatmul.mubr.bf16.gmra.mxu0 %v1152
      %v1609 = vpop.f32.mrf.mxu0
      %v1610 = vadd.f32 %v466, %v1609
      %v1611 = vpop.f32.mrf.mxu0
      %v1612 = vpop.f32.mrf.mxu0
      %v1613 = vadd.f32 %v466, %v1612
      %v1614 = vpop.f32.mrf.mxu0
      %1615 = vmatprep.mubr.bf16.mxu0 0
      %1616 = vmatmul.mubr.bf16.gmra.mxu0 %v1155
      %v1617 = vpop.f32.mrf.mxu0
      %v1618 = vadd.f32 %v466, %v1617
      %v1619 = vpop.f32.mrf.mxu0
      %v1620 = vpop.f32.mrf.mxu0
      %v1621 = vadd.f32 %v466, %v1620
      %v1622 = vpop.f32.mrf.mxu0
      %1623 = vmatprep.mubr.bf16.mxu0 0
      %1624 = vmatmul.mubr.bf16.gmra.mxu0 %v1158
      %v1625 = vpop.f32.mrf.mxu0
      %v1626 = vadd.f32 %v466, %v1625
      %v1627 = vpop.f32.mrf.mxu0
      %v1628 = vpop.f32.mrf.mxu0
      %v1629 = vadd.f32 %v466, %v1628
      %v1630 = vpop.f32.mrf.mxu0
      %1631 = vmatprep.mubr.bf16.mxu0 0
      %1632 = vmatmul.mubr.bf16.gmra.mxu0 %v1161
      %v1633 = vpop.f32.mrf.mxu0
      %v1634 = vadd.f32 %v466, %v1633
      %v1635 = vpop.f32.mrf.mxu0
      %v1636 = vpop.f32.mrf.mxu0
      %v1637 = vadd.f32 %v466, %v1636
      %v1638 = vpop.f32.mrf.mxu0
      %1639 = vmatprep.mubr.bf16.mxu0 0
      %1640 = vmatmul.mubr.bf16.gmra.mxu0 %v1164
      %v1641 = vpop.f32.mrf.mxu0
      %v1642 = vadd.f32 %v466, %v1641
      %v1643 = vpop.f32.mrf.mxu0
      %v1644 = vpop.f32.mrf.mxu0
      %v1645 = vadd.f32 %v466, %v1644
      %v1646 = vpop.f32.mrf.mxu0
      %1647 = vmatprep.mubr.bf16.mxu0 0
      %1648 = vmatmul.mubr.bf16.gmra.mxu0 %v1167
      %v1649 = vpop.f32.mrf.mxu0
      %v1650 = vadd.f32 %v466, %v1649
      %v1651 = vpop.f32.mrf.mxu0
      %v1652 = vpop.f32.mrf.mxu0
      %v1653 = vadd.f32 %v466, %v1652
      %v1654 = vpop.f32.mrf.mxu0
      %1655 = vmatprep.mubr.bf16.mxu0 0
      %1656 = vmatmul.mubr.bf16.gmra.mxu0 %v1170
      %v1657 = vpop.f32.mrf.mxu0
      %v1658 = vadd.f32 %v466, %v1657
      %v1659 = vpop.f32.mrf.mxu0
      %v1660 = vpop.f32.mrf.mxu0
      %v1661 = vadd.f32 %v466, %v1660
      %v1662 = vpop.f32.mrf.mxu0
      %1663 = vmatprep.mubr.bf16.mxu0 0
      %1664 = vmatmul.mubr.bf16.gmra.mxu0 %v1173
      %v1665 = vpop.f32.mrf.mxu0
      %v1666 = vadd.f32 %v466, %v1665
      %v1667 = vpop.f32.mrf.mxu0
      %v1668 = vpop.f32.mrf.mxu0
      %v1669 = vadd.f32 %v466, %v1668
      %v1670 = vpop.f32.mrf.mxu0
      %1671 = vmatprep.mubr.bf16.mxu0 0
      %1672 = vmatmul.mubr.bf16.gmra.mxu0 %v1176
      %v1673 = vpop.f32.mrf.mxu0
      %v1674 = vadd.f32 %v466, %v1673
      %v1675 = vpop.f32.mrf.mxu0
      %v1676 = vpop.f32.mrf.mxu0
      %v1677 = vadd.f32 %v466, %v1676
      %v1678 = vpop.f32.mrf.mxu0
      %1679 = vmatprep.mubr.bf16.mxu0 0
      %1680 = vmatmul.mubr.bf16.gmra.mxu0 %v1179
      %v1681 = vpop.f32.mrf.mxu0
      %v1682 = vadd.f32 %v466, %v1681
      %v1683 = vpop.f32.mrf.mxu0
      %v1684 = vpop.f32.mrf.mxu0
      %v1685 = vadd.f32 %v466, %v1684
      %v1686 = vpop.f32.mrf.mxu0
      %1687 = vmatprep.mubr.bf16.mxu0 0
      %1688 = vmatmul.mubr.bf16.gmra.mxu0 %v1182
      %v1689 = vpop.f32.mrf.mxu0
      %v1690 = vadd.f32 %v466, %v1689
      %v1691 = vpop.f32.mrf.mxu0
      %v1692 = vpop.f32.mrf.mxu0
      %v1693 = vadd.f32 %v466, %v1692
      %v1694 = vpop.f32.mrf.mxu0
      %1695 = vmatprep.mubr.bf16.mxu0 0
      %1696 = vmatmul.mubr.bf16.gmra.mxu0 %v1185
      %v1697 = vpop.f32.mrf.mxu0
      %v1698 = vadd.f32 %v466, %v1697
      %v1699 = vpop.f32.mrf.mxu0
      %v1700 = vpop.f32.mrf.mxu0
      %v1701 = vadd.f32 %v466, %v1700
      %v1702 = vpop.f32.mrf.mxu0
      %1703 = vmatprep.mubr.bf16.mxu0 0
      %1704 = vmatmul.mubr.bf16.gmra.mxu0 %v1188
      %v1705 = vpop.f32.mrf.mxu0
      %v1706 = vadd.f32 %v466, %v1705
      %v1707 = vpop.f32.mrf.mxu0
      %v1708 = vpop.f32.mrf.mxu0
      %v1709 = vadd.f32 %v466, %v1708
      %v1710 = vpop.f32.mrf.mxu0
      %1711 = vmatprep.mubr.bf16.mxu0 0
      %1712 = vmatmul.mubr.bf16.gmra.mxu0 %v1191
      %v1713 = vpop.f32.mrf.mxu0
      %v1714 = vadd.f32 %v466, %v1713
      %v1715 = vpop.f32.mrf.mxu0
      %v1716 = vpop.f32.mrf.mxu0
      %v1717 = vadd.f32 %v466, %v1716
      %v1718 = vpop.f32.mrf.mxu0
      %1719 = vmatprep.mubr.bf16.mxu0 0
      %1720 = vmatmul.mubr.bf16.gmra.mxu0 %v1194
      %v1721 = vpop.f32.mrf.mxu0
      %v1722 = vadd.f32 %v466, %v1721
      %v1723 = vpop.f32.mrf.mxu0
      %v1724 = vpop.f32.mrf.mxu0
      %v1725 = vadd.f32 %v466, %v1724
      %v1726 = vpop.f32.mrf.mxu0
      %1727 = vmatprep.mubr.bf16.mxu0 0
      %1728 = vmatmul.mubr.bf16.gmra.mxu0 %v1197
      %v1729 = vpop.f32.mrf.mxu0
      %v1730 = vadd.f32 %v466, %v1729
      %v1731 = vpop.f32.mrf.mxu0
      %v1732 = vpop.f32.mrf.mxu0
      %v1733 = vadd.f32 %v466, %v1732
      %v1734 = vpop.f32.mrf.mxu0
      %1735 = vmatprep.mubr.bf16.mxu0 0
      %1736 = vmatmul.mubr.bf16.gmra.mxu0 %v1200
      %v1737 = vpop.f32.mrf.mxu0
      %v1738 = vadd.f32 %v466, %v1737
      %v1739 = vpop.f32.mrf.mxu0
      %v1740 = vpop.f32.mrf.mxu0
      %v1741 = vadd.f32 %v466, %v1740
      %v1742 = vpop.f32.mrf.mxu0
      %1743 = vmatprep.mubr.bf16.mxu0 0
      %1744 = vmatmul.mubr.bf16.gmra.mxu0 %v1203
      %v1745 = vpop.f32.mrf.mxu0
      %v1746 = vadd.f32 %v466, %v1745
      %v1747 = vpop.f32.mrf.mxu0
      %v1748 = vpop.f32.mrf.mxu0
      %v1749 = vadd.f32 %v466, %v1748
      %v1750 = vpop.f32.mrf.mxu0
      %1751 = vmatprep.mubr.bf16.mxu0 0
      %1752 = vmatmul.mubr.bf16.gmra.mxu0 %v1206
      %v1753 = vpop.f32.mrf.mxu0
      %v1754 = vadd.f32 %v466, %v1753
      %v1755 = vpop.f32.mrf.mxu0
      %v1756 = vpop.f32.mrf.mxu0
      %v1757 = vadd.f32 %v466, %v1756
      %v1758 = vpop.f32.mrf.mxu0
      %1759 = vmatprep.mubr.bf16.mxu0 0
      %1760 = vmatmul.mubr.bf16.gmra.mxu0 %v1209
      %v1761 = vpop.f32.mrf.mxu0
      %v1762 = vadd.f32 %v466, %v1761
      %v1763 = vpop.f32.mrf.mxu0
      %v1764 = vpop.f32.mrf.mxu0
      %v1765 = vadd.f32 %v466, %v1764
      %v1766 = vpop.f32.mrf.mxu0
      %1767 = vmatprep.mubr.bf16.mxu0 0
      %1768 = vmatmul.mubr.bf16.gmra.mxu0 %v1212
      %v1769 = vpop.f32.mrf.mxu0
      %v1770 = vadd.f32 %v466, %v1769
      %v1771 = vpop.f32.mrf.mxu0
      %v1772 = vpop.f32.mrf.mxu0
      %v1773 = vadd.f32 %v466, %v1772
      %v1774 = vpop.f32.mrf.mxu0
      %1775 = vmatprep.mubr.bf16.mxu0 0
      %1776 = vmatmul.mubr.bf16.gmra.mxu0 %v1215
      %v1777 = vpop.f32.mrf.mxu0
      %v1778 = vadd.f32 %v466, %v1777
      %v1779 = vpop.f32.mrf.mxu0
      %v1780 = vpop.f32.mrf.mxu0
      %v1781 = vadd.f32 %v466, %v1780
      %v1782 = vpop.f32.mrf.mxu0
      %1783 = vmatprep.mubr.bf16.mxu0 0
      %1784 = vmatmul.mubr.bf16.gmra.mxu0 %v1218
      %v1785 = vpop.f32.mrf.mxu0
      %v1786 = vadd.f32 %v466, %v1785
      %v1787 = vpop.f32.mrf.mxu0
      %v1788 = vpop.f32.mrf.mxu0
      %v1789 = vadd.f32 %v466, %v1788
      %v1790 = vpop.f32.mrf.mxu0
      %1791 = vmatprep.mubr.bf16.mxu0 0
      %1792 = vmatmul.mubr.bf16.gmra.mxu0 %v1221
      %v1793 = vpop.f32.mrf.mxu0
      %v1794 = vadd.f32 %v466, %v1793
      %v1795 = vpop.f32.mrf.mxu0
      %v1796 = vpop.f32.mrf.mxu0
      %v1797 = vadd.f32 %v466, %v1796
      %v1798 = vpop.f32.mrf.mxu0
      %1799 = vmatprep.mubr.bf16.mxu0 0
      %1800 = vmatmul.mubr.bf16.gmra.mxu0 %v1224
      %v1801 = vpop.f32.mrf.mxu0
      %v1802 = vadd.f32 %v466, %v1801
      %v1803 = vpop.f32.mrf.mxu0
      %v1804 = vpop.f32.mrf.mxu0
      %v1805 = vadd.f32 %v466, %v1804
      %v1806 = vpop.f32.mrf.mxu0
      %1807 = vmatprep.mubr.bf16.mxu0 0
      %1808 = vmatmul.mubr.bf16.gmra.mxu0 %v1227
      %v1809 = vpop.f32.mrf.mxu0
      %v1810 = vadd.f32 %v466, %v1809
      %v1811 = vpop.f32.mrf.mxu0
      %v1812 = vpop.f32.mrf.mxu0
      %v1813 = vadd.f32 %v466, %v1812
      %v1814 = vpop.f32.mrf.mxu0
      %1815 = vmatprep.mubr.bf16.mxu0 0
      %1816 = vmatmul.mubr.bf16.gmra.mxu0 %v1230
      %v1817 = vpop.f32.mrf.mxu0
      %v1818 = vadd.f32 %v466, %v1817
      %v1819 = vpop.f32.mrf.mxu0
      %v1820 = vpop.f32.mrf.mxu0
      %v1821 = vadd.f32 %v466, %v1820
      %v1822 = vpop.f32.mrf.mxu0
      %1823 = vmatprep.mubr.bf16.mxu0 0
      %1824 = vmatmul.mubr.bf16.gmra.mxu0 %v1233
      %v1825 = vpop.f32.mrf.mxu0
      %v1826 = vadd.f32 %v466, %v1825
      %v1827 = vpop.f32.mrf.mxu0
      %v1828 = vpop.f32.mrf.mxu0
      %v1829 = vadd.f32 %v466, %v1828
      %v1830 = vpop.f32.mrf.mxu0
      %1831 = vmatprep.mubr.bf16.mxu0 0
      %1832 = vmatmul.mubr.bf16.gmra.mxu0 %v1236
      %v1833 = vpop.f32.mrf.mxu0
      %v1834 = vadd.f32 %v466, %v1833
      %v1835 = vpop.f32.mrf.mxu0
      %v1836 = vpop.f32.mrf.mxu0
      %v1837 = vadd.f32 %v466, %v1836
      %v1838 = vpop.f32.mrf.mxu0
      %1839 = vmatprep.mubr.bf16.mxu0 0
      %1840 = vmatmul.mubr.bf16.gmra.mxu0 %v1239
      %v1841 = vpop.f32.mrf.mxu0
      %v1842 = vadd.f32 %v466, %v1841
      %v1843 = vpop.f32.mrf.mxu0
      %v1844 = vpop.f32.mrf.mxu0
      %v1845 = vadd.f32 %v466, %v1844
      %v1846 = vpop.f32.mrf.mxu0
      %1847 = vmatprep.mubr.bf16.mxu0 0
      %1848 = vmatmul.mubr.bf16.gmra.mxu0 %v1242
      %v1849 = vpop.f32.mrf.mxu0
      %v1850 = vadd.f32 %v466, %v1849
      %v1851 = vpop.f32.mrf.mxu0
      %v1852 = vpop.f32.mrf.mxu0
      %v1853 = vadd.f32 %v466, %v1852
      %v1854 = vpop.f32.mrf.mxu0
      %1855 = vmatprep.mubr.bf16.mxu0 0
      %1856 = vmatmul.mubr.bf16.gmra.mxu0 %v1245
      %v1857 = vpop.f32.mrf.mxu0
      %v1858 = vadd.f32 %v466, %v1857
      %v1859 = vpop.f32.mrf.mxu0
      %v1860 = vpop.f32.mrf.mxu0
      %v1861 = vadd.f32 %v466, %v1860
      %v1862 = vpop.f32.mrf.mxu0
      %1863 = vmatprep.mubr.bf16.mxu0 0
      %1864 = vmatmul.mubr.bf16.gmra.mxu0 %v1248
      %v1865 = vpop.f32.mrf.mxu0
      %v1866 = vadd.f32 %v466, %v1865
      %v1867 = vpop.f32.mrf.mxu0
      %v1868 = vpop.f32.mrf.mxu0
      %v1869 = vadd.f32 %v466, %v1868
      %v1870 = vpop.f32.mrf.mxu0
      %1871 = vmatprep.mubr.bf16.mxu0 0
      %1872 = vmatmul.mubr.bf16.gmra.mxu0 %v1251
      %v1873 = vpop.f32.mrf.mxu0
      %v1874 = vadd.f32 %v466, %v1873
      %v1875 = vpop.f32.mrf.mxu0
      %v1876 = vpop.f32.mrf.mxu0
      %v1877 = vadd.f32 %v466, %v1876
      %v1878 = vpop.f32.mrf.mxu0
      %1879 = vmatprep.mubr.bf16.mxu0 0
      %1880 = vmatmul.mubr.bf16.gmra.mxu0 %v1254
      %v1881 = vpop.f32.mrf.mxu0
      %v1882 = vadd.f32 %v466, %v1881
      %v1883 = vpop.f32.mrf.mxu0
      %v1884 = vpop.f32.mrf.mxu0
      %v1885 = vadd.f32 %v466, %v1884
      %v1886 = vpop.f32.mrf.mxu0
      %1887 = vmatprep.mubr.bf16.mxu0 0
      %1888 = vmatmul.mubr.bf16.gmra.mxu0 %v1257
      %v1889 = vpop.f32.mrf.mxu0
      %v1890 = vadd.f32 %v466, %v1889
      %v1891 = vpop.f32.mrf.mxu0
      %v1892 = vpop.f32.mrf.mxu0
      %v1893 = vadd.f32 %v466, %v1892
      %v1894 = vpop.f32.mrf.mxu0
      %1895 = vmatprep.mubr.bf16.mxu0 0
      %1896 = vmatmul.mubr.bf16.gmra.mxu0 %v1260
      %v1897 = vpop.f32.mrf.mxu0
      %v1898 = vadd.f32 %v466, %v1897
      %v1899 = vpop.f32.mrf.mxu0
      %v1900 = vpop.f32.mrf.mxu0
      %v1901 = vadd.f32 %v466, %v1900
      %v1902 = vpop.f32.mrf.mxu0
      %1903 = vmatprep.mubr.bf16.mxu0 0
      %1904 = vmatmul.mubr.bf16.gmra.mxu0 %v1263
      %v1905 = vpop.f32.mrf.mxu0
      %v1906 = vadd.f32 %v466, %v1905
      %v1907 = vpop.f32.mrf.mxu0
      %v1908 = vpop.f32.mrf.mxu0
      %v1909 = vadd.f32 %v466, %v1908
      %v1910 = vpop.f32.mrf.mxu0
      %1911 = vmatprep.mubr.bf16.mxu0 0
      %1912 = vmatmul.mubr.bf16.gmra.mxu0 %v1266
      %v1913 = vpop.f32.mrf.mxu0
      %v1914 = vadd.f32 %v466, %v1913
      %v1915 = vpop.f32.mrf.mxu0
      %v1916 = vpop.f32.mrf.mxu0
      %v1917 = vadd.f32 %v466, %v1916
      %v1918 = vpop.f32.mrf.mxu0
      %1919 = vmatprep.mubr.bf16.mxu0 0
      %1920 = vmatmul.mubr.bf16.gmra.mxu0 %v1269
      %v1921 = vpop.f32.mrf.mxu0
      %v1922 = vadd.f32 %v466, %v1921
      %v1923 = vpop.f32.mrf.mxu0
      %v1924 = vpop.f32.mrf.mxu0
      %v1925 = vadd.f32 %v466, %v1924
      %v1926 = vpop.f32.mrf.mxu0
      %1927 = vmatprep.mubr.bf16.mxu0 0
      %1928 = vmatmul.mubr.bf16.gmra.mxu0 %v1272
      %v1929 = vpop.f32.mrf.mxu0
      %v1930 = vadd.f32 %v466, %v1929
      %v1931 = vpop.f32.mrf.mxu0
      %v1932 = vpop.f32.mrf.mxu0
      %v1933 = vadd.f32 %v466, %v1932
      %v1934 = vpop.f32.mrf.mxu0
      %1935 = vmatprep.mubr.bf16.mxu0 0
      %1936 = vmatmul.mubr.bf16.gmra.mxu0 %v1275
      %v1937 = vpop.f32.mrf.mxu0
      %v1938 = vadd.f32 %v466, %v1937
      %v1939 = vpop.f32.mrf.mxu0
      %v1940 = vpop.f32.mrf.mxu0
      %v1941 = vadd.f32 %v466, %v1940
      %v1942 = vpop.f32.mrf.mxu0
      %1943 = vmatprep.mubr.bf16.mxu0 0
      %1944 = vmatmul.mubr.bf16.gmra.mxu0 %v1278
      %v1945 = vpop.f32.mrf.mxu0
      %v1946 = vadd.f32 %v466, %v1945
      %v1947 = vpop.f32.mrf.mxu0
      %v1948 = vpop.f32.mrf.mxu0
      %v1949 = vadd.f32 %v466, %v1948
      %v1950 = vpop.f32.mrf.mxu0
      %1951 = vmatprep.mubr.bf16.mxu0 0
      %1952 = vmatmul.mubr.bf16.gmra.mxu0 %v1281
      %v1953 = vpop.f32.mrf.mxu0
      %v1954 = vadd.f32 %v466, %v1953
      %v1955 = vpop.f32.mrf.mxu0
      %v1956 = vpop.f32.mrf.mxu0
      %v1957 = vadd.f32 %v466, %v1956
      %v1958 = vpop.f32.mrf.mxu0
      %1959 = vmatprep.mubr.bf16.mxu0 0
      %1960 = vmatmul.mubr.bf16.gmra.mxu0 %v1284
      %v1961 = vpop.f32.mrf.mxu0
      %v1962 = vadd.f32 %v466, %v1961
      %v1963 = vpop.f32.mrf.mxu0
      %v1964 = vpop.f32.mrf.mxu0
      %v1965 = vadd.f32 %v466, %v1964
      %v1966 = vpop.f32.mrf.mxu0
      %1967 = vmatprep.mubr.bf16.mxu0 0
      %1968 = vmatmul.mubr.bf16.gmra.mxu0 %v1287
      %v1969 = vpop.f32.mrf.mxu0
      %v1970 = vadd.f32 %v466, %v1969
      %v1971 = vpop.f32.mrf.mxu0
      %v1972 = vpop.f32.mrf.mxu0
      %v1973 = vadd.f32 %v466, %v1972
      %v1974 = vpop.f32.mrf.mxu0
      %1975 = vmatprep.mubr.bf16.mxu0 0
      %1976 = vmatmul.mubr.bf16.gmra.mxu0 %v1290
      %v1977 = vpop.f32.mrf.mxu0
      %v1978 = vadd.f32 %v466, %v1977
      %v1979 = vpop.f32.mrf.mxu0
      %v1980 = vpop.f32.mrf.mxu0
      %v1981 = vadd.f32 %v466, %v1980
      %v1982 = vpop.f32.mrf.mxu0
      %1983 = vmatprep.mubr.bf16.mxu0 0
      %1984 = vmatmul.mubr.bf16.gmra.mxu0 %v1293
      %v1985 = vpop.f32.mrf.mxu0
      %v1986 = vadd.f32 %v466, %v1985
      %v1987 = vpop.f32.mrf.mxu0
      %v1988 = vpop.f32.mrf.mxu0
      %v1989 = vadd.f32 %v466, %v1988
      %v1990 = vpop.f32.mrf.mxu0
      %1991 = vmatprep.mubr.bf16.mxu0 0
      %1992 = vmatmul.mubr.bf16.gmra.mxu0 %v1296
      %v1993 = vpop.f32.mrf.mxu0
      %v1994 = vadd.f32 %v466, %v1993
      %v1995 = vpop.f32.mrf.mxu0
      %v1996 = vpop.f32.mrf.mxu0
      %v1997 = vadd.f32 %v466, %v1996
      %v1998 = vpop.f32.mrf.mxu0
      %1999 = vmatprep.mubr.bf16.mxu0 0
      %2000 = vmatmul.mubr.bf16.gmra.mxu0 %v1299
      %v2001 = vpop.f32.mrf.mxu0
      %v2002 = vadd.f32 %v466, %v2001
      %v2003 = vpop.f32.mrf.mxu0
      %v2004 = vpop.f32.mrf.mxu0
      %v2005 = vadd.f32 %v466, %v2004
      %v2006 = vpop.f32.mrf.mxu0
      %2007 = vmatprep.mubr.bf16.mxu0 0
      %2008 = vmatmul.mubr.bf16.gmra.mxu0 %v1302
      %v2009 = vpop.f32.mrf.mxu0
      %v2010 = vadd.f32 %v466, %v2009
      %v2011 = vpop.f32.mrf.mxu0
      %v2012 = vpop.f32.mrf.mxu0
      %v2013 = vadd.f32 %v466, %v2012
      %v2014 = vpop.f32.mrf.mxu0
      %2015 = vmatprep.mubr.bf16.mxu0 0
      %2016 = vmatmul.mubr.bf16.gmra.mxu0 %v1305
      %v2017 = vpop.f32.mrf.mxu0
      %v2018 = vadd.f32 %v466, %v2017
      %v2019 = vpop.f32.mrf.mxu0
      %v2020 = vpop.f32.mrf.mxu0
      %v2021 = vadd.f32 %v466, %v2020
      %v2022 = vpop.f32.mrf.mxu0
      %2023 = vmatprep.mubr.bf16.mxu0 0
      %2024 = vmatmul.mubr.bf16.gmra.mxu0 %v1308
      %v2025 = vpop.f32.mrf.mxu0
      %v2026 = vadd.f32 %v466, %v2025
      %v2027 = vpop.f32.mrf.mxu0
      %v2028 = vpop.f32.mrf.mxu0
      %v2029 = vadd.f32 %v466, %v2028
      %v2030 = vpop.f32.mrf.mxu0
      %2031 = vmatprep.mubr.bf16.mxu0 0
      %2032 = vmatmul.mubr.bf16.gmra.mxu0 %v1311
      %v2033 = vpop.f32.mrf.mxu0
      %v2034 = vadd.f32 %v466, %v2033
      %v2035 = vpop.f32.mrf.mxu0
      %v2036 = vpop.f32.mrf.mxu0
      %v2037 = vadd.f32 %v466, %v2036
      %v2038 = vpop.f32.mrf.mxu0
      %2039 = vmatprep.mubr.bf16.mxu0 0
      %2040 = vmatmul.mubr.bf16.gmra.mxu0 %v1314
      %v2041 = vpop.f32.mrf.mxu0
      %v2042 = vadd.f32 %v466, %v2041
      %v2043 = vpop.f32.mrf.mxu0
      %v2044 = vpop.f32.mrf.mxu0
      %v2045 = vadd.f32 %v466, %v2044
      %v2046 = vpop.f32.mrf.mxu0
      %2047 = vmatprep.mubr.bf16.mxu0 0
      %2048 = vmatmul.mubr.bf16.gmra.mxu0 %v1317
      %v2049 = vpop.f32.mrf.mxu0
      %v2050 = vadd.f32 %v466, %v2049
      %v2051 = vpop.f32.mrf.mxu0
      %v2052 = vpop.f32.mrf.mxu0
      %v2053 = vadd.f32 %v466, %v2052
      %v2054 = vpop.f32.mrf.mxu0
      %2055 = vmatprep.mubr.bf16.mxu0 0
      %2056 = vmatmul.mubr.bf16.gmra.mxu0 %v1320
      %v2057 = vpop.f32.mrf.mxu0
      %v2058 = vadd.f32 %v466, %v2057
      %v2059 = vpop.f32.mrf.mxu0
      %v2060 = vpop.f32.mrf.mxu0
      %v2061 = vadd.f32 %v466, %v2060
      %v2062 = vpop.f32.mrf.mxu0
      %2063 = vmatprep.mubr.bf16.mxu0 0
      %2064 = vmatmul.mubr.bf16.gmra.mxu0 %v1323
      %v2065 = vpop.f32.mrf.mxu0
      %v2066 = vadd.f32 %v466, %v2065
      %v2067 = vpop.f32.mrf.mxu0
      %v2068 = vpop.f32.mrf.mxu0
      %v2069 = vadd.f32 %v466, %v2068
      %v2070 = vpop.f32.mrf.mxu0
      %2071 = vmatprep.mubr.bf16.mxu0 0
      %2072 = vmatmul.mubr.bf16.gmra.mxu0 %v1326
      %v2073 = vpop.f32.mrf.mxu0
      %v2074 = vadd.f32 %v466, %v2073
      %v2075 = vpop.f32.mrf.mxu0
      %v2076 = vpop.f32.mrf.mxu0
      %v2077 = vadd.f32 %v466, %v2076
      %v2078 = vpop.f32.mrf.mxu0
      %2079 = vmatprep.mubr.bf16.mxu0 0
      %2080 = vmatmul.mubr.bf16.gmra.mxu0 %v1329
      %v2081 = vpop.f32.mrf.mxu0
      %v2082 = vadd.f32 %v466, %v2081
      %v2083 = vpop.f32.mrf.mxu0
      %v2084 = vpop.f32.mrf.mxu0
      %v2085 = vadd.f32 %v466, %v2084
      %v2086 = vpop.f32.mrf.mxu0
      %2087 = vmatprep.mubr.bf16.mxu0 0
      %2088 = vmatmul.mubr.bf16.gmra.mxu0 %v1332
      %v2089 = vpop.f32.mrf.mxu0
      %v2090 = vadd.f32 %v466, %v2089
      %v2091 = vpop.f32.mrf.mxu0
      %v2092 = vpop.f32.mrf.mxu0
      %v2093 = vadd.f32 %v466, %v2092
      %v2094 = vpop.f32.mrf.mxu0
      %2095 = vmatprep.mubr.bf16.mxu0 0
      %2096 = vmatmul.mubr.bf16.gmra.mxu0 %v1335
      %v2097 = vpop.f32.mrf.mxu0
      %v2098 = vadd.f32 %v466, %v2097
      %v2099 = vpop.f32.mrf.mxu0
      %v2100 = vpop.f32.mrf.mxu0
      %v2101 = vadd.f32 %v466, %v2100
      %v2102 = vpop.f32.mrf.mxu0
      %2103 = vmatprep.mubr.bf16.mxu0 0
      %2104 = vmatmul.mubr.bf16.gmra.mxu0 %v1338
      %v2105 = vpop.f32.mrf.mxu0
      %v2106 = vadd.f32 %v466, %v2105
      %v2107 = vpop.f32.mrf.mxu0
      %v2108 = vpop.f32.mrf.mxu0
      %v2109 = vadd.f32 %v466, %v2108
      %v2110 = vpop.f32.mrf.mxu0
      %2111 = vmatprep.mubr.bf16.mxu0 0
      %2112 = vmatmul.mubr.bf16.gmra.mxu0 %v1341
      %v2113 = vpop.f32.mrf.mxu0
      %v2114 = vadd.f32 %v466, %v2113
      %v2115 = vpop.f32.mrf.mxu0
      %v2116 = vpop.f32.mrf.mxu0
      %v2117 = vadd.f32 %v466, %v2116
      %v2118 = vpop.f32.mrf.mxu0
      %2119 = vmatprep.mubr.bf16.mxu0 0
      %2120 = vmatmul.mubr.bf16.gmra.mxu0 %v1344
      %v2121 = vpop.f32.mrf.mxu0
      %v2122 = vadd.f32 %v466, %v2121
      %v2123 = vpop.f32.mrf.mxu0
      %v2124 = vpop.f32.mrf.mxu0
      %v2125 = vadd.f32 %v466, %v2124
      %v2126 = vpop.f32.mrf.mxu0
      %2127 = vmatprep.mubr.bf16.mxu0 0
      %2128 = vmatmul.mubr.bf16.gmra.mxu0 %v1347
      %v2129 = vpop.f32.mrf.mxu0
      %v2130 = vadd.f32 %v466, %v2129
      %v2131 = vpop.f32.mrf.mxu0
      %v2132 = vpop.f32.mrf.mxu0
      %v2133 = vadd.f32 %v466, %v2132
      %v2134 = vpop.f32.mrf.mxu0
      %2135 = vmatprep.mubr.bf16.mxu0 0
      %2136 = vmatmul.mubr.bf16.gmra.mxu0 %v1350
      %v2137 = vpop.f32.mrf.mxu0
      %v2138 = vadd.f32 %v466, %v2137
      %v2139 = vpop.f32.mrf.mxu0
      %v2140 = vpop.f32.mrf.mxu0
      %v2141 = vadd.f32 %v466, %v2140
      %v2142 = vpop.f32.mrf.mxu0
      %2143 = vmatprep.mubr.bf16.mxu0 0
      %2144 = vmatmul.mubr.bf16.gmra.mxu0 %v1353
      %v2145 = vpop.f32.mrf.mxu0
      %v2146 = vadd.f32 %v466, %v2145
      %v2147 = vpop.f32.mrf.mxu0
      %v2148 = vpop.f32.mrf.mxu0
      %v2149 = vadd.f32 %v466, %v2148
      %v2150 = vpop.f32.mrf.mxu0
      %2151 = vmatprep.mubr.bf16.mxu0 0
      %2152 = vmatmul.mubr.bf16.gmra.mxu0 %v1356
      %v2153 = vpop.f32.mrf.mxu0
      %v2154 = vadd.f32 %v466, %v2153
      %v2155 = vpop.f32.mrf.mxu0
      %v2156 = vpop.f32.mrf.mxu0
      %v2157 = vadd.f32 %v466, %v2156
      %v2158 = vpop.f32.mrf.mxu0
      %2159 = vmatprep.mubr.bf16.mxu0 0
      %2160 = vmatmul.mubr.bf16.gmra.mxu0 %v1359
      %v2161 = vpop.f32.mrf.mxu0
      %v2162 = vadd.f32 %v466, %v2161
      %v2163 = vpop.f32.mrf.mxu0
      %v2164 = vpop.f32.mrf.mxu0
      %v2165 = vadd.f32 %v466, %v2164
      %v2166 = vpop.f32.mrf.mxu0
      %2167 = vmatprep.mubr.bf16.mxu0 0
      %2168 = vmatmul.mubr.bf16.gmra.mxu0 %v1362
      %v2169 = vpop.f32.mrf.mxu0
      %v2170 = vadd.f32 %v466, %v2169
      %v2171 = vpop.f32.mrf.mxu0
      %v2172 = vpop.f32.mrf.mxu0
      %v2173 = vadd.f32 %v466, %v2172
      %v2174 = vpop.f32.mrf.mxu0
      %2175 = vmatprep.mubr.bf16.mxu0 0
      %2176 = vmatmul.mubr.bf16.gmra.mxu0 %v1365
      %v2177 = vpop.f32.mrf.mxu0
      %v2178 = vadd.f32 %v466, %v2177
      %v2179 = vpop.f32.mrf.mxu0
      %v2180 = vpop.f32.mrf.mxu0
      %v2181 = vadd.f32 %v466, %v2180
      %v2182 = vpop.f32.mrf.mxu0
      %2183 = vmatprep.mubr.bf16.mxu0 0
      %2184 = vmatmul.mubr.bf16.gmra.mxu0 %v1368
      %v2185 = vpop.f32.mrf.mxu0
      %v2186 = vadd.f32 %v466, %v2185
      %v2187 = vpop.f32.mrf.mxu0
      %v2188 = vpop.f32.mrf.mxu0
      %v2189 = vadd.f32 %v466, %v2188
      %v2190 = vpop.f32.mrf.mxu0
      %2191 = vmatprep.mubr.bf16.mxu0 0
      %2192 = vmatmul.mubr.bf16.gmra.mxu0 %v1371
      %v2193 = vpop.f32.mrf.mxu0
      %v2194 = vadd.f32 %v466, %v2193
      %v2195 = vpop.f32.mrf.mxu0
      %v2196 = vpop.f32.mrf.mxu0
      %v2197 = vadd.f32 %v466, %v2196
      %v2198 = vpop.f32.mrf.mxu0
      %2199 = vmatprep.mubr.bf16.mxu0 0
      %2200 = vmatmul.mubr.bf16.gmra.mxu0 %v1374
      %v2201 = vpop.f32.mrf.mxu0
      %v2202 = vadd.f32 %v466, %v2201
      %v2203 = vpop.f32.mrf.mxu0
      %v2204 = vpop.f32.mrf.mxu0
      %v2205 = vadd.f32 %v466, %v2204
      %v2206 = vpop.f32.mrf.mxu0
      %2207 = vmatprep.mubr.bf16.mxu0 0
      %2208 = vmatmul.mubr.bf16.gmra.mxu0 %v1377
      %v2209 = vpop.f32.mrf.mxu0
      %v2210 = vadd.f32 %v466, %v2209
      %v2211 = vpop.f32.mrf.mxu0
      %v2212 = vpop.f32.mrf.mxu0
      %v2213 = vadd.f32 %v466, %v2212
      %v2214 = vpop.f32.mrf.mxu0
      %2215 = vmatprep.mubr.bf16.mxu0 0
      %2216 = vmatmul.mubr.bf16.gmra.mxu0 %v1380
      %v2217 = vpop.f32.mrf.mxu0
      %v2218 = vadd.f32 %v466, %v2217
      %v2219 = vpop.f32.mrf.mxu0
      %v2220 = vpop.f32.mrf.mxu0
      %v2221 = vadd.f32 %v466, %v2220
      %v2222 = vpop.f32.mrf.mxu0
      %2223 = vmatprep.mubr.bf16.mxu0 0
      %2224 = vmatmul.mubr.bf16.gmra.mxu0 %v1383
      %v2225 = vpop.f32.mrf.mxu0
      %v2226 = vadd.f32 %v466, %v2225
      %v2227 = vpop.f32.mrf.mxu0
      %v2228 = vpop.f32.mrf.mxu0
      %v2229 = vadd.f32 %v466, %v2228
      %v2230 = vpop.f32.mrf.mxu0
      %2231 = vmatprep.mubr.bf16.mxu0 0
      %2232 = vmatmul.mubr.bf16.gmra.mxu0 %v1386
      %v2233 = vpop.f32.mrf.mxu0
      %v2234 = vadd.f32 %v466, %v2233
      %v2235 = vpop.f32.mrf.mxu0
      %v2236 = vpop.f32.mrf.mxu0
      %v2237 = vadd.f32 %v466, %v2236
      %v2238 = vpop.f32.mrf.mxu0
      %2239 = vmatprep.mubr.bf16.mxu0 0
      %2240 = vmatmul.mubr.bf16.gmra.mxu0 %v1389
      %v2241 = vpop.f32.mrf.mxu0
      %v2242 = vadd.f32 %v466, %v2241
      %v2243 = vpop.f32.mrf.mxu0
      %v2244 = vpop.f32.mrf.mxu0
      %v2245 = vadd.f32 %v466, %v2244
      %v2246 = vpop.f32.mrf.mxu0
      %2247 = vmatprep.mubr.bf16.mxu0 0
      %2248 = vmatmul.mubr.bf16.gmra.mxu0 %v1392
      %v2249 = vpop.f32.mrf.mxu0
      %v2250 = vadd.f32 %v466, %v2249
      %v2251 = vpop.f32.mrf.mxu0
      %v2252 = vpop.f32.mrf.mxu0
      %v2253 = vadd.f32 %v466, %v2252
      %v2254 = vpop.f32.mrf.mxu0
      %2255 = vmatprep.mubr.bf16.mxu0 0
      %2256 = vmatmul.mubr.bf16.gmra.mxu0 %v1395
      %v2257 = vpop.f32.mrf.mxu0
      %v2258 = vadd.f32 %v466, %v2257
      %v2259 = vpop.f32.mrf.mxu0
      %v2260 = vpop.f32.mrf.mxu0
      %v2261 = vadd.f32 %v466, %v2260
      %v2262 = vpop.f32.mrf.mxu0
      %2263 = vmatprep.mubr.bf16.mxu0 0
      %2264 = vmatmul.mubr.bf16.gmra.mxu0 %v1398
      %v2265 = vpop.f32.mrf.mxu0
      %v2266 = vadd.f32 %v466, %v2265
      %v2267 = vpop.f32.mrf.mxu0
      %v2268 = vpop.f32.mrf.mxu0
      %v2269 = vadd.f32 %v466, %v2268
      %v2270 = vpop.f32.mrf.mxu0
      %2271 = vmatprep.mubr.bf16.mxu0 0
      %2272 = vmatmul.mubr.bf16.gmra.mxu0 %v1401
      %v2273 = vpop.f32.mrf.mxu0
      %v2274 = vadd.f32 %v466, %v2273
      %v2275 = vpop.f32.mrf.mxu0
      %v2276 = vpop.f32.mrf.mxu0
      %v2277 = vadd.f32 %v466, %v2276
      %v2278 = vpop.f32.mrf.mxu0
      %2279 = vmatprep.mubr.bf16.mxu0 0
      %2280 = vmatmul.mubr.bf16.gmra.mxu0 %v1404
      %v2281 = vpop.f32.mrf.mxu0
      %v2282 = vadd.f32 %v466, %v2281
      %v2283 = vpop.f32.mrf.mxu0
      %v2284 = vpop.f32.mrf.mxu0
      %v2285 = vadd.f32 %v466, %v2284
      %v2286 = vpop.f32.mrf.mxu0
      %2287 = vmatprep.mubr.bf16.mxu0 0
      %2288 = vmatmul.mubr.bf16.gmra.mxu0 %v1407
      %v2289 = vpop.f32.mrf.mxu0
      %v2290 = vadd.f32 %v466, %v2289
      %v2291 = vpop.f32.mrf.mxu0
      %v2292 = vpop.f32.mrf.mxu0
      %v2293 = vadd.f32 %v466, %v2292
      %v2294 = vpop.f32.mrf.mxu0
      %2295 = vmatprep.mubr.bf16.mxu0 0
      %2296 = vmatmul.mubr.bf16.gmra.mxu0 %v1410
      %v2297 = vpop.f32.mrf.mxu0
      %v2298 = vadd.f32 %v466, %v2297
      %v2299 = vpop.f32.mrf.mxu0
      %v2300 = vpop.f32.mrf.mxu0
      %v2301 = vadd.f32 %v466, %v2300
      %v2302 = vpop.f32.mrf.mxu0
      %2303 = vmatprep.mubr.bf16.mxu0 0
      %2304 = vmatmul.mubr.bf16.gmra.mxu0 %v1413
      %v2305 = vpop.f32.mrf.mxu0
      %v2306 = vadd.f32 %v466, %v2305
      %v2307 = vpop.f32.mrf.mxu0
      %v2308 = vpop.f32.mrf.mxu0
      %v2309 = vadd.f32 %v466, %v2308
      %v2310 = vpop.f32.mrf.mxu0
      %2311 = vmatprep.mubr.bf16.mxu0 0
      %2312 = vmatmul.mubr.bf16.gmra.mxu0 %v1416
      %v2313 = vpop.f32.mrf.mxu0
      %v2314 = vadd.f32 %v466, %v2313
      %v2315 = vpop.f32.mrf.mxu0
      %v2316 = vpop.f32.mrf.mxu0
      %v2317 = vadd.f32 %v466, %v2316
      %v2318 = vpop.f32.mrf.mxu0
      %2319 = vmatprep.mubr.bf16.mxu0 0
      %2320 = vmatmul.mubr.bf16.gmra.mxu0 %v1419
      %v2321 = vpop.f32.mrf.mxu0
      %v2322 = vadd.f32 %v466, %v2321
      %v2323 = vpop.f32.mrf.mxu0
      %v2324 = vpop.f32.mrf.mxu0
      %v2325 = vadd.f32 %v466, %v2324
      %v2326 = vpop.f32.mrf.mxu0
      %2327 = vmatprep.mubr.bf16.mxu0 0
      %2328 = vmatmul.mubr.bf16.gmra.mxu0 %v1422
      %v2329 = vpop.f32.mrf.mxu0
      %v2330 = vadd.f32 %v466, %v2329
      %v2331 = vpop.f32.mrf.mxu0
      %v2332 = vpop.f32.mrf.mxu0
      %v2333 = vadd.f32 %v466, %v2332
      %v2334 = vpop.f32.mrf.mxu0
      %2335 = vmatprep.mubr.bf16.mxu0 0
      %2336 = vmatmul.mubr.bf16.gmra.mxu0 %v1425
      %v2337 = vpop.f32.mrf.mxu0
      %v2338 = vadd.f32 %v466, %v2337
      %v2339 = vpop.f32.mrf.mxu0
      %v2340 = vpop.f32.mrf.mxu0
      %v2341 = vadd.f32 %v466, %v2340
      %v2342 = vpop.f32.mrf.mxu0
      %2343 = vmatprep.mubr.bf16.mxu0 0
      %2344 = vmatmul.mubr.bf16.gmra.mxu0 %v1428
      %v2345 = vpop.f32.mrf.mxu0
      %v2346 = vadd.f32 %v466, %v2345
      %v2347 = vpop.f32.mrf.mxu0
      %v2348 = vpop.f32.mrf.mxu0
      %v2349 = vadd.f32 %v466, %v2348
      %v2350 = vpop.f32.mrf.mxu0
      %2351 = vmatprep.mubr.bf16.mxu0 0
      %2352 = vmatmul.mubr.bf16.gmra.mxu0 %v1431
      %v2353 = vpop.f32.mrf.mxu0
      %v2354 = vadd.f32 %v466, %v2353
      %v2355 = vpop.f32.mrf.mxu0
      %v2356 = vpop.f32.mrf.mxu0
      %v2357 = vadd.f32 %v466, %v2356
      %v2358 = vpop.f32.mrf.mxu0
      %2359 = vmatprep.mubr.bf16.mxu0 0
      %2360 = vmatmul.mubr.bf16.gmra.mxu0 %v1434
      %v2361 = vpop.f32.mrf.mxu0
      %v2362 = vadd.f32 %v466, %v2361
      %v2363 = vpop.f32.mrf.mxu0
      %v2364 = vpop.f32.mrf.mxu0
      %v2365 = vadd.f32 %v466, %v2364
      %v2366 = vpop.f32.mrf.mxu0
      %2367 = vmatprep.mubr.bf16.mxu0 0
      %2368 = vmatmul.mubr.bf16.gmra.mxu0 %v1437
      %v2369 = vpop.f32.mrf.mxu0
      %v2370 = vadd.f32 %v466, %v2369
      %v2371 = vpop.f32.mrf.mxu0
      %v2372 = vpop.f32.mrf.mxu0
      %v2373 = vadd.f32 %v466, %v2372
      %v2374 = vpop.f32.mrf.mxu0
      %2375 = vmatprep.mubr.bf16.mxu0 0
      %2376 = vmatmul.mubr.bf16.gmra.mxu0 %v1440
      %v2377 = vpop.f32.mrf.mxu0
      %v2378 = vadd.f32 %v466, %v2377
      %v2379 = vpop.f32.mrf.mxu0
      %v2380 = vpop.f32.mrf.mxu0
      %v2381 = vadd.f32 %v466, %v2380
      %v2382 = vpop.f32.mrf.mxu0
      %2383 = vmatprep.mubr.bf16.mxu0 0
      %2384 = vmatmul.mubr.bf16.gmra.mxu0 %v1443
      %v2385 = vpop.f32.mrf.mxu0
      %v2386 = vadd.f32 %v466, %v2385
      %v2387 = vpop.f32.mrf.mxu0
      %v2388 = vpop.f32.mrf.mxu0
      %v2389 = vadd.f32 %v466, %v2388
      %v2390 = vpop.f32.mrf.mxu0
      %2391 = vmatprep.mubr.bf16.mxu0 0
      %2392 = vmatmul.mubr.bf16.gmra.mxu0 %v1446
      %v2393 = vpop.f32.mrf.mxu0
      %v2394 = vadd.f32 %v466, %v2393
      %v2395 = vpop.f32.mrf.mxu0
      %v2396 = vpop.f32.mrf.mxu0
      %v2397 = vadd.f32 %v466, %v2396
      %v2398 = vpop.f32.mrf.mxu0
      %2399 = vmatprep.mubr.bf16.mxu0 0
      %2400 = vmatmul.mubr.bf16.gmra.mxu0 %v1449
      %v2401 = vpop.f32.mrf.mxu0
      %v2402 = vadd.f32 %v466, %v2401
      %v2403 = vpop.f32.mrf.mxu0
      %v2404 = vpop.f32.mrf.mxu0
      %v2405 = vadd.f32 %v466, %v2404
      %v2406 = vpop.f32.mrf.mxu0
      %2407 = vmatprep.mubr.bf16.mxu0 0
      %2408 = vmatmul.mubr.bf16.gmra.mxu0 %v1452
      %v2409 = vpop.f32.mrf.mxu0
      %v2410 = vadd.f32 %v466, %v2409
      %v2411 = vpop.f32.mrf.mxu0
      %v2412 = vpop.f32.mrf.mxu0
      %v2413 = vadd.f32 %v466, %v2412
      %v2414 = vpop.f32.mrf.mxu0
      %2415 = vmatprep.mubr.bf16.mxu0 0
      %2416 = vmatmul.mubr.bf16.gmra.mxu0 %v1455
      %v2417 = vpop.f32.mrf.mxu0
      %v2418 = vadd.f32 %v466, %v2417
      %v2419 = vpop.f32.mrf.mxu0
      %v2420 = vpop.f32.mrf.mxu0
      %v2421 = vadd.f32 %v466, %v2420
      %v2422 = vpop.f32.mrf.mxu0
      %2423 = vmatprep.mubr.bf16.mxu0 0
      %2424 = vmatmul.mubr.bf16.gmra.mxu0 %v1458
      %v2425 = vpop.f32.mrf.mxu0
      %v2426 = vadd.f32 %v466, %v2425
      %v2427 = vpop.f32.mrf.mxu0
      %v2428 = vpop.f32.mrf.mxu0
      %v2429 = vadd.f32 %v466, %v2428
      %v2430 = vpop.f32.mrf.mxu0
      %2431 = vmatprep.mubr.bf16.mxu0 0
      %2432 = vmatmul.mubr.bf16.gmra.mxu0 %v1461
      %v2433 = vpop.f32.mrf.mxu0
      %v2434 = vadd.f32 %v466, %v2433
      %v2435 = vpop.f32.mrf.mxu0
      %v2436 = vpop.f32.mrf.mxu0
      %v2437 = vadd.f32 %v466, %v2436
      %v2438 = vpop.f32.mrf.mxu0
      %2439 = vmatprep.mubr.bf16.mxu0 0
      %2440 = vmatmul.mubr.bf16.gmra.mxu0 %v1464
      %v2441 = vpop.f32.mrf.mxu0
      %v2442 = vadd.f32 %v466, %v2441
      %v2443 = vpop.f32.mrf.mxu0
      %v2444 = vpop.f32.mrf.mxu0
      %v2445 = vadd.f32 %v466, %v2444
      %v2446 = vpop.f32.mrf.mxu0
      %2447 = vmatprep.mubr.bf16.mxu0 0
      %2448 = vmatmul.mubr.bf16.gmra.mxu0 %v1467
      %v2449 = vpop.f32.mrf.mxu0
      %v2450 = vadd.f32 %v466, %v2449
      %v2451 = vpop.f32.mrf.mxu0
      %v2452 = vpop.f32.mrf.mxu0
      %v2453 = vadd.f32 %v466, %v2452
      %v2454 = vpop.f32.mrf.mxu0
      %2455 = vmatprep.mubr.bf16.mxu0 0
      %2456 = vmatmul.mubr.bf16.gmra.mxu0 %v1470
      %v2457 = vpop.f32.mrf.mxu0
      %v2458 = vadd.f32 %v466, %v2457
      %v2459 = vpop.f32.mrf.mxu0
      %v2460 = vpop.f32.mrf.mxu0
      %v2461 = vadd.f32 %v466, %v2460
      %v2462 = vpop.f32.mrf.mxu0
      %2463 = vmatprep.mubr.bf16.mxu0 0
      %2464 = vmatmul.mubr.bf16.gmra.mxu0 %v1473
      %v2465 = vpop.f32.mrf.mxu0
      %v2466 = vadd.f32 %v466, %v2465
      %v2467 = vpop.f32.mrf.mxu0
      %v2468 = vpop.f32.mrf.mxu0
      %v2469 = vadd.f32 %v466, %v2468
      %v2470 = vpop.f32.mrf.mxu0
      %2471 = vmatprep.mubr.bf16.mxu0 0
      %2472 = vmatmul.mubr.bf16.gmra.mxu0 %v1476
      %v2473 = vpop.f32.mrf.mxu0
      %v2474 = vadd.f32 %v466, %v2473
      %v2475 = vpop.f32.mrf.mxu0
      %v2476 = vpop.f32.mrf.mxu0
      %v2477 = vadd.f32 %v466, %v2476
      %v2478 = vpop.f32.mrf.mxu0
      %2479 = vmatprep.mubr.bf16.mxu0 0
      %2480 = vmatmul.mubr.bf16.gmra.mxu0 %v1479
      %v2481 = vpop.f32.mrf.mxu0
      %v2482 = vadd.f32 %v466, %v2481
      %v2483 = vpop.f32.mrf.mxu0
      %v2484 = vpop.f32.mrf.mxu0
      %v2485 = vadd.f32 %v466, %v2484
      %v2486 = vpop.f32.mrf.mxu0
      %2487 = vmatprep.mubr.bf16.mxu0 0
      %2488 = vmatmul.mubr.bf16.gmra.mxu0 %v1482
      %v2489 = vpop.f32.mrf.mxu0
      %v2490 = vadd.f32 %v466, %v2489
      %v2491 = vpop.f32.mrf.mxu0
      %v2492 = vpop.f32.mrf.mxu0
      %v2493 = vadd.f32 %v466, %v2492
      %v2494 = vpop.f32.mrf.mxu0
      %2495 = vmatprep.mubr.bf16.mxu0 0
      %2496 = vmatmul.mubr.bf16.gmra.mxu0 %v1485
      %v2497 = vpop.f32.mrf.mxu0
      %v2498 = vadd.f32 %v466, %v2497
      %v2499 = vpop.f32.mrf.mxu0
      %v2500 = vpop.f32.mrf.mxu0
      %v2501 = vadd.f32 %v466, %v2500
      %v2502 = vpop.f32.mrf.mxu0
      %2503 = vmatprep.mubr.bf16.mxu0 0
      %2504 = vmatmul.mubr.bf16.gmra.mxu0 %v1488
      %v2505 = vpop.f32.mrf.mxu0
      %v2506 = vadd.f32 %v466, %v2505
      %v2507 = vpop.f32.mrf.mxu0
      %v2508 = vpop.f32.mrf.mxu0
      %v2509 = vadd.f32 %v466, %v2508
      %v2510 = vpop.f32.mrf.mxu0
      %2511 = vmatprep.mubr.bf16.mxu0 0
      %2512 = vmatmul.mubr.bf16.gmra.mxu0 %v1491
      %v2513 = vpop.f32.mrf.mxu0
      %v2514 = vadd.f32 %v466, %v2513
      %v2515 = vpop.f32.mrf.mxu0
      %v2516 = vpop.f32.mrf.mxu0
      %v2517 = vadd.f32 %v466, %v2516
      %v2518 = vpop.f32.mrf.mxu0
      %2519 = vmatprep.mubr.bf16.mxu0 0
      %2520 = vmatmul.mubr.bf16.gmra.mxu0 %v1494
      %v2521 = vpop.f32.mrf.mxu0
      %v2522 = vadd.f32 %v466, %v2521
      %v2523 = vpop.f32.mrf.mxu0
      %v2524 = vpop.f32.mrf.mxu0
      %v2525 = vadd.f32 %v466, %v2524
      %v2526 = vpop.f32.mrf.mxu0
      %2527 = vmatprep.mubr.bf16.mxu0 0
      %2528 = vmatmul.mubr.bf16.gmra.mxu0 %v1497
      %v2529 = vpop.f32.mrf.mxu0
      %v2530 = vadd.f32 %v466, %v2529
      %v2531 = vpop.f32.mrf.mxu0
      %v2532 = vpop.f32.mrf.mxu0
      %v2533 = vadd.f32 %v466, %v2532
      %v2534 = vpop.f32.mrf.mxu0
      %2535 = vmatprep.mubr.bf16.mxu0 0
      %2536 = vmatmul.mubr.bf16.gmra.mxu0 %v1500
      %v2537 = vpop.f32.mrf.mxu0
      %v2538 = vadd.f32 %v466, %v2537
      %v2539 = vpop.f32.mrf.mxu0
      %v2540 = vpop.f32.mrf.mxu0
      %v2541 = vadd.f32 %v466, %v2540
      %v2542 = vpop.f32.mrf.mxu0
      %2543 = vmatprep.mubr.bf16.mxu0 0
      %2544 = vmatmul.mubr.bf16.gmra.mxu0 %v1503
      %v2545 = vpop.f32.mrf.mxu0
      %v2546 = vadd.f32 %v466, %v2545
      %v2547 = vpop.f32.mrf.mxu0
      %v2548 = vpop.f32.mrf.mxu0
      %v2549 = vadd.f32 %v466, %v2548
      %v2550 = vpop.f32.mrf.mxu0
      %2551 = vmatprep.mubr.bf16.mxu0 0
      %2552 = vmatmul.mubr.bf16.gmra.mxu0 %v1506
      %v2553 = vpop.f32.mrf.mxu0
      %v2554 = vadd.f32 %v466, %v2553
      %v2555 = vpop.f32.mrf.mxu0
      %v2556 = vpop.f32.mrf.mxu0
      %v2557 = vadd.f32 %v466, %v2556
      %v2558 = vpop.f32.mrf.mxu0
      %2559 = vmatprep.mubr.bf16.mxu0 0
      %2560 = vmatmul.mubr.bf16.gmra.mxu0 %v1509
      %v2561 = vpop.f32.mrf.mxu0
      %v2562 = vadd.f32 %v466, %v2561
      %v2563 = vpop.f32.mrf.mxu0
      %v2564 = vpop.f32.mrf.mxu0
      %v2565 = vadd.f32 %v466, %v2564
      %v2566 = vpop.f32.mrf.mxu0
      %2567 = vdwg.mxu0
      %v2568 = vmax.f32 %v1546, 0.0
      %v2569 = vmax.f32 %v1549, 0.0
      %v2570 = vmax.f32 %v1554, 0.0
      %v2571 = vmax.f32 %v1557, 0.0
      %v2572 = vmax.f32 %v1562, 0.0
      %v2573 = vmax.f32 %v1565, 0.0
      %v2574 = vmax.f32 %v1570, 0.0
      %v2575 = vmax.f32 %v1573, 0.0
      %v2576 = vmax.f32 %v1578, 0.0
      %v2577 = vmax.f32 %v1581, 0.0
      %v2578 = vmax.f32 %v1586, 0.0
      %v2579 = vmax.f32 %v1589, 0.0
      %v2580 = vmax.f32 %v1594, 0.0
      %v2581 = vmax.f32 %v1597, 0.0
      %v2582 = vmax.f32 %v1602, 0.0
      %v2583 = vmax.f32 %v1605, 0.0
      %v2584 = vmax.f32 %v1610, 0.0
      %v2585 = vmax.f32 %v1613, 0.0
      %v2586 = vmax.f32 %v1618, 0.0
      %v2587 = vmax.f32 %v1621, 0.0
      %v2588 = vmax.f32 %v1626, 0.0
      %v2589 = vmax.f32 %v1629, 0.0
      %v2590 = vmax.f32 %v1634, 0.0
      %v2591 = vmax.f32 %v1637, 0.0
      %v2592 = vmax.f32 %v1642, 0.0
      %v2593 = vmax.f32 %v1645, 0.0
      %v2594 = vmax.f32 %v1650, 0.0
      %v2595 = vmax.f32 %v1653, 0.0
      %v2596 = vmax.f32 %v1658, 0.0
      %v2597 = vmax.f32 %v1661, 0.0
      %v2598 = vmax.f32 %v1666, 0.0
      %v2599 = vmax.f32 %v1669, 0.0
      %v2600 = vmax.f32 %v1674, 0.0
      %v2601 = vmax.f32 %v1677, 0.0
      %v2602 = vmax.f32 %v1682, 0.0
      %v2603 = vmax.f32 %v1685, 0.0
      %v2604 = vmax.f32 %v1690, 0.0
      %v2605 = vmax.f32 %v1693, 0.0
      %v2606 = vmax.f32 %v1698, 0.0
      %v2607 = vmax.f32 %v1701, 0.0
      %v2608 = vmax.f32 %v1706, 0.0
      %v2609 = vmax.f32 %v1709, 0.0
      %v2610 = vmax.f32 %v1714, 0.0
      %v2611 = vmax.f32 %v1717, 0.0
      %v2612 = vmax.f32 %v1722, 0.0
      %v2613 = vmax.f32 %v1725, 0.0
      %v2614 = vmax.f32 %v1730, 0.0
      %v2615 = vmax.f32 %v1733, 0.0
      %v2616 = vmax.f32 %v1738, 0.0
      %v2617 = vmax.f32 %v1741, 0.0
      %v2618 = vmax.f32 %v1746, 0.0
      %v2619 = vmax.f32 %v1749, 0.0
      %v2620 = vmax.f32 %v1754, 0.0
      %v2621 = vmax.f32 %v1757, 0.0
      %v2622 = vmax.f32 %v1762, 0.0
      %v2623 = vmax.f32 %v1765, 0.0
      %v2624 = vmax.f32 %v1770, 0.0
      %v2625 = vmax.f32 %v1773, 0.0
      %v2626 = vmax.f32 %v1778, 0.0
      %v2627 = vmax.f32 %v1781, 0.0
      %v2628 = vmax.f32 %v1786, 0.0
      %v2629 = vmax.f32 %v1789, 0.0
      %v2630 = vmax.f32 %v1794, 0.0
      %v2631 = vmax.f32 %v1797, 0.0
      %v2632 = vmax.f32 %v1802, 0.0
      %v2633 = vmax.f32 %v1805, 0.0
      %v2634 = vmax.f32 %v1810, 0.0
      %v2635 = vmax.f32 %v1813, 0.0
      %v2636 = vmax.f32 %v1818, 0.0
      %v2637 = vmax.f32 %v1821, 0.0
      %v2638 = vmax.f32 %v1826, 0.0
      %v2639 = vmax.f32 %v1829, 0.0
      %v2640 = vmax.f32 %v1834, 0.0
      %v2641 = vmax.f32 %v1837, 0.0
      %v2642 = vmax.f32 %v1842, 0.0
      %v2643 = vmax.f32 %v1845, 0.0
      %v2644 = vmax.f32 %v1850, 0.0
      %v2645 = vmax.f32 %v1853, 0.0
      %v2646 = vmax.f32 %v1858, 0.0
      %v2647 = vmax.f32 %v1861, 0.0
      %v2648 = vmax.f32 %v1866, 0.0
      %v2649 = vmax.f32 %v1869, 0.0
      %v2650 = vmax.f32 %v1874, 0.0
      %v2651 = vmax.f32 %v1877, 0.0
      %v2652 = vmax.f32 %v1882, 0.0
      %v2653 = vmax.f32 %v1885, 0.0
      %v2654 = vmax.f32 %v1890, 0.0
      %v2655 = vmax.f32 %v1893, 0.0
      %v2656 = vmax.f32 %v1898, 0.0
      %v2657 = vmax.f32 %v1901, 0.0
      %v2658 = vmax.f32 %v1906, 0.0
      %v2659 = vmax.f32 %v1909, 0.0
      %v2660 = vmax.f32 %v1914, 0.0
      %v2661 = vmax.f32 %v1917, 0.0
      %v2662 = vmax.f32 %v1922, 0.0
      %v2663 = vmax.f32 %v1925, 0.0
      %v2664 = vmax.f32 %v1930, 0.0
      %v2665 = vmax.f32 %v1933, 0.0
      %v2666 = vmax.f32 %v1938, 0.0
      %v2667 = vmax.f32 %v1941, 0.0
      %v2668 = vmax.f32 %v1946, 0.0
      %v2669 = vmax.f32 %v1949, 0.0
      %v2670 = vmax.f32 %v1954, 0.0
      %v2671 = vmax.f32 %v1957, 0.0
      %v2672 = vmax.f32 %v1962, 0.0
      %v2673 = vmax.f32 %v1965, 0.0
      %v2674 = vmax.f32 %v1970, 0.0
      %v2675 = vmax.f32 %v1973, 0.0
      %v2676 = vmax.f32 %v1978, 0.0
      %v2677 = vmax.f32 %v1981, 0.0
      %v2678 = vmax.f32 %v1986, 0.0
      %v2679 = vmax.f32 %v1989, 0.0
      %v2680 = vmax.f32 %v1994, 0.0
      %v2681 = vmax.f32 %v1997, 0.0
      %v2682 = vmax.f32 %v2002, 0.0
      %v2683 = vmax.f32 %v2005, 0.0
      %v2684 = vmax.f32 %v2010, 0.0
      %v2685 = vmax.f32 %v2013, 0.0
      %v2686 = vmax.f32 %v2018, 0.0
      %v2687 = vmax.f32 %v2021, 0.0
      %v2688 = vmax.f32 %v2026, 0.0
      %v2689 = vmax.f32 %v2029, 0.0
      %v2690 = vmax.f32 %v2034, 0.0
      %v2691 = vmax.f32 %v2037, 0.0
      %v2692 = vmax.f32 %v2042, 0.0
      %v2693 = vmax.f32 %v2045, 0.0
      %v2694 = vmax.f32 %v2050, 0.0
      %v2695 = vmax.f32 %v2053, 0.0
      %v2696 = vmax.f32 %v2058, 0.0
      %v2697 = vmax.f32 %v2061, 0.0
      %v2698 = vmax.f32 %v2066, 0.0
      %v2699 = vmax.f32 %v2069, 0.0
      %v2700 = vmax.f32 %v2074, 0.0
      %v2701 = vmax.f32 %v2077, 0.0
      %v2702 = vmax.f32 %v2082, 0.0
      %v2703 = vmax.f32 %v2085, 0.0
      %v2704 = vmax.f32 %v2090, 0.0
      %v2705 = vmax.f32 %v2093, 0.0
      %v2706 = vmax.f32 %v2098, 0.0
      %v2707 = vmax.f32 %v2101, 0.0
      %v2708 = vmax.f32 %v2106, 0.0
      %v2709 = vmax.f32 %v2109, 0.0
      %v2710 = vmax.f32 %v2114, 0.0
      %v2711 = vmax.f32 %v2117, 0.0
      %v2712 = vmax.f32 %v2122, 0.0
      %v2713 = vmax.f32 %v2125, 0.0
      %v2714 = vmax.f32 %v2130, 0.0
      %v2715 = vmax.f32 %v2133, 0.0
      %v2716 = vmax.f32 %v2138, 0.0
      %v2717 = vmax.f32 %v2141, 0.0
      %v2718 = vmax.f32 %v2146, 0.0
      %v2719 = vmax.f32 %v2149, 0.0
      %v2720 = vmax.f32 %v2154, 0.0
      %v2721 = vmax.f32 %v2157, 0.0
      %v2722 = vmax.f32 %v2162, 0.0
      %v2723 = vmax.f32 %v2165, 0.0
      %v2724 = vmax.f32 %v2170, 0.0
      %v2725 = vmax.f32 %v2173, 0.0
      %v2726 = vmax.f32 %v2178, 0.0
      %v2727 = vmax.f32 %v2181, 0.0
      %v2728 = vmax.f32 %v2186, 0.0
      %v2729 = vmax.f32 %v2189, 0.0
      %v2730 = vmax.f32 %v2194, 0.0
      %v2731 = vmax.f32 %v2197, 0.0
      %v2732 = vmax.f32 %v2202, 0.0
      %v2733 = vmax.f32 %v2205, 0.0
      %v2734 = vmax.f32 %v2210, 0.0
      %v2735 = vmax.f32 %v2213, 0.0
      %v2736 = vmax.f32 %v2218, 0.0
      %v2737 = vmax.f32 %v2221, 0.0
      %v2738 = vmax.f32 %v2226, 0.0
      %v2739 = vmax.f32 %v2229, 0.0
      %v2740 = vmax.f32 %v2234, 0.0
      %v2741 = vmax.f32 %v2237, 0.0
      %v2742 = vmax.f32 %v2242, 0.0
      %v2743 = vmax.f32 %v2245, 0.0
      %v2744 = vmax.f32 %v2250, 0.0
      %v2745 = vmax.f32 %v2253, 0.0
      %v2746 = vmax.f32 %v2258, 0.0
      %v2747 = vmax.f32 %v2261, 0.0
      %v2748 = vmax.f32 %v2266, 0.0
      %v2749 = vmax.f32 %v2269, 0.0
      %v2750 = vmax.f32 %v2274, 0.0
      %v2751 = vmax.f32 %v2277, 0.0
      %v2752 = vmax.f32 %v2282, 0.0
      %v2753 = vmax.f32 %v2285, 0.0
      %v2754 = vmax.f32 %v2290, 0.0
      %v2755 = vmax.f32 %v2293, 0.0
      %v2756 = vmax.f32 %v2298, 0.0
      %v2757 = vmax.f32 %v2301, 0.0
      %v2758 = vmax.f32 %v2306, 0.0
      %v2759 = vmax.f32 %v2309, 0.0
      %v2760 = vmax.f32 %v2314, 0.0
      %v2761 = vmax.f32 %v2317, 0.0
      %v2762 = vmax.f32 %v2322, 0.0
      %v2763 = vmax.f32 %v2325, 0.0
      %v2764 = vmax.f32 %v2330, 0.0
      %v2765 = vmax.f32 %v2333, 0.0
      %v2766 = vmax.f32 %v2338, 0.0
      %v2767 = vmax.f32 %v2341, 0.0
      %v2768 = vmax.f32 %v2346, 0.0
      %v2769 = vmax.f32 %v2349, 0.0
      %v2770 = vmax.f32 %v2354, 0.0
      %v2771 = vmax.f32 %v2357, 0.0
      %v2772 = vmax.f32 %v2362, 0.0
      %v2773 = vmax.f32 %v2365, 0.0
      %v2774 = vmax.f32 %v2370, 0.0
      %v2775 = vmax.f32 %v2373, 0.0
      %v2776 = vmax.f32 %v2378, 0.0
      %v2777 = vmax.f32 %v2381, 0.0
      %v2778 = vmax.f32 %v2386, 0.0
      %v2779 = vmax.f32 %v2389, 0.0
      %v2780 = vmax.f32 %v2394, 0.0
      %v2781 = vmax.f32 %v2397, 0.0
      %v2782 = vmax.f32 %v2402, 0.0
      %v2783 = vmax.f32 %v2405, 0.0
      %v2784 = vmax.f32 %v2410, 0.0
      %v2785 = vmax.f32 %v2413, 0.0
      %v2786 = vmax.f32 %v2418, 0.0
      %v2787 = vmax.f32 %v2421, 0.0
      %v2788 = vmax.f32 %v2426, 0.0
      %v2789 = vmax.f32 %v2429, 0.0
      %v2790 = vmax.f32 %v2434, 0.0
      %v2791 = vmax.f32 %v2437, 0.0
      %v2792 = vmax.f32 %v2442, 0.0
      %v2793 = vmax.f32 %v2445, 0.0
      %v2794 = vmax.f32 %v2450, 0.0
      %v2795 = vmax.f32 %v2453, 0.0
      %v2796 = vmax.f32 %v2458, 0.0
      %v2797 = vmax.f32 %v2461, 0.0
      %v2798 = vmax.f32 %v2466, 0.0
      %v2799 = vmax.f32 %v2469, 0.0
      %v2800 = vmax.f32 %v2474, 0.0
      %v2801 = vmax.f32 %v2477, 0.0
      %v2802 = vmax.f32 %v2482, 0.0
      %v2803 = vmax.f32 %v2485, 0.0
      %v2804 = vmax.f32 %v2490, 0.0
      %v2805 = vmax.f32 %v2493, 0.0
      %v2806 = vmax.f32 %v2498, 0.0
      %v2807 = vmax.f32 %v2501, 0.0
      %v2808 = vmax.f32 %v2506, 0.0
      %v2809 = vmax.f32 %v2509, 0.0
      %v2810 = vmax.f32 %v2514, 0.0
      %v2811 = vmax.f32 %v2517, 0.0
      %v2812 = vmax.f32 %v2522, 0.0
      %v2813 = vmax.f32 %v2525, 0.0
      %v2814 = vmax.f32 %v2530, 0.0
      %v2815 = vmax.f32 %v2533, 0.0
      %v2816 = vmax.f32 %v2538, 0.0
      %v2817 = vmax.f32 %v2541, 0.0
      %v2818 = vmax.f32 %v2546, 0.0
      %v2819 = vmax.f32 %v2549, 0.0
      %v2820 = vmax.f32 %v2554, 0.0
      %v2821 = vmax.f32 %v2557, 0.0
      %v2822 = vmax.f32 %v2562, 0.0
      %v2823 = vmax.f32 %v2565, 0.0
      %v2824 = vld [vmem:[%s3] sm:$0xff]
      %v2825 = vld [vmem:[%s3 + $0x8] sm:$0xff]
      %v2826 = vld [vmem:[%s3 + $0x10] sm:$0xff]
      %v2827 = vld [vmem:[%s3 + $0x18] sm:$0xff]
      %v2828 = vld [vmem:[%s3 + $0x20] sm:$0xff]
      %v2829 = vld [vmem:[%s3 + $0x28] sm:$0xff]
      %v2830 = vld [vmem:[%s3 + $0x30] sm:$0xff]
      %v2831 = vld [vmem:[%s3 + $0x38] sm:$0xff]
      %v2832 = vld [vmem:[%s3 + $0x40] sm:$0xff]
      %v2833 = vld [vmem:[%s3 + $0x48] sm:$0xff]
      %v2834 = vld [vmem:[%s3 + $0x50] sm:$0xff]
      %v2835 = vld [vmem:[%s3 + $0x58] sm:$0xff]
      %v2836 = vld [vmem:[%s3 + $0x60] sm:$0xff]
      %v2837 = vld [vmem:[%s3 + $0x68] sm:$0xff]
      %v2838 = vld [vmem:[%s3 + $0x70] sm:$0xff]
      %v2839 = vld [vmem:[%s3 + $0x78] sm:$0xff]
      %2840 = vmatprep.subr.mxu0 0.0
      %2841 = vmatpush1.msra.mxu0 %v2583
      %2842 = vmatprep.subr.mxu0 0.0
      %2843 = vmatpush1.msra.mxu0 %v2582
      %2844 = vmatprep.subr.mxu0 0.0
      %2845 = vmatpush1.msra.mxu0 %v2581
      %2846 = vmatprep.subr.mxu0 0.0
      %2847 = vmatpush1.msra.mxu0 %v2580
      %2848 = vmatprep.subr.mxu0 0.0
      %2849 = vmatpush1.msra.mxu0 %v2579
      %2850 = vmatprep.subr.mxu0 0.0
      %2851 = vmatpush1.msra.mxu0 %v2578
      %2852 = vmatprep.subr.mxu0 0.0
      %2853 = vmatpush1.msra.mxu0 %v2577
      %2854 = vmatprep.subr.mxu0 0.0
      %2855 = vmatpush1.msra.mxu0 %v2576
      %2856 = vmatprep.subr.mxu0 0.0
      %2857 = vmatpush1.msra.mxu0 %v2575
      %2858 = vmatprep.subr.mxu0 0.0
      %2859 = vmatpush1.msra.mxu0 %v2574
      %2860 = vmatprep.subr.mxu0 0.0
      %2861 = vmatpush1.msra.mxu0 %v2573
      %2862 = vmatprep.subr.mxu0 0.0
      %2863 = vmatpush1.msra.mxu0 %v2572
      %2864 = vmatprep.subr.mxu0 0.0
      %2865 = vmatpush1.msra.mxu0 %v2571
      %2866 = vmatprep.subr.mxu0 0.0
      %2867 = vmatpush1.msra.mxu0 %v2570
      %2868 = vmatprep.subr.mxu0 0.0
      %2869 = vmatpush1.msra.mxu0 %v2569
      %2870 = vmatprep.subr.mxu0 0.0
      %2871 = vmatpush1.msra.mxu0 %v2568
      %2872 = vmatprep.subr.mxu0 0.0
      %2873 = vmatpush2.msra.mxu0 %v2599
      %2874 = vmatprep.subr.mxu0 0.0
      %2875 = vmatpush2.msra.mxu0 %v2598
      %2876 = vmatprep.subr.mxu0 0.0
      %2877 = vmatpush2.msra.mxu0 %v2597
      %2878 = vmatprep.subr.mxu0 0.0
      %2879 = vmatpush2.msra.mxu0 %v2596
      %2880 = vmatprep.subr.mxu0 0.0
      %2881 = vmatpush2.msra.mxu0 %v2595
      %2882 = vmatprep.subr.mxu0 0.0
      %2883 = vmatpush2.msra.mxu0 %v2594
      %2884 = vmatprep.subr.mxu0 0.0
      %2885 = vmatpush2.msra.mxu0 %v2593
      %2886 = vmatprep.subr.mxu0 0.0
      %2887 = vmatpush2.msra.mxu0 %v2592
      %2888 = vmatprep.subr.mxu0 0.0
      %2889 = vmatpush2.msra.mxu0 %v2591
      %2890 = vmatprep.subr.mxu0 0.0
      %2891 = vmatpush2.msra.mxu0 %v2590
      %2892 = vmatprep.subr.mxu0 0.0
      %2893 = vmatpush2.msra.mxu0 %v2589
      %2894 = vmatprep.subr.mxu0 0.0
      %2895 = vmatpush2.msra.mxu0 %v2588
      %2896 = vmatprep.subr.mxu0 0.0
      %2897 = vmatpush2.msra.mxu0 %v2587
      %2898 = vmatprep.subr.mxu0 0.0
      %2899 = vmatpush2.msra.mxu0 %v2586
      %2900 = vmatprep.subr.mxu0 0.0
      %2901 = vmatpush2.msra.mxu0 %v2585
      %2902 = vmatprep.subr.mxu0 0.0
      %2903 = vmatpush2.msra.mxu0 %v2584
      %2904 = vmatprep.mubr.f32.mxu0 %v2825
      %2905 = vmatmul.mubr.f32.gmra.mxu0 %v2824
      %v2906 = vpop.f32.mrf.mxu0
      %v2907 = vadd.f32 0.0, %v2906
      %v2908 = vpop.f32.mrf.mxu0
      %2909 = vdwg.mxu0
      %2910 = vmatprep.subr.mxu0 0.0
      %2911 = vmatpush1.msra.mxu0 %v2615
      %2912 = vmatprep.subr.mxu0 0.0
      %2913 = vmatpush1.msra.mxu0 %v2614
      %2914 = vmatprep.subr.mxu0 0.0
      %2915 = vmatpush1.msra.mxu0 %v2613
      %2916 = vmatprep.subr.mxu0 0.0
      %2917 = vmatpush1.msra.mxu0 %v2612
      %2918 = vmatprep.subr.mxu0 0.0
      %2919 = vmatpush1.msra.mxu0 %v2611
      %2920 = vmatprep.subr.mxu0 0.0
      %2921 = vmatpush1.msra.mxu0 %v2610
      %2922 = vmatprep.subr.mxu0 0.0
      %2923 = vmatpush1.msra.mxu0 %v2609
      %2924 = vmatprep.subr.mxu0 0.0
      %2925 = vmatpush1.msra.mxu0 %v2608
      %2926 = vmatprep.subr.mxu0 0.0
      %2927 = vmatpush1.msra.mxu0 %v2607
      %2928 = vmatprep.subr.mxu0 0.0
      %2929 = vmatpush1.msra.mxu0 %v2606
      %2930 = vmatprep.subr.mxu0 0.0
      %2931 = vmatpush1.msra.mxu0 %v2605
      %2932 = vmatprep.subr.mxu0 0.0
      %2933 = vmatpush1.msra.mxu0 %v2604
      %2934 = vmatprep.subr.mxu0 0.0
      %2935 = vmatpush1.msra.mxu0 %v2603
      %2936 = vmatprep.subr.mxu0 0.0
      %2937 = vmatpush1.msra.mxu0 %v2602
      %2938 = vmatprep.subr.mxu0 0.0
      %2939 = vmatpush1.msra.mxu0 %v2601
      %2940 = vmatprep.subr.mxu0 0.0
      %2941 = vmatpush1.msra.mxu0 %v2600
      %2942 = vmatprep.subr.mxu0 0.0
      %2943 = vmatpush2.msra.mxu0 %v2631
      %2944 = vmatprep.subr.mxu0 0.0
      %2945 = vmatpush2.msra.mxu0 %v2630
      %2946 = vmatprep.subr.mxu0 0.0
      %2947 = vmatpush2.msra.mxu0 %v2629
      %2948 = vmatprep.subr.mxu0 0.0
      %2949 = vmatpush2.msra.mxu0 %v2628
      %2950 = vmatprep.subr.mxu0 0.0
      %2951 = vmatpush2.msra.mxu0 %v2627
      %2952 = vmatprep.subr.mxu0 0.0
      %2953 = vmatpush2.msra.mxu0 %v2626
      %2954 = vmatprep.subr.mxu0 0.0
      %2955 = vmatpush2.msra.mxu0 %v2625
      %2956 = vmatprep.subr.mxu0 0.0
      %2957 = vmatpush2.msra.mxu0 %v2624
      %2958 = vmatprep.subr.mxu0 0.0
      %2959 = vmatpush2.msra.mxu0 %v2623
      %2960 = vmatprep.subr.mxu0 0.0
      %2961 = vmatpush2.msra.mxu0 %v2622
      %2962 = vmatprep.subr.mxu0 0.0
      %2963 = vmatpush2.msra.mxu0 %v2621
      %2964 = vmatprep.subr.mxu0 0.0
      %2965 = vmatpush2.msra.mxu0 %v2620
      %2966 = vmatprep.subr.mxu0 0.0
      %2967 = vmatpush2.msra.mxu0 %v2619
      %2968 = vmatprep.subr.mxu0 0.0
      %2969 = vmatpush2.msra.mxu0 %v2618
      %2970 = vmatprep.subr.mxu0 0.0
      %2971 = vmatpush2.msra.mxu0 %v2617
      %2972 = vmatprep.subr.mxu0 0.0
      %2973 = vmatpush2.msra.mxu0 %v2616
      %2974 = vmatprep.mubr.f32.mxu0 %v2827
      %2975 = vmatmul.mubr.f32.gmra.mxu0 %v2826
      %v2976 = vpop.f32.mrf.mxu0
      %v2977 = vadd.f32 %v2907, %v2976
      %v2978 = vpop.f32.mrf.mxu0
      %2979 = vdwg.mxu0
      %2980 = vmatprep.subr.mxu0 0.0
      %2981 = vmatpush1.msra.mxu0 %v2647
      %2982 = vmatprep.subr.mxu0 0.0
      %2983 = vmatpush1.msra.mxu0 %v2646
      %2984 = vmatprep.subr.mxu0 0.0
      %2985 = vmatpush1.msra.mxu0 %v2645
      %2986 = vmatprep.subr.mxu0 0.0
      %2987 = vmatpush1.msra.mxu0 %v2644
      %2988 = vmatprep.subr.mxu0 0.0
      %2989 = vmatpush1.msra.mxu0 %v2643
      %2990 = vmatprep.subr.mxu0 0.0
      %2991 = vmatpush1.msra.mxu0 %v2642
      %2992 = vmatprep.subr.mxu0 0.0
      %2993 = vmatpush1.msra.mxu0 %v2641
      %2994 = vmatprep.subr.mxu0 0.0
      %2995 = vmatpush1.msra.mxu0 %v2640
      %2996 = vmatprep.subr.mxu0 0.0
      %2997 = vmatpush1.msra.mxu0 %v2639
      %2998 = vmatprep.subr.mxu0 0.0
      %2999 = vmatpush1.msra.mxu0 %v2638
      %3000 = vmatprep.subr.mxu0 0.0
      %3001 = vmatpush1.msra.mxu0 %v2637
      %3002 = vmatprep.subr.mxu0 0.0
      %3003 = vmatpush1.msra.mxu0 %v2636
      %3004 = vmatprep.subr.mxu0 0.0
      %3005 = vmatpush1.msra.mxu0 %v2635
      %3006 = vmatprep.subr.mxu0 0.0
      %3007 = vmatpush1.msra.mxu0 %v2634
      %3008 = vmatprep.subr.mxu0 0.0
      %3009 = vmatpush1.msra.mxu0 %v2633
      %3010 = vmatprep.subr.mxu0 0.0
      %3011 = vmatpush1.msra.mxu0 %v2632
      %3012 = vmatprep.subr.mxu0 0.0
      %3013 = vmatpush2.msra.mxu0 %v2663
      %3014 = vmatprep.subr.mxu0 0.0
      %3015 = vmatpush2.msra.mxu0 %v2662
      %3016 = vmatprep.subr.mxu0 0.0
      %3017 = vmatpush2.msra.mxu0 %v2661
      %3018 = vmatprep.subr.mxu0 0.0
      %3019 = vmatpush2.msra.mxu0 %v2660
      %3020 = vmatprep.subr.mxu0 0.0
      %3021 = vmatpush2.msra.mxu0 %v2659
      %3022 = vmatprep.subr.mxu0 0.0
      %3023 = vmatpush2.msra.mxu0 %v2658
      %3024 = vmatprep.subr.mxu0 0.0
      %3025 = vmatpush2.msra.mxu0 %v2657
      %3026 = vmatprep.subr.mxu0 0.0
      %3027 = vmatpush2.msra.mxu0 %v2656
      %3028 = vmatprep.subr.mxu0 0.0
      %3029 = vmatpush2.msra.mxu0 %v2655
      %3030 = vmatprep.subr.mxu0 0.0
      %3031 = vmatpush2.msra.mxu0 %v2654
      %3032 = vmatprep.subr.mxu0 0.0
      %3033 = vmatpush2.msra.mxu0 %v2653
      %3034 = vmatprep.subr.mxu0 0.0
      %3035 = vmatpush2.msra.mxu0 %v2652
      %3036 = vmatprep.subr.mxu0 0.0
      %3037 = vmatpush2.msra.mxu0 %v2651
      %3038 = vmatprep.subr.mxu0 0.0
      %3039 = vmatpush2.msra.mxu0 %v2650
      %3040 = vmatprep.subr.mxu0 0.0
      %3041 = vmatpush2.msra.mxu0 %v2649
      %3042 = vmatprep.subr.mxu0 0.0
      %3043 = vmatpush2.msra.mxu0 %v2648
      %3044 = vmatprep.mubr.f32.mxu0 %v2829
      %3045 = vmatmul.mubr.f32.gmra.mxu0 %v2828
      %v3046 = vpop.f32.mrf.mxu0
      %v3047 = vadd.f32 %v2977, %v3046
      %v3048 = vpop.f32.mrf.mxu0
      %3049 = vdwg.mxu0
      %3050 = vmatprep.subr.mxu0 0.0
      %3051 = vmatpush1.msra.mxu0 %v2679
      %3052 = vmatprep.subr.mxu0 0.0
      %3053 = vmatpush1.msra.mxu0 %v2678
      %3054 = vmatprep.subr.mxu0 0.0
      %3055 = vmatpush1.msra.mxu0 %v2677
      %3056 = vmatprep.subr.mxu0 0.0
      %3057 = vmatpush1.msra.mxu0 %v2676
      %3058 = vmatprep.subr.mxu0 0.0
      %3059 = vmatpush1.msra.mxu0 %v2675
      %3060 = vmatprep.subr.mxu0 0.0
      %3061 = vmatpush1.msra.mxu0 %v2674
      %3062 = vmatprep.subr.mxu0 0.0
      %3063 = vmatpush1.msra.mxu0 %v2673
      %3064 = vmatprep.subr.mxu0 0.0
      %3065 = vmatpush1.msra.mxu0 %v2672
      %3066 = vmatprep.subr.mxu0 0.0
      %3067 = vmatpush1.msra.mxu0 %v2671
      %3068 = vmatprep.subr.mxu0 0.0
      %3069 = vmatpush1.msra.mxu0 %v2670
      %3070 = vmatprep.subr.mxu0 0.0
      %3071 = vmatpush1.msra.mxu0 %v2669
      %3072 = vmatprep.subr.mxu0 0.0
      %3073 = vmatpush1.msra.mxu0 %v2668
      %3074 = vmatprep.subr.mxu0 0.0
      %3075 = vmatpush1.msra.mxu0 %v2667
      %3076 = vmatprep.subr.mxu0 0.0
      %3077 = vmatpush1.msra.mxu0 %v2666
      %3078 = vmatprep.subr.mxu0 0.0
      %3079 = vmatpush1.msra.mxu0 %v2665
      %3080 = vmatprep.subr.mxu0 0.0
      %3081 = vmatpush1.msra.mxu0 %v2664
      %3082 = vmatprep.subr.mxu0 0.0
      %3083 = vmatpush2.msra.mxu0 %v2695
      %3084 = vmatprep.subr.mxu0 0.0
      %3085 = vmatpush2.msra.mxu0 %v2694
      %3086 = vmatprep.subr.mxu0 0.0
      %3087 = vmatpush2.msra.mxu0 %v2693
      %3088 = vmatprep.subr.mxu0 0.0
      %3089 = vmatpush2.msra.mxu0 %v2692
      %3090 = vmatprep.subr.mxu0 0.0
      %3091 = vmatpush2.msra.mxu0 %v2691
      %3092 = vmatprep.subr.mxu0 0.0
      %3093 = vmatpush2.msra.mxu0 %v2690
      %3094 = vmatprep.subr.mxu0 0.0
      %3095 = vmatpush2.msra.mxu0 %v2689
      %3096 = vmatprep.subr.mxu0 0.0
      %3097 = vmatpush2.msra.mxu0 %v2688
      %3098 = vmatprep.subr.mxu0 0.0
      %3099 = vmatpush2.msra.mxu0 %v2687
      %3100 = vmatprep.subr.mxu0 0.0
      %3101 = vmatpush2.msra.mxu0 %v2686
      %3102 = vmatprep.subr.mxu0 0.0
      %3103 = vmatpush2.msra.mxu0 %v2685
      %3104 = vmatprep.subr.mxu0 0.0
      %3105 = vmatpush2.msra.mxu0 %v2684
      %3106 = vmatprep.subr.mxu0 0.0
      %3107 = vmatpush2.msra.mxu0 %v2683
      %3108 = vmatprep.subr.mxu0 0.0
      %3109 = vmatpush2.msra.mxu0 %v2682
      %3110 = vmatprep.subr.mxu0 0.0
      %3111 = vmatpush2.msra.mxu0 %v2681
      %3112 = vmatprep.subr.mxu0 0.0
      %3113 = vmatpush2.msra.mxu0 %v2680
      %3114 = vmatprep.mubr.f32.mxu0 %v2831
      %3115 = vmatmul.mubr.f32.gmra.mxu0 %v2830
      %v3116 = vpop.f32.mrf.mxu0
      %v3117 = vadd.f32 %v3047, %v3116
      %v3118 = vpop.f32.mrf.mxu0
      %3119 = vdwg.mxu0
      %3120 = vmatprep.subr.mxu0 0.0
      %3121 = vmatpush1.msra.mxu0 %v2711
      %3122 = vmatprep.subr.mxu0 0.0
      %3123 = vmatpush1.msra.mxu0 %v2710
      %3124 = vmatprep.subr.mxu0 0.0
      %3125 = vmatpush1.msra.mxu0 %v2709
      %3126 = vmatprep.subr.mxu0 0.0
      %3127 = vmatpush1.msra.mxu0 %v2708
      %3128 = vmatprep.subr.mxu0 0.0
      %3129 = vmatpush1.msra.mxu0 %v2707
      %3130 = vmatprep.subr.mxu0 0.0
      %3131 = vmatpush1.msra.mxu0 %v2706
      %3132 = vmatprep.subr.mxu0 0.0
      %3133 = vmatpush1.msra.mxu0 %v2705
      %3134 = vmatprep.subr.mxu0 0.0
      %3135 = vmatpush1.msra.mxu0 %v2704
      %3136 = vmatprep.subr.mxu0 0.0
      %3137 = vmatpush1.msra.mxu0 %v2703
      %3138 = vmatprep.subr.mxu0 0.0
      %3139 = vmatpush1.msra.mxu0 %v2702
      %3140 = vmatprep.subr.mxu0 0.0
      %3141 = vmatpush1.msra.mxu0 %v2701
      %3142 = vmatprep.subr.mxu0 0.0
      %3143 = vmatpush1.msra.mxu0 %v2700
      %3144 = vmatprep.subr.mxu0 0.0
      %3145 = vmatpush1.msra.mxu0 %v2699
      %3146 = vmatprep.subr.mxu0 0.0
      %3147 = vmatpush1.msra.mxu0 %v2698
      %3148 = vmatprep.subr.mxu0 0.0
      %3149 = vmatpush1.msra.mxu0 %v2697
      %3150 = vmatprep.subr.mxu0 0.0
      %3151 = vmatpush1.msra.mxu0 %v2696
      %3152 = vmatprep.subr.mxu0 0.0
      %3153 = vmatpush2.msra.mxu0 %v2727
      %3154 = vmatprep.subr.mxu0 0.0
      %3155 = vmatpush2.msra.mxu0 %v2726
      %3156 = vmatprep.subr.mxu0 0.0
      %3157 = vmatpush2.msra.mxu0 %v2725
      %3158 = vmatprep.subr.mxu0 0.0
      %3159 = vmatpush2.msra.mxu0 %v2724
      %3160 = vmatprep.subr.mxu0 0.0
      %3161 = vmatpush2.msra.mxu0 %v2723
      %3162 = vmatprep.subr.mxu0 0.0
      %3163 = vmatpush2.msra.mxu0 %v2722
      %3164 = vmatprep.subr.mxu0 0.0
      %3165 = vmatpush2.msra.mxu0 %v2721
      %3166 = vmatprep.subr.mxu0 0.0
      %3167 = vmatpush2.msra.mxu0 %v2720
      %3168 = vmatprep.subr.mxu0 0.0
      %3169 = vmatpush2.msra.mxu0 %v2719
      %3170 = vmatprep.subr.mxu0 0.0
      %3171 = vmatpush2.msra.mxu0 %v2718
      %3172 = vmatprep.subr.mxu0 0.0
      %3173 = vmatpush2.msra.mxu0 %v2717
      %3174 = vmatprep.subr.mxu0 0.0
      %3175 = vmatpush2.msra.mxu0 %v2716
      %3176 = vmatprep.subr.mxu0 0.0
      %3177 = vmatpush2.msra.mxu0 %v2715
      %3178 = vmatprep.subr.mxu0 0.0
      %3179 = vmatpush2.msra.mxu0 %v2714
      %3180 = vmatprep.subr.mxu0 0.0
      %3181 = vmatpush2.msra.mxu0 %v2713
      %3182 = vmatprep.subr.mxu0 0.0
      %3183 = vmatpush2.msra.mxu0 %v2712
      %3184 = vmatprep.mubr.f32.mxu0 %v2833
      %3185 = vmatmul.mubr.f32.gmra.mxu0 %v2832
      %v3186 = vpop.f32.mrf.mxu0
      %v3187 = vadd.f32 %v3117, %v3186
      %v3188 = vpop.f32.mrf.mxu0
      %3189 = vdwg.mxu0
      %3190 = vmatprep.subr.mxu0 0.0
      %3191 = vmatpush1.msra.mxu0 %v2743
      %3192 = vmatprep.subr.mxu0 0.0
      %3193 = vmatpush1.msra.mxu0 %v2742
      %3194 = vmatprep.subr.mxu0 0.0
      %3195 = vmatpush1.msra.mxu0 %v2741
      %3196 = vmatprep.subr.mxu0 0.0
      %3197 = vmatpush1.msra.mxu0 %v2740
      %3198 = vmatprep.subr.mxu0 0.0
      %3199 = vmatpush1.msra.mxu0 %v2739
      %3200 = vmatprep.subr.mxu0 0.0
      %3201 = vmatpush1.msra.mxu0 %v2738
      %3202 = vmatprep.subr.mxu0 0.0
      %3203 = vmatpush1.msra.mxu0 %v2737
      %3204 = vmatprep.subr.mxu0 0.0
      %3205 = vmatpush1.msra.mxu0 %v2736
      %3206 = vmatprep.subr.mxu0 0.0
      %3207 = vmatpush1.msra.mxu0 %v2735
      %3208 = vmatprep.subr.mxu0 0.0
      %3209 = vmatpush1.msra.mxu0 %v2734
      %3210 = vmatprep.subr.mxu0 0.0
      %3211 = vmatpush1.msra.mxu0 %v2733
      %3212 = vmatprep.subr.mxu0 0.0
      %3213 = vmatpush1.msra.mxu0 %v2732
      %3214 = vmatprep.subr.mxu0 0.0
      %3215 = vmatpush1.msra.mxu0 %v2731
      %3216 = vmatprep.subr.mxu0 0.0
      %3217 = vmatpush1.msra.mxu0 %v2730
      %3218 = vmatprep.subr.mxu0 0.0
      %3219 = vmatpush1.msra.mxu0 %v2729
      %3220 = vmatprep.subr.mxu0 0.0
      %3221 = vmatpush1.msra.mxu0 %v2728
      %3222 = vmatprep.subr.mxu0 0.0
      %3223 = vmatpush2.msra.mxu0 %v2759
      %3224 = vmatprep.subr.mxu0 0.0
      %3225 = vmatpush2.msra.mxu0 %v2758
      %3226 = vmatprep.subr.mxu0 0.0
      %3227 = vmatpush2.msra.mxu0 %v2757
      %3228 = vmatprep.subr.mxu0 0.0
      %3229 = vmatpush2.msra.mxu0 %v2756
      %3230 = vmatprep.subr.mxu0 0.0
      %3231 = vmatpush2.msra.mxu0 %v2755
      %3232 = vmatprep.subr.mxu0 0.0
      %3233 = vmatpush2.msra.mxu0 %v2754
      %3234 = vmatprep.subr.mxu0 0.0
      %3235 = vmatpush2.msra.mxu0 %v2753
      %3236 = vmatprep.subr.mxu0 0.0
      %3237 = vmatpush2.msra.mxu0 %v2752
      %3238 = vmatprep.subr.mxu0 0.0
      %3239 = vmatpush2.msra.mxu0 %v2751
      %3240 = vmatprep.subr.mxu0 0.0
      %3241 = vmatpush2.msra.mxu0 %v2750
      %3242 = vmatprep.subr.mxu0 0.0
      %3243 = vmatpush2.msra.mxu0 %v2749
      %3244 = vmatprep.subr.mxu0 0.0
      %3245 = vmatpush2.msra.mxu0 %v2748
      %3246 = vmatprep.subr.mxu0 0.0
      %3247 = vmatpush2.msra.mxu0 %v2747
      %3248 = vmatprep.subr.mxu0 0.0
      %3249 = vmatpush2.msra.mxu0 %v2746
      %3250 = vmatprep.subr.mxu0 0.0
      %3251 = vmatpush2.msra.mxu0 %v2745
      %3252 = vmatprep.subr.mxu0 0.0
      %3253 = vmatpush2.msra.mxu0 %v2744
      %3254 = vmatprep.mubr.f32.mxu0 %v2835
      %3255 = vmatmul.mubr.f32.gmra.mxu0 %v2834
      %v3256 = vpop.f32.mrf.mxu0
      %v3257 = vadd.f32 %v3187, %v3256
      %v3258 = vpop.f32.mrf.mxu0
      %3259 = vdwg.mxu0
      %3260 = vmatprep.subr.mxu0 0.0
      %3261 = vmatpush1.msra.mxu0 %v2775
      %3262 = vmatprep.subr.mxu0 0.0
      %3263 = vmatpush1.msra.mxu0 %v2774
      %3264 = vmatprep.subr.mxu0 0.0
      %3265 = vmatpush1.msra.mxu0 %v2773
      %3266 = vmatprep.subr.mxu0 0.0
      %3267 = vmatpush1.msra.mxu0 %v2772
      %3268 = vmatprep.subr.mxu0 0.0
      %3269 = vmatpush1.msra.mxu0 %v2771
      %3270 = vmatprep.subr.mxu0 0.0
      %3271 = vmatpush1.msra.mxu0 %v2770
      %3272 = vmatprep.subr.mxu0 0.0
      %3273 = vmatpush1.msra.mxu0 %v2769
      %3274 = vmatprep.subr.mxu0 0.0
      %3275 = vmatpush1.msra.mxu0 %v2768
      %3276 = vmatprep.subr.mxu0 0.0
      %3277 = vmatpush1.msra.mxu0 %v2767
      %3278 = vmatprep.subr.mxu0 0.0
      %3279 = vmatpush1.msra.mxu0 %v2766
      %3280 = vmatprep.subr.mxu0 0.0
      %3281 = vmatpush1.msra.mxu0 %v2765
      %3282 = vmatprep.subr.mxu0 0.0
      %3283 = vmatpush1.msra.mxu0 %v2764
      %3284 = vmatprep.subr.mxu0 0.0
      %3285 = vmatpush1.msra.mxu0 %v2763
      %3286 = vmatprep.subr.mxu0 0.0
      %3287 = vmatpush1.msra.mxu0 %v2762
      %3288 = vmatprep.subr.mxu0 0.0
      %3289 = vmatpush1.msra.mxu0 %v2761
      %3290 = vmatprep.subr.mxu0 0.0
      %3291 = vmatpush1.msra.mxu0 %v2760
      %3292 = vmatprep.subr.mxu0 0.0
      %3293 = vmatpush2.msra.mxu0 %v2791
      %3294 = vmatprep.subr.mxu0 0.0
      %3295 = vmatpush2.msra.mxu0 %v2790
      %3296 = vmatprep.subr.mxu0 0.0
      %3297 = vmatpush2.msra.mxu0 %v2789
      %3298 = vmatprep.subr.mxu0 0.0
      %3299 = vmatpush2.msra.mxu0 %v2788
      %3300 = vmatprep.subr.mxu0 0.0
      %3301 = vmatpush2.msra.mxu0 %v2787
      %3302 = vmatprep.subr.mxu0 0.0
      %3303 = vmatpush2.msra.mxu0 %v2786
      %3304 = vmatprep.subr.mxu0 0.0
      %3305 = vmatpush2.msra.mxu0 %v2785
      %3306 = vmatprep.subr.mxu0 0.0
      %3307 = vmatpush2.msra.mxu0 %v2784
      %3308 = vmatprep.subr.mxu0 0.0
      %3309 = vmatpush2.msra.mxu0 %v2783
      %3310 = vmatprep.subr.mxu0 0.0
      %3311 = vmatpush2.msra.mxu0 %v2782
      %3312 = vmatprep.subr.mxu0 0.0
      %3313 = vmatpush2.msra.mxu0 %v2781
      %3314 = vmatprep.subr.mxu0 0.0
      %3315 = vmatpush2.msra.mxu0 %v2780
      %3316 = vmatprep.subr.mxu0 0.0
      %3317 = vmatpush2.msra.mxu0 %v2779
      %3318 = vmatprep.subr.mxu0 0.0
      %3319 = vmatpush2.msra.mxu0 %v2778
      %3320 = vmatprep.subr.mxu0 0.0
      %3321 = vmatpush2.msra.mxu0 %v2777
      %3322 = vmatprep.subr.mxu0 0.0
      %3323 = vmatpush2.msra.mxu0 %v2776
      %3324 = vmatprep.mubr.f32.mxu0 %v2837
      %3325 = vmatmul.mubr.f32.gmra.mxu0 %v2836
      %v3326 = vpop.f32.mrf.mxu0
      %v3327 = vadd.f32 %v3257, %v3326
      %v3328 = vpop.f32.mrf.mxu0
      %3329 = vdwg.mxu0
      %3330 = vmatprep.subr.mxu0 0.0
      %3331 = vmatpush1.msra.mxu0 %v2807
      %3332 = vmatprep.subr.mxu0 0.0
      %3333 = vmatpush1.msra.mxu0 %v2806
      %3334 = vmatprep.subr.mxu0 0.0
      %3335 = vmatpush1.msra.mxu0 %v2805
      %3336 = vmatprep.subr.mxu0 0.0
      %3337 = vmatpush1.msra.mxu0 %v2804
      %3338 = vmatprep.subr.mxu0 0.0
      %3339 = vmatpush1.msra.mxu0 %v2803
      %3340 = vmatprep.subr.mxu0 0.0
      %3341 = vmatpush1.msra.mxu0 %v2802
      %3342 = vmatprep.subr.mxu0 0.0
      %3343 = vmatpush1.msra.mxu0 %v2801
      %3344 = vmatprep.subr.mxu0 0.0
      %3345 = vmatpush1.msra.mxu0 %v2800
      %3346 = vmatprep.subr.mxu0 0.0
      %3347 = vmatpush1.msra.mxu0 %v2799
      %3348 = vmatprep.subr.mxu0 0.0
      %3349 = vmatpush1.msra.mxu0 %v2798
      %3350 = vmatprep.subr.mxu0 0.0
      %3351 = vmatpush1.msra.mxu0 %v2797
      %3352 = vmatprep.subr.mxu0 0.0
      %3353 = vmatpush1.msra.mxu0 %v2796
      %3354 = vmatprep.subr.mxu0 0.0
      %3355 = vmatpush1.msra.mxu0 %v2795
      %3356 = vmatprep.subr.mxu0 0.0
      %3357 = vmatpush1.msra.mxu0 %v2794
      %3358 = vmatprep.subr.mxu0 0.0
      %3359 = vmatpush1.msra.mxu0 %v2793
      %3360 = vmatprep.subr.mxu0 0.0
      %3361 = vmatpush1.msra.mxu0 %v2792
      %3362 = vmatprep.subr.mxu0 0.0
      %3363 = vmatpush2.msra.mxu0 %v2823
      %3364 = vmatprep.subr.mxu0 0.0
      %3365 = vmatpush2.msra.mxu0 %v2822
      %3366 = vmatprep.subr.mxu0 0.0
      %3367 = vmatpush2.msra.mxu0 %v2821
      %3368 = vmatprep.subr.mxu0 0.0
      %3369 = vmatpush2.msra.mxu0 %v2820
      %3370 = vmatprep.subr.mxu0 0.0
      %3371 = vmatpush2.msra.mxu0 %v2819
      %3372 = vmatprep.subr.mxu0 0.0
      %3373 = vmatpush2.msra.mxu0 %v2818
      %3374 = vmatprep.subr.mxu0 0.0
      %3375 = vmatpush2.msra.mxu0 %v2817
      %3376 = vmatprep.subr.mxu0 0.0
      %3377 = vmatpush2.msra.mxu0 %v2816
      %3378 = vmatprep.subr.mxu0 0.0
      %3379 = vmatpush2.msra.mxu0 %v2815
      %3380 = vmatprep.subr.mxu0 0.0
      %3381 = vmatpush2.msra.mxu0 %v2814
      %3382 = vmatprep.subr.mxu0 0.0
      %3383 = vmatpush2.msra.mxu0 %v2813
      %3384 = vmatprep.subr.mxu0 0.0
      %3385 = vmatpush2.msra.mxu0 %v2812
      %3386 = vmatprep.subr.mxu0 0.0
      %3387 = vmatpush2.msra.mxu0 %v2811
      %3388 = vmatprep.subr.mxu0 0.0
      %3389 = vmatpush2.msra.mxu0 %v2810
      %3390 = vmatprep.subr.mxu0 0.0
      %3391 = vmatpush2.msra.mxu0 %v2809
      %3392 = vmatprep.subr.mxu0 0.0
      %3393 = vmatpush2.msra.mxu0 %v2808
      %3394 = vmatprep.mubr.f32.mxu0 %v2839
      %3395 = vmatmul.mubr.f32.gmra.mxu0 %v2838
      %v3396 = vpop.f32.mrf.mxu0
      %v3397 = vadd.f32 %v3327, %v3396
      %v3398 = vpop.f32.mrf.mxu0
      %3399 = vdwg.mxu0
      %3400 = vst [vmem:[%s197] sm:$0xff] %v3397
      %p3401 = scmp.lt.s32.totalorder %s15, 1
      %s3402 = scalar_select %p3401, %s15, 1
      %s3403 = smul.addr %s3402, 8
      %s3404 = scalar_lea.vmem %s4, %s3403
      // Predicated region
      $region37: #{tiny_faster_rcnn_forward.3} parent=35 // pred_check
        %p3405 = pneg %p122
      $region38: #{tiny_faster_rcnn_forward.3} parent=35 // pred_check_branch
        %3407 = sbr.rel (%p3405) target = $region40
      $region39: #{tiny_faster_rcnn_forward.3} parent=35 // pred_region
        _
      $region40: #{tiny_faster_rcnn_forward.3} parent=35 // pred_fallthru
        _
    $region36: #{tiny_faster_rcnn_forward.3} parent=5 // pred_fallthru
      _
    %p3408 = scmp.le.s32.totalorder 2, %s10
    // Predicated region
    $region41: #{tiny_faster_rcnn_forward.3} parent=5 // pred_check
      %p3409 = pneg %p3408
    $region42: #{tiny_faster_rcnn_forward.3} parent=5 // pred_check_branch
      %3411 = sbr.rel (%p3409) target = $region44
    $region43: #{tiny_faster_rcnn_forward.3} parent=5 // pred_region
      %s3412 = ssub.s32 %s10, 2
      // Predicated region
      $region45: #{tiny_faster_rcnn_forward.3} parent=43 // pred_check
        %p3413 = pneg %p128
      $region46: #{tiny_faster_rcnn_forward.3} parent=43 // pred_check_branch
        %3415 = sbr.rel (%p3413) target = $region48
      $region47: #{tiny_faster_rcnn_forward.3} parent=43 // pred_region
        %p3416 = scmp.lt.s32.totalorder %s16, 1
        %s3417 = scalar_select %p3416, %s16, 1
        %s3418 = smul.addr %s3417, 8
        %s3419 = scalar_lea.vmem %s4, %s3418
      $region48: #{tiny_faster_rcnn_forward.3} parent=43 // pred_fallthru
        _
    $region44: #{tiny_faster_rcnn_forward.3} parent=5 // pred_fallthru
      _
  $region6: #{tiny_faster_rcnn_forward.3} parent=0 // loop_footer
    %s14 = sadd.s32 1, %s10
  $region7: #{tiny_faster_rcnn_forward.3} parent=0 // loop_footer_branch
    %9 = sbr.rel target = $region3
  $region8: #{tiny_faster_rcnn_forward.3} parent=0 // loop_exit
    _

// kernel: tiny_faster_rcnn_forward.4
$region0: #{tiny_faster_rcnn_forward.4}
  #allocation0 [shape = 'u32[]', space=smem, size = 0x4, offset = 0x4, fixed_abs, tag = 'smem constant byte address 0x4 - core index']
  #allocation1 [shape = 'u32[144,128]{1,0:T(1,128)}', space=vmem, size = 0x12000, scoped, tag = 'internal scratch']
  %s0 = inlined_call_operand.vmem [shape: f32[16,288], index: 0, kind: input, shape index: {}]
  %s1 = inlined_call_operand.vmem [shape: f32[288,32], index: 1, kind: input, shape index: {}]
  %s2 = inlined_call_operand.vmem [shape: f32[1,32], index: 2, kind: input, shape index: {}]
  %s3 = inlined_call_operand.vmem [shape: f32[32,4], index: 3, kind: input, shape index: {}]
  %s4 = inlined_call_operand.vmem [shape: f32[1,4], index: 4, kind: input, shape index: {}]
  %s5 = inlined_call_operand.vmem [shape: f32[32,16], index: 5, kind: input, shape index: {}]
  %s6 = inlined_call_operand.vmem [shape: f32[1,16], index: 6, kind: input, shape index: {}]
  %s7 = inlined_call_operand.vmem [shape: f32[16,4], index: 7, kind: output, shape index: {0}]
  %s8 = inlined_call_operand.vmem [shape: f32[16,16], index: 8, kind: output, shape index: {1}]
  %9 = xla_tuple %s7, %s8
  %s10 = sld [smem:[#allocation0]]
  $region46: #{tiny_faster_rcnn_forward.4} parent=0
    _
  %s12 = ssub.s32 1, %s10
  %s13 = scalar_select 0, %s12, %s10
  // Predicated region
  $region2: #{tiny_faster_rcnn_forward.4} parent=0 // pred_check
    _
  $region3: #{tiny_faster_rcnn_forward.4} parent=0 // pred_check_branch
    %15 = sbr.rel (0) target = $region5
  $region4: #{tiny_faster_rcnn_forward.4} parent=0 // pred_region
    _
  $region5: #{tiny_faster_rcnn_forward.4} parent=0 // pred_fallthru
    _
  // Predicated region
  $region6: #{tiny_faster_rcnn_forward.4} parent=0 // pred_check
    _
  $region7: #{tiny_faster_rcnn_forward.4} parent=0 // pred_check_branch
    %17 = sbr.rel (0) target = $region9
  $region8: #{tiny_faster_rcnn_forward.4} parent=0 // pred_region
    _
  $region9: #{tiny_faster_rcnn_forward.4} parent=0 // pred_fallthru
    _
  // Predicated region
  $region10: #{tiny_faster_rcnn_forward.4} parent=0 // pred_check
    _
  $region11: #{tiny_faster_rcnn_forward.4} parent=0 // pred_check_branch
    %19 = sbr.rel (0) target = $region13
  $region12: #{tiny_faster_rcnn_forward.4} parent=0 // pred_region
    _
  $region13: #{tiny_faster_rcnn_forward.4} parent=0 // pred_fallthru
    _
  // Predicated region
  $region14: #{tiny_faster_rcnn_forward.4} parent=0 // pred_check
    _
  $region15: #{tiny_faster_rcnn_forward.4} parent=0 // pred_check_branch
    %21 = sbr.rel (0) target = $region17
  $region16: #{tiny_faster_rcnn_forward.4} parent=0 // pred_region
    _
  $region17: #{tiny_faster_rcnn_forward.4} parent=0 // pred_fallthru
    _
  // Predicated region
  $region18: #{tiny_faster_rcnn_forward.4} parent=0 // pred_check
    _
  $region19: #{tiny_faster_rcnn_forward.4} parent=0 // pred_check_branch
    %23 = sbr.rel (0) target = $region21
  $region20: #{tiny_faster_rcnn_forward.4} parent=0 // pred_region
    _
  $region21: #{tiny_faster_rcnn_forward.4} parent=0 // pred_fallthru
    _
  // Predicated region
  $region22: #{tiny_faster_rcnn_forward.4} parent=0 // pred_check
    _
  $region23: #{tiny_faster_rcnn_forward.4} parent=0 // pred_check_branch
    %25 = sbr.rel (0) target = $region25
  $region24: #{tiny_faster_rcnn_forward.4} parent=0 // pred_region
    _
  $region25: #{tiny_faster_rcnn_forward.4} parent=0 // pred_fallthru
    _
  // Predicated region
  $region26: #{tiny_faster_rcnn_forward.4} parent=0 // pred_check
    _
  $region27: #{tiny_faster_rcnn_forward.4} parent=0 // pred_check_branch
    %27 = sbr.rel (0) target = $region29
  $region28: #{tiny_faster_rcnn_forward.4} parent=0 // pred_region
    _
  $region29: #{tiny_faster_rcnn_forward.4} parent=0 // pred_fallthru
    _
  %v28 = vld [vmem:[%s0] sm:$0xff]
  %v29 = vld [vmem:[%s0 + $0x8] sm:$0xff]
  %v30 = vld [vmem:[%s0 + $0x10] sm:$0xff]
  %v31 = vld [vmem:[%s0 + $0x18] sm:$0xff]
  %v32 = vld [vmem:[%s0 + $0x20] sm:$0xff]
  %v33 = vld [vmem:[%s0 + $0x28] sm:$0xff]
  %v34 = vld [vmem:[%s1] sm:$0xff]
  %v35 = vld [vmem:[%s1 + $0x8] sm:$0xff]
  %v36 = vld [vmem:[%s1 + $0x10] sm:$0xff]
  %v37 = vld [vmem:[%s1 + $0x18] sm:$0xff]
  %v38 = vld [vmem:[%s1 + $0x20] sm:$0xff]
  %v39 = vld [vmem:[%s1 + $0x28] sm:$0xff]
  %v40 = vld [vmem:[%s1 + $0x30] sm:$0xff]
  %v41 = vld [vmem:[%s1 + $0x38] sm:$0xff]
  %v42 = vld [vmem:[%s1 + $0x40] sm:$0xff]
  %v43 = vld [vmem:[%s1 + $0x48] sm:$0xff]
  %v44 = vld [vmem:[%s1 + $0x50] sm:$0xff]
  %v45 = vld [vmem:[%s1 + $0x58] sm:$0xff]
  %v46 = vld [vmem:[%s1 + $0x60] sm:$0xff]
  %v47 = vld [vmem:[%s1 + $0x68] sm:$0xff]
  %v48 = vld [vmem:[%s1 + $0x70] sm:$0xff]
  %v49 = vld [vmem:[%s1 + $0x78] sm:$0xff]
  %v50 = vld [vmem:[%s1 + $0x80] sm:$0xff]
  %v51 = vld [vmem:[%s1 + $0x88] sm:$0xff]
  %v52 = vld [vmem:[%s1 + $0x90] sm:$0xff]
  %v53 = vld [vmem:[%s1 + $0x98] sm:$0xff]
  %v54 = vld [vmem:[%s1 + $0xa0] sm:$0xff]
  %v55 = vld [vmem:[%s1 + $0xa8] sm:$0xff]
  %v56 = vld [vmem:[%s1 + $0xb0] sm:$0xff]
  %v57 = vld [vmem:[%s1 + $0xb8] sm:$0xff]
  %v58 = vld [vmem:[%s1 + $0xc0] sm:$0xff]
  %v59 = vld [vmem:[%s1 + $0xc8] sm:$0xff]
  %v60 = vld [vmem:[%s1 + $0xd0] sm:$0xff]
  %v61 = vld [vmem:[%s1 + $0xd8] sm:$0xff]
  %v62 = vld [vmem:[%s1 + $0xe0] sm:$0xff]
  %v63 = vld [vmem:[%s1 + $0xe8] sm:$0xff]
  %v64 = vld [vmem:[%s1 + $0xf0] sm:$0xff]
  %v65 = vld [vmem:[%s1 + $0xf8] sm:$0xff]
  %v66 = vld [vmem:[%s1 + $0x100] sm:$0xff]
  %v67 = vld [vmem:[%s1 + $0x108] sm:$0xff]
  %v68 = vld [vmem:[%s1 + $0x110] sm:$0xff]
  %v69 = vld [vmem:[%s1 + $0x118] sm:$0xff]
  %v70 = vld [vmem:[%s2] sm:$0x1]
  %v72 = vlaneseq
  %v73 = vshrl.u32 %v72, 7
  %v74 = vsub.s32 0, %v73
  %v75 = vrot.slane %v70, %v74
  %vm77 = vcmask 261120
  %v79 = vsel %vm77, %v30, 0
  %v82 = vsel %vm77, %v33, 0
  %84 = vmatprep.subr.mxu0 0.0
  %85 = vmatpush1.msra.mxu0 %v49
  %86 = vmatprep.subr.mxu0 0.0
  %87 = vmatpush1.msra.mxu0 %v48
  %88 = vmatprep.subr.mxu0 0.0
  %89 = vmatpush1.msra.mxu0 %v47
  %90 = vmatprep.subr.mxu0 0.0
  %91 = vmatpush1.msra.mxu0 %v46
  %92 = vmatprep.subr.mxu0 0.0
  %93 = vmatpush1.msra.mxu0 %v45
  %94 = vmatprep.subr.mxu0 0.0
  %95 = vmatpush1.msra.mxu0 %v44
  %96 = vmatprep.subr.mxu0 0.0
  %97 = vmatpush1.msra.mxu0 %v43
  %98 = vmatprep.subr.mxu0 0.0
  %99 = vmatpush1.msra.mxu0 %v42
  %100 = vmatprep.subr.mxu0 0.0
  %101 = vmatpush1.msra.mxu0 %v41
  %102 = vmatprep.subr.mxu0 0.0
  %103 = vmatpush1.msra.mxu0 %v40
  %104 = vmatprep.subr.mxu0 0.0
  %105 = vmatpush1.msra.mxu0 %v39
  %106 = vmatprep.subr.mxu0 0.0
  %107 = vmatpush1.msra.mxu0 %v38
  %108 = vmatprep.subr.mxu0 0.0
  %109 = vmatpush1.msra.mxu0 %v37
  %110 = vmatprep.subr.mxu0 0.0
  %111 = vmatpush1.msra.mxu0 %v36
  %112 = vmatprep.subr.mxu0 0.0
  %113 = vmatpush1.msra.mxu0 %v35
  %114 = vmatprep.subr.mxu0 0.0
  %115 = vmatpush1.msra.mxu0 %v34
  %116 = vmatprep.subr.mxu0 0.0
  %117 = vmatpush2.msra.mxu0 %v65
  %118 = vmatprep.subr.mxu0 0.0
  %119 = vmatpush2.msra.mxu0 %v64
  %120 = vmatprep.subr.mxu0 0.0
  %121 = vmatpush2.msra.mxu0 %v63
  %122 = vmatprep.subr.mxu0 0.0
  %123 = vmatpush2.msra.mxu0 %v62
  %124 = vmatprep.subr.mxu0 0.0
  %125 = vmatpush2.msra.mxu0 %v61
  %126 = vmatprep.subr.mxu0 0.0
  %127 = vmatpush2.msra.mxu0 %v60
  %128 = vmatprep.subr.mxu0 0.0
  %129 = vmatpush2.msra.mxu0 %v59
  %130 = vmatprep.subr.mxu0 0.0
  %131 = vmatpush2.msra.mxu0 %v58
  %132 = vmatprep.subr.mxu0 0.0
  %133 = vmatpush2.msra.mxu0 %v57
  %134 = vmatprep.subr.mxu0 0.0
  %135 = vmatpush2.msra.mxu0 %v56
  %136 = vmatprep.subr.mxu0 0.0
  %137 = vmatpush2.msra.mxu0 %v55
  %138 = vmatprep.subr.mxu0 0.0
  %139 = vmatpush2.msra.mxu0 %v54
  %140 = vmatprep.subr.mxu0 0.0
  %141 = vmatpush2.msra.mxu0 %v53
  %142 = vmatprep.subr.mxu0 0.0
  %143 = vmatpush2.msra.mxu0 %v52
  %144 = vmatprep.subr.mxu0 0.0
  %145 = vmatpush2.msra.mxu0 %v51
  %146 = vmatprep.subr.mxu0 0.0
  %147 = vmatpush2.msra.mxu0 %v50
  %148 = vmatprep.mubr.f32.mxu0 %v29
  %149 = vmatmul.mubr.f32.gmra.mxu0 %v28
  %v150 = vpop.f32.mrf.mxu0
  %v151 = vadd.f32 %v75, %v150
  %v152 = vpop.f32.mrf.mxu0
  %153 = vmatprep.mubr.f32.mxu0 %v32
  %154 = vmatmul.mubr.f32.gmra.mxu0 %v31
  %v155 = vpop.f32.mrf.mxu0
  %v156 = vadd.f32 %v75, %v155
  %v157 = vpop.f32.mrf.mxu0
  %158 = vdwg.mxu0
  %159 = vmatprep.subr.mxu0 0.0
  %160 = vmatpush1.msra.mxu0 0.0
  %161 = vmatprep.subr.mxu0 0.0
  %162 = vmatpush1.msra.mxu0 0.0
  %163 = vmatprep.subr.mxu0 0.0
  %164 = vmatpush1.msra.mxu0 0.0
  %165 = vmatprep.subr.mxu0 0.0
  %166 = vmatpush1.msra.mxu0 0.0
  %167 = vmatprep.subr.mxu0 0.0
  %168 = vmatpush1.msra.mxu0 0.0
  %169 = vmatprep.subr.mxu0 0.0
  %170 = vmatpush1.msra.mxu0 0.0
  %171 = vmatprep.subr.mxu0 0.0
  %172 = vmatpush1.msra.mxu0 0.0
  %173 = vmatprep.subr.mxu0 0.0
  %174 = vmatpush1.msra.mxu0 0.0
  %175 = vmatprep.subr.mxu0 0.0
  %176 = vmatpush1.msra.mxu0 0.0
  %177 = vmatprep.subr.mxu0 0.0
  %178 = vmatpush1.msra.mxu0 0.0
  %179 = vmatprep.subr.mxu0 0.0
  %180 = vmatpush1.msra.mxu0 0.0
  %181 = vmatprep.subr.mxu0 0.0
  %182 = vmatpush1.msra.mxu0 0.0
  %183 = vmatprep.subr.mxu0 0.0
  %184 = vmatpush1.msra.mxu0 %v69
  %185 = vmatprep.subr.mxu0 0.0
  %186 = vmatpush1.msra.mxu0 %v68
  %187 = vmatprep.subr.mxu0 0.0
  %188 = vmatpush1.msra.mxu0 %v67
  %189 = vmatprep.subr.mxu0 0.0
  %190 = vmatpush1.msra.mxu0 %v66
  %191 = vmatprep.subr.mxu0 0.0
  %192 = vmatpush2.msra.mxu0 0.0
  %193 = vmatprep.subr.mxu0 0.0
  %194 = vmatpush2.msra.mxu0 0.0
  %195 = vmatprep.subr.mxu0 0.0
  %196 = vmatpush2.msra.mxu0 0.0
  %197 = vmatprep.subr.mxu0 0.0
  %198 = vmatpush2.msra.mxu0 0.0
  %199 = vmatprep.subr.mxu0 0.0
  %200 = vmatpush2.msra.mxu0 0.0
  %201 = vmatprep.subr.mxu0 0.0
  %202 = vmatpush2.msra.mxu0 0.0
  %203 = vmatprep.subr.mxu0 0.0
  %204 = vmatpush2.msra.mxu0 0.0
  %205 = vmatprep.subr.mxu0 0.0
  %206 = vmatpush2.msra.mxu0 0.0
  %207 = vmatprep.subr.mxu0 0.0
  %208 = vmatpush2.msra.mxu0 0.0
  %209 = vmatprep.subr.mxu0 0.0
  %210 = vmatpush2.msra.mxu0 0.0
  %211 = vmatprep.subr.mxu0 0.0
  %212 = vmatpush2.msra.mxu0 0.0
  %213 = vmatprep.subr.mxu0 0.0
  %214 = vmatpush2.msra.mxu0 0.0
  %215 = vmatprep.subr.mxu0 0.0
  %216 = vmatpush2.msra.mxu0 0.0
  %217 = vmatprep.subr.mxu0 0.0
  %218 = vmatpush2.msra.mxu0 0.0
  %219 = vmatprep.subr.mxu0 0.0
  %220 = vmatpush2.msra.mxu0 0.0
  %221 = vmatprep.subr.mxu0 0.0
  %222 = vmatpush2.msra.mxu0 0.0
  %223 = vmatprep.mubr.f32.mxu0 0.0
  %224 = vmatmul.mubr.f32.gmra.mxu0 %v79
  %v225 = vpop.f32.mrf.mxu0
  %v226 = vadd.f32 %v151, %v225
  %v227 = vpop.f32.mrf.mxu0
  %228 = vmatprep.mubr.f32.mxu0 0.0
  %229 = vmatmul.mubr.f32.gmra.mxu0 %v82
  %v230 = vpop.f32.mrf.mxu0
  %v231 = vadd.f32 %v156, %v230
  %v232 = vpop.f32.mrf.mxu0
  %233 = vdwg.mxu0
  %v234 = vmax.f32 %v226, 0.0
  %v235 = vmax.f32 %v231, 0.0
  %v236 = vld [vmem:[%s3] sm:$0xff]
  %v237 = vld [vmem:[%s3 + $0x8] sm:$0xff]
  %v238 = vld [vmem:[%s3 + $0x10] sm:$0xff]
  %v239 = vld [vmem:[%s3 + $0x18] sm:$0xff]
  %v240 = vld [vmem:[%s4] sm:$0x1]
  %v242 = vlaneseq
  %v243 = vshrl.u32 %v242, 7
  %v244 = vsub.s32 0, %v243
  %v245 = vrot.slane %v240, %v244
  %v248 = vsel %vm77, %v234, 0
  %v251 = vsel %vm77, %v235, 0
  %253 = vmatprep.subr.mxu0 0.0
  %254 = vmatpush1.msra.mxu0 0.0
  %255 = vmatprep.subr.mxu0 0.0
  %256 = vmatpush1.msra.mxu0 0.0
  %257 = vmatprep.subr.mxu0 0.0
  %258 = vmatpush1.msra.mxu0 0.0
  %259 = vmatprep.subr.mxu0 0.0
  %260 = vmatpush1.msra.mxu0 0.0
  %261 = vmatprep.subr.mxu0 0.0
  %262 = vmatpush1.msra.mxu0 0.0
  %263 = vmatprep.subr.mxu0 0.0
  %264 = vmatpush1.msra.mxu0 0.0
  %265 = vmatprep.subr.mxu0 0.0
  %266 = vmatpush1.msra.mxu0 0.0
  %267 = vmatprep.subr.mxu0 0.0
  %268 = vmatpush1.msra.mxu0 0.0
  %269 = vmatprep.subr.mxu0 0.0
  %270 = vmatpush1.msra.mxu0 0.0
  %271 = vmatprep.subr.mxu0 0.0
  %272 = vmatpush1.msra.mxu0 0.0
  %273 = vmatprep.subr.mxu0 0.0
  %274 = vmatpush1.msra.mxu0 0.0
  %275 = vmatprep.subr.mxu0 0.0
  %276 = vmatpush1.msra.mxu0 0.0
  %277 = vmatprep.subr.mxu0 0.0
  %278 = vmatpush1.msra.mxu0 %v239
  %279 = vmatprep.subr.mxu0 0.0
  %280 = vmatpush1.msra.mxu0 %v238
  %281 = vmatprep.subr.mxu0 0.0
  %282 = vmatpush1.msra.mxu0 %v237
  %283 = vmatprep.subr.mxu0 0.0
  %284 = vmatpush1.msra.mxu0 %v236
  %285 = vmatprep.subr.mxu0 0.0
  %286 = vmatpush2.msra.mxu0 0.0
  %287 = vmatprep.subr.mxu0 0.0
  %288 = vmatpush2.msra.mxu0 0.0
  %289 = vmatprep.subr.mxu0 0.0
  %290 = vmatpush2.msra.mxu0 0.0
  %291 = vmatprep.subr.mxu0 0.0
  %292 = vmatpush2.msra.mxu0 0.0
  %293 = vmatprep.subr.mxu0 0.0
  %294 = vmatpush2.msra.mxu0 0.0
  %295 = vmatprep.subr.mxu0 0.0
  %296 = vmatpush2.msra.mxu0 0.0
  %297 = vmatprep.subr.mxu0 0.0
  %298 = vmatpush2.msra.mxu0 0.0
  %299 = vmatprep.subr.mxu0 0.0
  %300 = vmatpush2.msra.mxu0 0.0
  %301 = vmatprep.subr.mxu0 0.0
  %302 = vmatpush2.msra.mxu0 0.0
  %303 = vmatprep.subr.mxu0 0.0
  %304 = vmatpush2.msra.mxu0 0.0
  %305 = vmatprep.subr.mxu0 0.0
  %306 = vmatpush2.msra.mxu0 0.0
  %307 = vmatprep.subr.mxu0 0.0
  %308 = vmatpush2.msra.mxu0 0.0
  %309 = vmatprep.subr.mxu0 0.0
  %310 = vmatpush2.msra.mxu0 0.0
  %311 = vmatprep.subr.mxu0 0.0
  %312 = vmatpush2.msra.mxu0 0.0
  %313 = vmatprep.subr.mxu0 0.0
  %314 = vmatpush2.msra.mxu0 0.0
  %315 = vmatprep.subr.mxu0 0.0
  %316 = vmatpush2.msra.mxu0 0.0
  %317 = vmatprep.mubr.f32.mxu0 0.0
  %318 = vmatmul.mubr.f32.gmra.mxu0 %v248
  %v319 = vpop.f32.mrf.mxu0
  %v320 = vadd.f32 %v245, %v319
  %v321 = vpop.f32.mrf.mxu0
  %322 = vmatprep.mubr.f32.mxu0 0.0
  %323 = vmatmul.mubr.f32.gmra.mxu0 %v251
  %v324 = vpop.f32.mrf.mxu0
  %v325 = vadd.f32 %v245, %v324
  %v326 = vpop.f32.mrf.mxu0
  %327 = vdwg.mxu0
  %v328 = vld [vmem:[%s5] sm:$0xff]
  %v329 = vld [vmem:[%s5 + $0x8] sm:$0xff]
  %v330 = vld [vmem:[%s5 + $0x10] sm:$0xff]
  %v331 = vld [vmem:[%s5 + $0x18] sm:$0xff]
  %v332 = vld [vmem:[%s6] sm:$0x1]
  %v334 = vlaneseq
  %v335 = vshrl.u32 %v334, 7
  %v336 = vsub.s32 0, %v335
  %v337 = vrot.slane %v332, %v336
  %339 = vmatprep.subr.mxu0 0.0
  %340 = vmatpush1.msra.mxu0 0.0
  %341 = vmatprep.subr.mxu0 0.0
  %342 = vmatpush1.msra.mxu0 0.0
  %343 = vmatprep.subr.mxu0 0.0
  %344 = vmatpush1.msra.mxu0 0.0
  %345 = vmatprep.subr.mxu0 0.0
  %346 = vmatpush1.msra.mxu0 0.0
  %347 = vmatprep.subr.mxu0 0.0
  %348 = vmatpush1.msra.mxu0 0.0
  %349 = vmatprep.subr.mxu0 0.0
  %350 = vmatpush1.msra.mxu0 0.0
  %351 = vmatprep.subr.mxu0 0.0
  %352 = vmatpush1.msra.mxu0 0.0
  %353 = vmatprep.subr.mxu0 0.0
  %354 = vmatpush1.msra.mxu0 0.0
  %355 = vmatprep.subr.mxu0 0.0
  %356 = vmatpush1.msra.mxu0 0.0
  %357 = vmatprep.subr.mxu0 0.0
  %358 = vmatpush1.msra.mxu0 0.0
  %359 = vmatprep.subr.mxu0 0.0
  %360 = vmatpush1.msra.mxu0 0.0
  %361 = vmatprep.subr.mxu0 0.0
  %362 = vmatpush1.msra.mxu0 0.0
  %363 = vmatprep.subr.mxu0 0.0
  %364 = vmatpush1.msra.mxu0 %v331
  %365 = vmatprep.subr.mxu0 0.0
  %366 = vmatpush1.msra.mxu0 %v330
  %367 = vmatprep.subr.mxu0 0.0
  %368 = vmatpush1.msra.mxu0 %v329
  %369 = vmatprep.subr.mxu0 0.0
  %370 = vmatpush1.msra.mxu0 %v328
  %371 = vmatprep.subr.mxu0 0.0
  %372 = vmatpush2.msra.mxu0 0.0
  %373 = vmatprep.subr.mxu0 0.0
  %374 = vmatpush2.msra.mxu0 0.0
  %375 = vmatprep.subr.mxu0 0.0
  %376 = vmatpush2.msra.mxu0 0.0
  %377 = vmatprep.subr.mxu0 0.0
  %378 = vmatpush2.msra.mxu0 0.0
  %379 = vmatprep.subr.mxu0 0.0
  %380 = vmatpush2.msra.mxu0 0.0
  %381 = vmatprep.subr.mxu0 0.0
  %382 = vmatpush2.msra.mxu0 0.0
  %383 = vmatprep.subr.mxu0 0.0
  %384 = vmatpush2.msra.mxu0 0.0
  %385 = vmatprep.subr.mxu0 0.0
  %386 = vmatpush2.msra.mxu0 0.0
  %387 = vmatprep.subr.mxu0 0.0
  %388 = vmatpush2.msra.mxu0 0.0
  %389 = vmatprep.subr.mxu0 0.0
  %390 = vmatpush2.msra.mxu0 0.0
  %391 = vmatprep.subr.mxu0 0.0
  %392 = vmatpush2.msra.mxu0 0.0
  %393 = vmatprep.subr.mxu0 0.0
  %394 = vmatpush2.msra.mxu0 0.0
  %395 = vmatprep.subr.mxu0 0.0
  %396 = vmatpush2.msra.mxu0 0.0
  %397 = vmatprep.subr.mxu0 0.0
  %398 = vmatpush2.msra.mxu0 0.0
  %399 = vmatprep.subr.mxu0 0.0
  %400 = vmatpush2.msra.mxu0 0.0
  %401 = vmatprep.subr.mxu0 0.0
  %402 = vmatpush2.msra.mxu0 0.0
  %403 = vmatprep.mubr.f32.mxu0 0.0
  %404 = vmatmul.mubr.f32.gmra.mxu0 %v248
  %v405 = vpop.f32.mrf.mxu0
  %v406 = vadd.f32 %v337, %v405
  %v407 = vpop.f32.mrf.mxu0
  %408 = vmatprep.mubr.f32.mxu0 0.0
  %409 = vmatmul.mubr.f32.gmra.mxu0 %v251
  %v410 = vpop.f32.mrf.mxu0
  %v411 = vadd.f32 %v337, %v410
  %v412 = vpop.f32.mrf.mxu0
  %413 = vdwg.mxu0
  %v414 = vxor.u32 %v320, 2147483648
  %v415 = vxor.u32 %v325, 2147483648
  %v416 = vmul.f32 %v414, 1.442695
  %v417 = vpow.pop %v416
  %v418 = vmul.f32 %v415, 1.442695
  %v419 = vpow.pop %v418
  %v420 = vadd.f32 %v417, 1.0
  %v421 = vadd.f32 %v419, 1.0
  %v422 = vrcp.pop %v420
  %v423 = vmul.f32 1.0, %v422
  %v424 = vrcp.pop %v421
  %v425 = vmul.f32 1.0, %v424
  %vm426 = vcmask 31744
  %427 = vst.msk [vmem:[%s7] sm:$0xff] %vm426, %v423
  %428 = vst.msk [vmem:[%s7 + $0x8] sm:$0xff] %vm426, %v425
  %vm429 = vcmask 130048
  %430 = vst.msk [vmem:[%s8] sm:$0xff] %vm429, %v406
  %431 = vst.msk [vmem:[%s8 + $0x8] sm:$0xff] %vm429, %v411
  // Predicated region
  $region30: #{tiny_faster_rcnn_forward.4} parent=0 // pred_check
    _
  $region31: #{tiny_faster_rcnn_forward.4} parent=0 // pred_check_branch
    %433 = sbr.rel (0) target = $region33
  $region32: #{tiny_faster_rcnn_forward.4} parent=0 // pred_region
    _
  $region33: #{tiny_faster_rcnn_forward.4} parent=0 // pred_fallthru
    _
  // Predicated region
  $region34: #{tiny_faster_rcnn_forward.4} parent=0 // pred_check
    _
  $region35: #{tiny_faster_rcnn_forward.4} parent=0 // pred_check_branch
    %435 = sbr.rel (0) target = $region37
  $region36: #{tiny_faster_rcnn_forward.4} parent=0 // pred_region
    _
  $region37: #{tiny_faster_rcnn_forward.4} parent=0 // pred_fallthru
    _
  // Predicated region
  $region38: #{tiny_faster_rcnn_forward.4} parent=0 // pred_check
    _
  $region39: #{tiny_faster_rcnn_forward.4} parent=0 // pred_check_branch
    %437 = sbr.rel (0) target = $region41
  $region40: #{tiny_faster_rcnn_forward.4} parent=0 // pred_region
    _
  $region41: #{tiny_faster_rcnn_forward.4} parent=0 // pred_fallthru
    _
  // Predicated region
  $region42: #{tiny_faster_rcnn_forward.4} parent=0 // pred_check
    _
  $region43: #{tiny_faster_rcnn_forward.4} parent=0 // pred_check_branch
    %439 = sbr.rel (0) target = $region45
  $region44: #{tiny_faster_rcnn_forward.4} parent=0 // pred_region
    _
  $region45: #{tiny_faster_rcnn_forward.4} parent=0 // pred_fallthru
    _

// kernel: tiny_faster_rcnn_forward.5
$region0: #{tiny_faster_rcnn_forward.5}
  #allocation0 [shape = 'u32[]', space=smem, size = 0x4, offset = 0x4, fixed_abs, tag = 'smem constant byte address 0x4 - core index']
  #allocation1 [shape = 'u32[144,128]{1,0:T(1,128)}', space=vmem, size = 0x12000, scoped, tag = 'internal scratch']
  %s0 = inlined_call_operand.vmem [shape: f32[16,512], index: 0, kind: input, shape index: {}]
  %s1 = inlined_call_operand.vmem [shape: f32[512,128], index: 1, kind: input, shape index: {}]
  %s2 = inlined_call_operand.vmem [shape: f32[1,128], index: 2, kind: input, shape index: {}]
  %s3 = inlined_call_operand.vmem [shape: f32[128,5], index: 3, kind: input, shape index: {}]
  %s4 = inlined_call_operand.vmem [shape: f32[1,5], index: 4, kind: input, shape index: {}]
  %s5 = inlined_call_operand.vmem [shape: f32[128,16], index: 5, kind: input, shape index: {}]
  %s6 = inlined_call_operand.vmem [shape: f32[1,16], index: 6, kind: input, shape index: {}]
  %s7 = inlined_call_operand.hbm [shape: f32[16,5], index: 7, kind: output, shape index: {0}]
  %s8 = inlined_call_operand.vmem [shape: f32[16,5], index: 8, kind: output, shape index: {1}]
  %s9 = inlined_call_operand.vmem [shape: f32[16,16], index: 9, kind: output, shape index: {2}]
  %10 = xla_tuple %s7, %s8, %s9
  %s11 = sld [smem:[#allocation0]]
  $region54: #{tiny_faster_rcnn_forward.5} parent=0
    _
  %s13 = ssub.s32 1, %s11
  %s14 = scalar_select 0, %s13, %s11
  $region1: #{tiny_faster_rcnn_forward.5} parent=0
    #allocation2 [shape = 'u8[8192]{0}', space=vmem, size = 0x2000, scoped, tag = 'output window, operand 0, single buffered']
    #allocation3 [shape = 's32[1]{0}', space=sflag, size = 0x4, scoped, tag = 'scoped memory for tiny_faster_rcnn_forward.5']
    %15 = vsyncpa [#allocation3], 0
    // Predicated region
    $region2: #{tiny_faster_rcnn_forward.5} parent=1 // pred_check
      _
    $region3: #{tiny_faster_rcnn_forward.5} parent=1 // pred_check_branch
      %17 = sbr.rel (0) target = $region5
    $region4: #{tiny_faster_rcnn_forward.5} parent=1 // pred_region
      _
    $region5: #{tiny_faster_rcnn_forward.5} parent=1 // pred_fallthru
      _
    // Predicated region
    $region6: #{tiny_faster_rcnn_forward.5} parent=1 // pred_check
      _
    $region7: #{tiny_faster_rcnn_forward.5} parent=1 // pred_check_branch
      %19 = sbr.rel (0) target = $region9
    $region8: #{tiny_faster_rcnn_forward.5} parent=1 // pred_region
      _
    $region9: #{tiny_faster_rcnn_forward.5} parent=1 // pred_fallthru
      _
    // Predicated region
    $region10: #{tiny_faster_rcnn_forward.5} parent=1 // pred_check
      _
    $region11: #{tiny_faster_rcnn_forward.5} parent=1 // pred_check_branch
      %21 = sbr.rel (0) target = $region13
    $region12: #{tiny_faster_rcnn_forward.5} parent=1 // pred_region
      _
    $region13: #{tiny_faster_rcnn_forward.5} parent=1 // pred_fallthru
      _
    // Predicated region
    $region14: #{tiny_faster_rcnn_forward.5} parent=1 // pred_check
      _
    $region15: #{tiny_faster_rcnn_forward.5} parent=1 // pred_check_branch
      %23 = sbr.rel (0) target = $region17
    $region16: #{tiny_faster_rcnn_forward.5} parent=1 // pred_region
      _
    $region17: #{tiny_faster_rcnn_forward.5} parent=1 // pred_fallthru
      _
    // Predicated region
    $region18: #{tiny_faster_rcnn_forward.5} parent=1 // pred_check
      _
    $region19: #{tiny_faster_rcnn_forward.5} parent=1 // pred_check_branch
      %25 = sbr.rel (0) target = $region21
    $region20: #{tiny_faster_rcnn_forward.5} parent=1 // pred_region
      _
    $region21: #{tiny_faster_rcnn_forward.5} parent=1 // pred_fallthru
      _
    // Predicated region
    $region22: #{tiny_faster_rcnn_forward.5} parent=1 // pred_check
      _
    $region23: #{tiny_faster_rcnn_forward.5} parent=1 // pred_check_branch
      %27 = sbr.rel (0) target = $region25
    $region24: #{tiny_faster_rcnn_forward.5} parent=1 // pred_region
      _
    $region25: #{tiny_faster_rcnn_forward.5} parent=1 // pred_fallthru
      _
    // Predicated region
    $region26: #{tiny_faster_rcnn_forward.5} parent=1 // pred_check
      _
    $region27: #{tiny_faster_rcnn_forward.5} parent=1 // pred_check_branch
      %29 = sbr.rel (0) target = $region29
    $region28: #{tiny_faster_rcnn_forward.5} parent=1 // pred_region
      _
    $region29: #{tiny_faster_rcnn_forward.5} parent=1 // pred_fallthru
      _
    %v30 = vld [vmem:[%s0] sm:$0xff]
    %v31 = vld [vmem:[%s0 + $0x8] sm:$0xff]
    %v32 = vld [vmem:[%s0 + $0x10] sm:$0xff]
    %v33 = vld [vmem:[%s0 + $0x18] sm:$0xff]
    %v34 = vld [vmem:[%s0 + $0x20] sm:$0xff]
    %v35 = vld [vmem:[%s0 + $0x28] sm:$0xff]
    %v36 = vld [vmem:[%s0 + $0x30] sm:$0xff]
    %v37 = vld [vmem:[%s0 + $0x38] sm:$0xff]
    %v38 = vld [vmem:[%s1] sm:$0xff]
    %v39 = vld [vmem:[%s1 + $0x8] sm:$0xff]
    %v40 = vld [vmem:[%s1 + $0x10] sm:$0xff]
    %v41 = vld [vmem:[%s1 + $0x18] sm:$0xff]
    %v42 = vld [vmem:[%s1 + $0x20] sm:$0xff]
    %v43 = vld [vmem:[%s1 + $0x28] sm:$0xff]
    %v44 = vld [vmem:[%s1 + $0x30] sm:$0xff]
    %v45 = vld [vmem:[%s1 + $0x38] sm:$0xff]
    %v46 = vld [vmem:[%s1 + $0x40] sm:$0xff]
    %v47 = vld [vmem:[%s1 + $0x48] sm:$0xff]
    %v48 = vld [vmem:[%s1 + $0x50] sm:$0xff]
    %v49 = vld [vmem:[%s1 + $0x58] sm:$0xff]
    %v50 = vld [vmem:[%s1 + $0x60] sm:$0xff]
    %v51 = vld [vmem:[%s1 + $0x68] sm:$0xff]
    %v52 = vld [vmem:[%s1 + $0x70] sm:$0xff]
    %v53 = vld [vmem:[%s1 + $0x78] sm:$0xff]
    %v54 = vld [vmem:[%s1 + $0x80] sm:$0xff]
    %v55 = vld [vmem:[%s1 + $0x88] sm:$0xff]
    %v56 = vld [vmem:[%s1 + $0x90] sm:$0xff]
    %v57 = vld [vmem:[%s1 + $0x98] sm:$0xff]
    %v58 = vld [vmem:[%s1 + $0xa0] sm:$0xff]
    %v59 = vld [vmem:[%s1 + $0xa8] sm:$0xff]
    %v60 = vld [vmem:[%s1 + $0xb0] sm:$0xff]
    %v61 = vld [vmem:[%s1 + $0xb8] sm:$0xff]
    %v62 = vld [vmem:[%s1 + $0xc0] sm:$0xff]
    %v63 = vld [vmem:[%s1 + $0xc8] sm:$0xff]
    %v64 = vld [vmem:[%s1 + $0xd0] sm:$0xff]
    %v65 = vld [vmem:[%s1 + $0xd8] sm:$0xff]
    %v66 = vld [vmem:[%s1 + $0xe0] sm:$0xff]
    %v67 = vld [vmem:[%s1 + $0xe8] sm:$0xff]
    %v68 = vld [vmem:[%s1 + $0xf0] sm:$0xff]
    %v69 = vld [vmem:[%s1 + $0xf8] sm:$0xff]
    %v70 = vld [vmem:[%s1 + $0x100] sm:$0xff]
    %v71 = vld [vmem:[%s1 + $0x108] sm:$0xff]
    %v72 = vld [vmem:[%s1 + $0x110] sm:$0xff]
    %v73 = vld [vmem:[%s1 + $0x118] sm:$0xff]
    %v74 = vld [vmem:[%s1 + $0x120] sm:$0xff]
    %v75 = vld [vmem:[%s1 + $0x128] sm:$0xff]
    %v76 = vld [vmem:[%s1 + $0x130] sm:$0xff]
    %v77 = vld [vmem:[%s1 + $0x138] sm:$0xff]
    %v78 = vld [vmem:[%s1 + $0x140] sm:$0xff]
    %v79 = vld [vmem:[%s1 + $0x148] sm:$0xff]
    %v80 = vld [vmem:[%s1 + $0x150] sm:$0xff]
    %v81 = vld [vmem:[%s1 + $0x158] sm:$0xff]
    %v82 = vld [vmem:[%s1 + $0x160] sm:$0xff]
    %v83 = vld [vmem:[%s1 + $0x168] sm:$0xff]
    %v84 = vld [vmem:[%s1 + $0x170] sm:$0xff]
    %v85 = vld [vmem:[%s1 + $0x178] sm:$0xff]
    %v86 = vld [vmem:[%s1 + $0x180] sm:$0xff]
    %v87 = vld [vmem:[%s1 + $0x188] sm:$0xff]
    %v88 = vld [vmem:[%s1 + $0x190] sm:$0xff]
    %v89 = vld [vmem:[%s1 + $0x198] sm:$0xff]
    %v90 = vld [vmem:[%s1 + $0x1a0] sm:$0xff]
    %v91 = vld [vmem:[%s1 + $0x1a8] sm:$0xff]
    %v92 = vld [vmem:[%s1 + $0x1b0] sm:$0xff]
    %v93 = vld [vmem:[%s1 + $0x1b8] sm:$0xff]
    %v94 = vld [vmem:[%s1 + $0x1c0] sm:$0xff]
    %v95 = vld [vmem:[%s1 + $0x1c8] sm:$0xff]
    %v96 = vld [vmem:[%s1 + $0x1d0] sm:$0xff]
    %v97 = vld [vmem:[%s1 + $0x1d8] sm:$0xff]
    %v98 = vld [vmem:[%s1 + $0x1e0] sm:$0xff]
    %v99 = vld [vmem:[%s1 + $0x1e8] sm:$0xff]
    %v100 = vld [vmem:[%s1 + $0x1f0] sm:$0xff]
    %v101 = vld [vmem:[%s1 + $0x1f8] sm:$0xff]
    %v102 = vld [vmem:[%s2] sm:$0x1]
    %v104 = vlaneseq
    %v105 = vshrl.u32 %v104, 7
    %v106 = vsub.s32 0, %v105
    %v107 = vrot.slane %v102, %v106
    %109 = vmatprep.subr.mxu0 0.0
    %110 = vmatpush1.msra.mxu0 %v53
    %111 = vmatprep.subr.mxu0 0.0
    %112 = vmatpush1.msra.mxu0 %v52
    %113 = vmatprep.subr.mxu0 0.0
    %114 = vmatpush1.msra.mxu0 %v51
    %115 = vmatprep.subr.mxu0 0.0
    %116 = vmatpush1.msra.mxu0 %v50
    %117 = vmatprep.subr.mxu0 0.0
    %118 = vmatpush1.msra.mxu0 %v49
    %119 = vmatprep.subr.mxu0 0.0
    %120 = vmatpush1.msra.mxu0 %v48
    %121 = vmatprep.subr.mxu0 0.0
    %122 = vmatpush1.msra.mxu0 %v47
    %123 = vmatprep.subr.mxu0 0.0
    %124 = vmatpush1.msra.mxu0 %v46
    %125 = vmatprep.subr.mxu0 0.0
    %126 = vmatpush1.msra.mxu0 %v45
    %127 = vmatprep.subr.mxu0 0.0
    %128 = vmatpush1.msra.mxu0 %v44
    %129 = vmatprep.subr.mxu0 0.0
    %130 = vmatpush1.msra.mxu0 %v43
    %131 = vmatprep.subr.mxu0 0.0
    %132 = vmatpush1.msra.mxu0 %v42
    %133 = vmatprep.subr.mxu0 0.0
    %134 = vmatpush1.msra.mxu0 %v41
    %135 = vmatprep.subr.mxu0 0.0
    %136 = vmatpush1.msra.mxu0 %v40
    %137 = vmatprep.subr.mxu0 0.0
    %138 = vmatpush1.msra.mxu0 %v39
    %139 = vmatprep.subr.mxu0 0.0
    %140 = vmatpush1.msra.mxu0 %v38
    %141 = vmatprep.subr.mxu0 0.0
    %142 = vmatpush2.msra.mxu0 %v69
    %143 = vmatprep.subr.mxu0 0.0
    %144 = vmatpush2.msra.mxu0 %v68
    %145 = vmatprep.subr.mxu0 0.0
    %146 = vmatpush2.msra.mxu0 %v67
    %147 = vmatprep.subr.mxu0 0.0
    %148 = vmatpush2.msra.mxu0 %v66
    %149 = vmatprep.subr.mxu0 0.0
    %150 = vmatpush2.msra.mxu0 %v65
    %151 = vmatprep.subr.mxu0 0.0
    %152 = vmatpush2.msra.mxu0 %v64
    %153 = vmatprep.subr.mxu0 0.0
    %154 = vmatpush2.msra.mxu0 %v63
    %155 = vmatprep.subr.mxu0 0.0
    %156 = vmatpush2.msra.mxu0 %v62
    %157 = vmatprep.subr.mxu0 0.0
    %158 = vmatpush2.msra.mxu0 %v61
    %159 = vmatprep.subr.mxu0 0.0
    %160 = vmatpush2.msra.mxu0 %v60
    %161 = vmatprep.subr.mxu0 0.0
    %162 = vmatpush2.msra.mxu0 %v59
    %163 = vmatprep.subr.mxu0 0.0
    %164 = vmatpush2.msra.mxu0 %v58
    %165 = vmatprep.subr.mxu0 0.0
    %166 = vmatpush2.msra.mxu0 %v57
    %167 = vmatprep.subr.mxu0 0.0
    %168 = vmatpush2.msra.mxu0 %v56
    %169 = vmatprep.subr.mxu0 0.0
    %170 = vmatpush2.msra.mxu0 %v55
    %171 = vmatprep.subr.mxu0 0.0
    %172 = vmatpush2.msra.mxu0 %v54
    %173 = vmatprep.mubr.f32.mxu0 %v31
    %174 = vmatmul.mubr.f32.gmra.mxu0 %v30
    %v175 = vpop.f32.mrf.mxu0
    %v176 = vadd.f32 %v107, %v175
    %v177 = vpop.f32.mrf.mxu0
    %178 = vmatprep.mubr.f32.mxu0 %v35
    %179 = vmatmul.mubr.f32.gmra.mxu0 %v34
    %v180 = vpop.f32.mrf.mxu0
    %v181 = vadd.f32 %v107, %v180
    %v182 = vpop.f32.mrf.mxu0
    %183 = vdwg.mxu0
    %184 = vmatprep.subr.mxu0 0.0
    %185 = vmatpush1.msra.mxu0 %v85
    %186 = vmatprep.subr.mxu0 0.0
    %187 = vmatpush1.msra.mxu0 %v84
    %188 = vmatprep.subr.mxu0 0.0
    %189 = vmatpush1.msra.mxu0 %v83
    %190 = vmatprep.subr.mxu0 0.0
    %191 = vmatpush1.msra.mxu0 %v82
    %192 = vmatprep.subr.mxu0 0.0
    %193 = vmatpush1.msra.mxu0 %v81
    %194 = vmatprep.subr.mxu0 0.0
    %195 = vmatpush1.msra.mxu0 %v80
    %196 = vmatprep.subr.mxu0 0.0
    %197 = vmatpush1.msra.mxu0 %v79
    %198 = vmatprep.subr.mxu0 0.0
    %199 = vmatpush1.msra.mxu0 %v78
    %200 = vmatprep.subr.mxu0 0.0
    %201 = vmatpush1.msra.mxu0 %v77
    %202 = vmatprep.subr.mxu0 0.0
    %203 = vmatpush1.msra.mxu0 %v76
    %204 = vmatprep.subr.mxu0 0.0
    %205 = vmatpush1.msra.mxu0 %v75
    %206 = vmatprep.subr.mxu0 0.0
    %207 = vmatpush1.msra.mxu0 %v74
    %208 = vmatprep.subr.mxu0 0.0
    %209 = vmatpush1.msra.mxu0 %v73
    %210 = vmatprep.subr.mxu0 0.0
    %211 = vmatpush1.msra.mxu0 %v72
    %212 = vmatprep.subr.mxu0 0.0
    %213 = vmatpush1.msra.mxu0 %v71
    %214 = vmatprep.subr.mxu0 0.0
    %215 = vmatpush1.msra.mxu0 %v70
    %216 = vmatprep.subr.mxu0 0.0
    %217 = vmatpush2.msra.mxu0 %v101
    %218 = vmatprep.subr.mxu0 0.0
    %219 = vmatpush2.msra.mxu0 %v100
    %220 = vmatprep.subr.mxu0 0.0
    %221 = vmatpush2.msra.mxu0 %v99
    %222 = vmatprep.subr.mxu0 0.0
    %223 = vmatpush2.msra.mxu0 %v98
    %224 = vmatprep.subr.mxu0 0.0
    %225 = vmatpush2.msra.mxu0 %v97
    %226 = vmatprep.subr.mxu0 0.0
    %227 = vmatpush2.msra.mxu0 %v96
    %228 = vmatprep.subr.mxu0 0.0
    %229 = vmatpush2.msra.mxu0 %v95
    %230 = vmatprep.subr.mxu0 0.0
    %231 = vmatpush2.msra.mxu0 %v94
    %232 = vmatprep.subr.mxu0 0.0
    %233 = vmatpush2.msra.mxu0 %v93
    %234 = vmatprep.subr.mxu0 0.0
    %235 = vmatpush2.msra.mxu0 %v92
    %236 = vmatprep.subr.mxu0 0.0
    %237 = vmatpush2.msra.mxu0 %v91
    %238 = vmatprep.subr.mxu0 0.0
    %239 = vmatpush2.msra.mxu0 %v90
    %240 = vmatprep.subr.mxu0 0.0
    %241 = vmatpush2.msra.mxu0 %v89
    %242 = vmatprep.subr.mxu0 0.0
    %243 = vmatpush2.msra.mxu0 %v88
    %244 = vmatprep.subr.mxu0 0.0
    %245 = vmatpush2.msra.mxu0 %v87
    %246 = vmatprep.subr.mxu0 0.0
    %247 = vmatpush2.msra.mxu0 %v86
    %248 = vmatprep.mubr.f32.mxu0 %v33
    %249 = vmatmul.mubr.f32.gmra.mxu0 %v32
    %v250 = vpop.f32.mrf.mxu0
    %v251 = vadd.f32 %v176, %v250
    %v252 = vpop.f32.mrf.mxu0
    %253 = vmatprep.mubr.f32.mxu0 %v37
    %254 = vmatmul.mubr.f32.gmra.mxu0 %v36
    %v255 = vpop.f32.mrf.mxu0
    %v256 = vadd.f32 %v181, %v255
    %v257 = vpop.f32.mrf.mxu0
    %258 = vdwg.mxu0
    %v259 = vld [vmem:[%s3] sm:$0xff]
    %v260 = vld [vmem:[%s3 + $0x8] sm:$0xff]
    %v261 = vld [vmem:[%s3 + $0x10] sm:$0xff]
    %v262 = vld [vmem:[%s3 + $0x18] sm:$0xff]
    %v263 = vld [vmem:[%s3 + $0x20] sm:$0xff]
    %v264 = vld [vmem:[%s3 + $0x28] sm:$0xff]
    %v265 = vld [vmem:[%s3 + $0x30] sm:$0xff]
    %v266 = vld [vmem:[%s3 + $0x38] sm:$0xff]
    %v267 = vld [vmem:[%s3 + $0x40] sm:$0xff]
    %v268 = vld [vmem:[%s3 + $0x48] sm:$0xff]
    %v269 = vld [vmem:[%s3 + $0x50] sm:$0xff]
    %v270 = vld [vmem:[%s3 + $0x58] sm:$0xff]
    %v271 = vld [vmem:[%s3 + $0x60] sm:$0xff]
    %v272 = vld [vmem:[%s3 + $0x68] sm:$0xff]
    %v273 = vld [vmem:[%s3 + $0x70] sm:$0xff]
    %v274 = vld [vmem:[%s3 + $0x78] sm:$0xff]
    %v275 = vld [vmem:[%s4] sm:$0x1]
    %v277 = vlaneseq
    %v278 = vshrl.u32 %v277, 7
    %v279 = vsub.s32 0, %v278
    %v280 = vrot.slane %v275, %v279
    %282 = vmatprep.subr.mxu0 0.0
    %283 = vmatpush1.msra.mxu0 %v274
    %284 = vmatprep.subr.mxu0 0.0
    %285 = vmatpush1.msra.mxu0 %v273
    %286 = vmatprep.subr.mxu0 0.0
    %287 = vmatpush1.msra.mxu0 %v272
    %288 = vmatprep.subr.mxu0 0.0
    %289 = vmatpush1.msra.mxu0 %v271
    %290 = vmatprep.subr.mxu0 0.0
    %291 = vmatpush1.msra.mxu0 %v270
    %292 = vmatprep.subr.mxu0 0.0
    %293 = vmatpush1.msra.mxu0 %v269
    %294 = vmatprep.subr.mxu0 0.0
    %295 = vmatpush1.msra.mxu0 %v268
    %296 = vmatprep.subr.mxu0 0.0
    %297 = vmatpush1.msra.mxu0 %v267
    %298 = vmatprep.subr.mxu0 0.0
    %299 = vmatpush1.msra.mxu0 %v266
    %300 = vmatprep.subr.mxu0 0.0
    %301 = vmatpush1.msra.mxu0 %v265
    %302 = vmatprep.subr.mxu0 0.0
    %303 = vmatpush1.msra.mxu0 %v264
    %304 = vmatprep.subr.mxu0 0.0
    %305 = vmatpush1.msra.mxu0 %v263
    %306 = vmatprep.subr.mxu0 0.0
    %307 = vmatpush1.msra.mxu0 %v262
    %308 = vmatprep.subr.mxu0 0.0
    %309 = vmatpush1.msra.mxu0 %v261
    %310 = vmatprep.subr.mxu0 0.0
    %311 = vmatpush1.msra.mxu0 %v260
    %312 = vmatprep.subr.mxu0 0.0
    %313 = vmatpush1.msra.mxu0 %v259
    %314 = vmatprep.subr.mxu0 0.0
    %315 = vmatpush2.msra.mxu0 0.0
    %316 = vmatprep.subr.mxu0 0.0
    %317 = vmatpush2.msra.mxu0 0.0
    %318 = vmatprep.subr.mxu0 0.0
    %319 = vmatpush2.msra.mxu0 0.0
    %320 = vmatprep.subr.mxu0 0.0
    %321 = vmatpush2.msra.mxu0 0.0
    %322 = vmatprep.subr.mxu0 0.0
    %323 = vmatpush2.msra.mxu0 0.0
    %324 = vmatprep.subr.mxu0 0.0
    %325 = vmatpush2.msra.mxu0 0.0
    %326 = vmatprep.subr.mxu0 0.0
    %327 = vmatpush2.msra.mxu0 0.0
    %328 = vmatprep.subr.mxu0 0.0
    %329 = vmatpush2.msra.mxu0 0.0
    %330 = vmatprep.subr.mxu0 0.0
    %331 = vmatpush2.msra.mxu0 0.0
    %332 = vmatprep.subr.mxu0 0.0
    %333 = vmatpush2.msra.mxu0 0.0
    %334 = vmatprep.subr.mxu0 0.0
    %335 = vmatpush2.msra.mxu0 0.0
    %336 = vmatprep.subr.mxu0 0.0
    %337 = vmatpush2.msra.mxu0 0.0
    %338 = vmatprep.subr.mxu0 0.0
    %339 = vmatpush2.msra.mxu0 0.0
    %340 = vmatprep.subr.mxu0 0.0
    %341 = vmatpush2.msra.mxu0 0.0
    %342 = vmatprep.subr.mxu0 0.0
    %343 = vmatpush2.msra.mxu0 0.0
    %344 = vmatprep.subr.mxu0 0.0
    %345 = vmatpush2.msra.mxu0 0.0
    %346 = vmatprep.mubr.f32.mxu0 0.0
    %347 = vmatmul.mubr.f32.gmra.mxu0 %v251
    %v348 = vpop.f32.mrf.mxu0
    %v349 = vadd.f32 %v280, %v348
    %v350 = vpop.f32.mrf.mxu0
    %351 = vmatprep.mubr.f32.mxu0 0.0
    %352 = vmatmul.mubr.f32.gmra.mxu0 %v256
    %v353 = vpop.f32.mrf.mxu0
    %v354 = vadd.f32 %v280, %v353
    %v355 = vpop.f32.mrf.mxu0
    %356 = vdwg.mxu0
    %v357 = vld [vmem:[%s5] sm:$0xff]
    %v358 = vld [vmem:[%s5 + $0x8] sm:$0xff]
    %v359 = vld [vmem:[%s5 + $0x10] sm:$0xff]
    %v360 = vld [vmem:[%s5 + $0x18] sm:$0xff]
    %v361 = vld [vmem:[%s5 + $0x20] sm:$0xff]
    %v362 = vld [vmem:[%s5 + $0x28] sm:$0xff]
    %v363 = vld [vmem:[%s5 + $0x30] sm:$0xff]
    %v364 = vld [vmem:[%s5 + $0x38] sm:$0xff]
    %v365 = vld [vmem:[%s5 + $0x40] sm:$0xff]
    %v366 = vld [vmem:[%s5 + $0x48] sm:$0xff]
    %v367 = vld [vmem:[%s5 + $0x50] sm:$0xff]
    %v368 = vld [vmem:[%s5 + $0x58] sm:$0xff]
    %v369 = vld [vmem:[%s5 + $0x60] sm:$0xff]
    %v370 = vld [vmem:[%s5 + $0x68] sm:$0xff]
    %v371 = vld [vmem:[%s5 + $0x70] sm:$0xff]
    %v372 = vld [vmem:[%s5 + $0x78] sm:$0xff]
    %v373 = vld [vmem:[%s6] sm:$0x1]
    %v375 = vlaneseq
    %v376 = vshrl.u32 %v375, 7
    %v377 = vsub.s32 0, %v376
    %v378 = vrot.slane %v373, %v377
    %380 = vmatprep.subr.mxu0 0.0
    %381 = vmatpush1.msra.mxu0 %v372
    %382 = vmatprep.subr.mxu0 0.0
    %383 = vmatpush1.msra.mxu0 %v371
    %384 = vmatprep.subr.mxu0 0.0
    %385 = vmatpush1.msra.mxu0 %v370
    %386 = vmatprep.subr.mxu0 0.0
    %387 = vmatpush1.msra.mxu0 %v369
    %388 = vmatprep.subr.mxu0 0.0
    %389 = vmatpush1.msra.mxu0 %v368
    %390 = vmatprep.subr.mxu0 0.0
    %391 = vmatpush1.msra.mxu0 %v367
    %392 = vmatprep.subr.mxu0 0.0
    %393 = vmatpush1.msra.mxu0 %v366
    %394 = vmatprep.subr.mxu0 0.0
    %395 = vmatpush1.msra.mxu0 %v365
    %396 = vmatprep.subr.mxu0 0.0
    %397 = vmatpush1.msra.mxu0 %v364
    %398 = vmatprep.subr.mxu0 0.0
    %399 = vmatpush1.msra.mxu0 %v363
    %400 = vmatprep.subr.mxu0 0.0
    %401 = vmatpush1.msra.mxu0 %v362
    %402 = vmatprep.subr.mxu0 0.0
    %403 = vmatpush1.msra.mxu0 %v361
    %404 = vmatprep.subr.mxu0 0.0
    %405 = vmatpush1.msra.mxu0 %v360
    %406 = vmatprep.subr.mxu0 0.0
    %407 = vmatpush1.msra.mxu0 %v359
    %408 = vmatprep.subr.mxu0 0.0
    %409 = vmatpush1.msra.mxu0 %v358
    %410 = vmatprep.subr.mxu0 0.0
    %411 = vmatpush1.msra.mxu0 %v357
    %412 = vmatprep.subr.mxu0 0.0
    %413 = vmatpush2.msra.mxu0 0.0
    %414 = vmatprep.subr.mxu0 0.0
    %415 = vmatpush2.msra.mxu0 0.0
    %416 = vmatprep.subr.mxu0 0.0
    %417 = vmatpush2.msra.mxu0 0.0
    %418 = vmatprep.subr.mxu0 0.0
    %419 = vmatpush2.msra.mxu0 0.0
    %420 = vmatprep.subr.mxu0 0.0
    %421 = vmatpush2.msra.mxu0 0.0
    %422 = vmatprep.subr.mxu0 0.0
    %423 = vmatpush2.msra.mxu0 0.0
    %424 = vmatprep.subr.mxu0 0.0
    %425 = vmatpush2.msra.mxu0 0.0
    %426 = vmatprep.subr.mxu0 0.0
    %427 = vmatpush2.msra.mxu0 0.0
    %428 = vmatprep.subr.mxu0 0.0
    %429 = vmatpush2.msra.mxu0 0.0
    %430 = vmatprep.subr.mxu0 0.0
    %431 = vmatpush2.msra.mxu0 0.0
    %432 = vmatprep.subr.mxu0 0.0
    %433 = vmatpush2.msra.mxu0 0.0
    %434 = vmatprep.subr.mxu0 0.0
    %435 = vmatpush2.msra.mxu0 0.0
    %436 = vmatprep.subr.mxu0 0.0
    %437 = vmatpush2.msra.mxu0 0.0
    %438 = vmatprep.subr.mxu0 0.0
    %439 = vmatpush2.msra.mxu0 0.0
    %440 = vmatprep.subr.mxu0 0.0
    %441 = vmatpush2.msra.mxu0 0.0
    %442 = vmatprep.subr.mxu0 0.0
    %443 = vmatpush2.msra.mxu0 0.0
    %444 = vmatprep.mubr.f32.mxu0 0.0
    %445 = vmatmul.mubr.f32.gmra.mxu0 %v251
    %v446 = vpop.f32.mrf.mxu0
    %v447 = vadd.f32 %v378, %v446
    %v448 = vpop.f32.mrf.mxu0
    %449 = vmatprep.mubr.f32.mxu0 0.0
    %450 = vmatmul.mubr.f32.gmra.mxu0 %v256
    %v451 = vpop.f32.mrf.mxu0
    %v452 = vadd.f32 %v378, %v451
    %v453 = vpop.f32.mrf.mxu0
    %454 = vdwg.mxu0
    %vm455 = vcmask 39936
    %v456 = vsel %vm455, %v349, -inf
    %457 = vmax.xlane.f32.xlu0 %v456
    %v458 = vpop.xlane.xlu0 %457
    %v459 = vsel %vm455, %v354, -inf
    %460 = vmax.xlane.f32.xlu0 %v459
    %v461 = vpop.xlane.xlu0 %460
    %v462 = vsub.f32 %v349, %v458
    %v463 = vsub.f32 %v354, %v461
    %v464 = vmul.f32 %v462, 1.442695
    %v465 = vpow.pop %v464
    %v466 = vmul.f32 %v463, 1.442695
    %v467 = vpow.pop %v466
    %v468 = vsel %vm455, %v465, 0.0
    %469 = vadd.xlane.f32.xlu0 %v468
    %v470 = vpop.xlane.xlu0 %469
    %v471 = vsel %vm455, %v467, 0.0
    %472 = vadd.xlane.f32.xlu0 %v471
    %v473 = vpop.xlane.xlu0 %472
    %v474 = vrcp.pop %v470
    %v475 = vrcp.pop %v473
    %v476 = vmul.f32 %v465, %v474
    %v477 = vmul.f32 %v467, %v475
    %478 = vst.msk [vmem:[#allocation2] sm:$0xff] %vm455, %v349
    %479 = vst.msk [vmem:[#allocation2 + $0x8] sm:$0xff] %vm455, %v354
    %480 = vst.msk [vmem:[%s8] sm:$0xff] %vm455, %v476
    %481 = vst.msk [vmem:[%s8 + $0x8] sm:$0xff] %vm455, %v477
    %vm482 = vcmask 130048
    %483 = vst.msk [vmem:[%s9] sm:$0xff] %vm482, %v447
    %484 = vst.msk [vmem:[%s9 + $0x8] sm:$0xff] %vm482, %v452
    // Predicated region
    $region30: #{tiny_faster_rcnn_forward.5} parent=1 // pred_check
      _
    $region31: #{tiny_faster_rcnn_forward.5} parent=1 // pred_check_branch
      %486 = sbr.rel (0) target = $region33
    $region32: #{tiny_faster_rcnn_forward.5} parent=1 // pred_region
      %s488 = ssub.s32 256, 256
      %489 = vsyncadd [#allocation3], %s488
      %s490 = sshll.u32 [#allocation2], 4
      %s491 = int_to_ptr.vmem [resolvable:$true] %s490
      %496 = dma.vmem_to_hbm [thread:$0]  %s491, 256, %s7, [#allocation3], 128, 128, 8
    $region33: #{tiny_faster_rcnn_forward.5} parent=1 // pred_fallthru
      _
    // Predicated region
    $region34: #{tiny_faster_rcnn_forward.5} parent=1 // pred_check
      _
    $region35: #{tiny_faster_rcnn_forward.5} parent=1 // pred_check_branch
      %498 = sbr.rel (0) target = $region37
    $region36: #{tiny_faster_rcnn_forward.5} parent=1 // pred_region
      _
    $region37: #{tiny_faster_rcnn_forward.5} parent=1 // pred_fallthru
      _
    // Predicated region
    $region38: #{tiny_faster_rcnn_forward.5} parent=1 // pred_check
      _
    $region39: #{tiny_faster_rcnn_forward.5} parent=1 // pred_check_branch
      %500 = sbr.rel (0) target = $region41
    $region40: #{tiny_faster_rcnn_forward.5} parent=1 // pred_region
      _
    $region41: #{tiny_faster_rcnn_forward.5} parent=1 // pred_fallthru
      _
    // Predicated region
    $region42: #{tiny_faster_rcnn_forward.5} parent=1 // pred_check
      _
    $region43: #{tiny_faster_rcnn_forward.5} parent=1 // pred_check_branch
      %502 = sbr.rel (0) target = $region45
    $region44: #{tiny_faster_rcnn_forward.5} parent=1 // pred_region
      %503 = dma.done [#allocation3], 256
    $region45: #{tiny_faster_rcnn_forward.5} parent=1 // pred_fallthru
      _
    // Predicated region
    $region46: #{tiny_faster_rcnn_forward.5} parent=1 // pred_check
      _
    $region47: #{tiny_faster_rcnn_forward.5} parent=1 // pred_check_branch
      %505 = sbr.rel (0) target = $region49
    $region48: #{tiny_faster_rcnn_forward.5} parent=1 // pred_region
      _
    $region49: #{tiny_faster_rcnn_forward.5} parent=1 // pred_fallthru
      _
    // Predicated region
    $region50: #{tiny_faster_rcnn_forward.5} parent=1 // pred_check
      _
    $region51: #{tiny_faster_rcnn_forward.5} parent=1 // pred_check_branch
      %507 = sbr.rel (0) target = $region53
    $region52: #{tiny_faster_rcnn_forward.5} parent=1 // pred_region
      _
    $region53: #{tiny_faster_rcnn_forward.5} parent=1 // pred_fallthru
      _
    %508 = vsyncpa [#allocation3], 1

</llo_original>
